<compile_context>
chip_gen: v7x
topology: tpu7x:2x2x1
jax: 0.10.0
libtpu: 0.0.40
codegen_flags: <defaults>
</compile_context>

<pallas_src>
import functools
import math

import jax
import jax.numpy as jnp
from jax.experimental import pallas as pl
from jax.experimental.pallas import tpu as pltpu

# ----------------------------- model hyper-params (small) -------------------
N_VOCAB = 1000
N_EMBD = 64
N_TOKENS = 8          # sequence length (== position-embedding rows)
N_HEAD = 4
N_LAYERS = 2
BATCH = 2
EPS = 1e-5            # PyTorch nn.LayerNorm default
D_HEAD = N_EMBD // N_HEAD
MASK_BIAS = -1e30     # finite large negative; exp underflows to exactly 0.0


# ----------------------------- kernel ---------------------------------------
def _layernorm(x, gamma, beta):
    mu = jnp.mean(x, axis=-1, keepdims=True)
    var = jnp.mean((x - mu) ** 2, axis=-1, keepdims=True)
    return (x - mu) * jax.lax.rsqrt(var + EPS) * gamma + beta


def clip_stack_kernel(x_ref, mask_ref,
                      ln1_g_ref, ln1_b_ref,
                      wqkv_ref, bqkv_ref, wo_ref, bo_ref,
                      ln2_g_ref, ln2_b_ref,
                      w1_ref, b1_ref, w2_ref, b2_ref,
                      lnf_g_ref, lnf_b_ref,
                      o_ref,
                      state_ref,
                      *, n_head, b_tile, seq_len):
    layer = pl.program_id(1)
    n_layers = pl.num_programs(1)

    # First layer of this batch tile: load embeddings into the VMEM-resident
    # activation state (scratch persists across the sequential layer axis).
    @pl.when(layer == 0)
    def _():
        state_ref[...] = x_ref[...].astype(jnp.float32)

    x = state_ref[...]                         # (B_tile*S, D) float32
    M, D = x.shape
    S, Bt, H = seq_len, b_tile, n_head
    dh = D // H

    # ---- LayerNorm 1 + causal multi-head self-attention + residual ----
    h = _layernorm(x, ln1_g_ref[...], ln1_b_ref[...])

    # Fused QKV: one (M, D) @ (D, 3D) matmul (lane width 3D; full MXU).
    # The 1/sqrt(d_head) scale is pre-folded into the Q weights/bias on host.
    wqkv = wqkv_ref[...]
    qkv = jnp.dot(h.astype(wqkv.dtype), wqkv,
                  preferred_element_type=jnp.float32) + bqkv_ref[...]
    q, k, v = qkv[:, :D], qkv[:, D:2 * D], qkv[:, 2 * D:]

    def to_heads(t):                            # (Bt*S, D) -> (Bt*H, S, dh)
        return t.reshape(Bt, S, H, dh).transpose(0, 2, 1, 3).reshape(Bt * H, S, dh)

    q, k, v = to_heads(q), to_heads(k), to_heads(v)

    # Batched attention over (batch_tile * heads); scores already scaled.
    s = jnp.einsum('gqf,gkf->gqk', q, k, preferred_element_type=jnp.float32)
    s = s + mask_ref[...][None]                 # causal bias (finite, -1e30)
    s = s - jnp.max(s, axis=-1, keepdims=True)
    p = jnp.exp(s)
    # EXACT denominator (approx EUP reciprocal broke the 1e-3 reference check).
    p = p / jnp.sum(p, axis=-1, keepdims=True)
    attn = jnp.einsum('gqk,gkf->gqf', p, v, preferred_element_type=jnp.float32)

    # Output projection: heads -> (M, D), then a single K=D matmul.
    attn = attn.reshape(Bt, H, S, dh).transpose(0, 2, 1, 3).reshape(M, D)
    wo = wo_ref[...]
    x = x + jnp.dot(attn.astype(wo.dtype), wo,
                    preferred_element_type=jnp.float32) + bo_ref[...]

    # ---- LayerNorm 2 + MLP (QuickGELU) + residual ----
    h = _layernorm(x, ln2_g_ref[...], ln2_b_ref[...])
    w1 = w1_ref[...]
    h = jnp.dot(h.astype(w1.dtype), w1,
                preferred_element_type=jnp.float32) + b1_ref[...]
    h = h * jax.nn.sigmoid(1.702 * h)           # QuickGELU, f32 (v5e: no bf16 VPU/EUP)
    w2 = w2_ref[...]
    h = jnp.dot(h.astype(w2.dtype), w2,
                preferred_element_type=jnp.float32) + b2_ref[...]
    x = x + h

    state_ref[...] = x

    # Final LayerNorm folded into the last layer iteration.
    @pl.when(layer == n_layers - 1)
    def _():
        o_ref[...] = _layernorm(x, lnf_g_ref[...], lnf_b_ref[...]).astype(o_ref.dtype)


# ----------------------------- pallas_call wrapper ----------------------------
def clip_stack(x_emb, mask, packed, lnf_g, lnf_b, *, n_head, b_tile=None,
               vmem_limit_bytes=64 * 1024 * 1024):
    B, S, D = x_emb.shape
    L = packed['w_qkv'].shape[0]

    if b_tile is None:
        # Amortize every layer-weight DMA over as many batch rows as possible.
        # (At real CLIP scale pick 16-64 rows; on v7x keep B // b_tile a
        # multiple of 2 so both TensorCores get a batch tile.)
        b_tile = min(B, 8)
    assert B % b_tile == 0
    n_btiles = B // b_tile

    # Present each batch tile as one lane-dense (b_tile*S, D) slab.
    x_r = x_emb.reshape(n_btiles, b_tile * S, D)

    def layer_spec(a):
        trailing = a.shape[1:]
        zeros = (0,) * len(trailing)
        return pl.BlockSpec((pl.Squeezed(),) + trailing,
                            lambda b, l, zeros=zeros: (l,) + zeros)

    def const_spec(a):
        z = (0,) * a.ndim
        return pl.BlockSpec(a.shape, lambda b, l, z=z: z)

    row_spec = pl.BlockSpec((pl.Squeezed(), b_tile * S, D), lambda b, l: (b, 0, 0))

    ordered = [packed[k] for k in ('ln1_g', 'ln1_b', 'w_qkv', 'b_qkv', 'wo', 'bo',
                                   'ln2_g', 'ln2_b', 'w1', 'b1', 'w2', 'b2')]
    in_specs = ([row_spec, const_spec(mask)]
                + [layer_spec(a) for a in ordered]
                + [const_spec(lnf_g), const_spec(lnf_b)])

    # Advisory cost hint for XLA scheduling around the fused kernel.
    flops = B * L * S * (24 * D * D + 4 * S * D)
    transcendentals = B * L * (n_head * S * S + 4 * D * S)
    bytes_accessed = (2 * B * S * D * 4
                      + L * (12 * D * D * packed['w_qkv'].dtype.itemsize + 12 * D * 4)
                      + 2 * D * 4)

    out = pl.pallas_call(
        functools.partial(clip_stack_kernel, n_head=n_head, b_tile=b_tile, seq_len=S),
        out_shape=jax.ShapeDtypeStruct((n_btiles, b_tile * S, D), x_emb.dtype),
        grid=(n_btiles, L),
        in_specs=in_specs,
        out_specs=row_spec,
        scratch_shapes=[pltpu.VMEM((b_tile * S, D), jnp.float32)],
        compiler_params=pltpu.CompilerParams(
            dimension_semantics=("parallel", "arbitrary"),
            vmem_limit_bytes=vmem_limit_bytes),
        cost_estimate=pl.CostEstimate(flops=flops,
                                      transcendentals=transcendentals,
                                      bytes_accessed=bytes_accessed),
    )(x_r, mask, *ordered, lnf_g, lnf_b)
    return out.reshape(B, S, D)


# ----------------------------- parameters -------------------------------------
def init_params(key):
    s = 0.02
    ks = jax.random.split(key, 2 + N_LAYERS)
    params = {
        'token_embedding': s * jax.random.normal(ks[0], (N_VOCAB, N_EMBD), jnp.float32),
        # torch.zeros in __init__; small random values so the op is exercised
        'position_embedding': s * jax.random.normal(ks[1], (N_TOKENS, N_EMBD), jnp.float32),
        'lnf_g': jnp.ones((N_EMBD,), jnp.float32),
        'lnf_b': jnp.zeros((N_EMBD,), jnp.float32),
        'layers': [],
    }
    for li in range(N_LAYERS):
        lk = jax.random.split(ks[2 + li], 10)
        layer = dict(
            ln1_g=jnp.ones((N_EMBD,), jnp.float32),
            ln1_b=jnp.zeros((N_EMBD,), jnp.float32),
            wq=s * jax.random.normal(lk[0], (N_EMBD, N_EMBD), jnp.float32),
            bq=s * jax.random.normal(lk[1], (N_EMBD,), jnp.float32),
            wk=s * jax.random.normal(lk[2], (N_EMBD, N_EMBD), jnp.float32),
            bk=s * jax.random.normal(lk[3], (N_EMBD,), jnp.float32),
            wv=s * jax.random.normal(lk[4], (N_EMBD, N_EMBD), jnp.float32),
            bv=s * jax.random.normal(lk[5], (N_EMBD,), jnp.float32),
            wo=s * jax.random.normal(lk[6], (N_EMBD, N_EMBD), jnp.float32),
            bo=s * jax.random.normal(lk[7], (N_EMBD,), jnp.float32),
            ln2_g=jnp.ones((N_EMBD,), jnp.float32),
            ln2_b=jnp.zeros((N_EMBD,), jnp.float32),
            w1=s * jax.random.normal(lk[8], (N_EMBD, 4 * N_EMBD), jnp.float32),
            b1=jnp.zeros((4 * N_EMBD,), jnp.float32),
            w2=s * jax.random.normal(lk[9], (4 * N_EMBD, N_EMBD), jnp.float32),
            b2=jnp.zeros((N_EMBD,), jnp.float32),
        )
        params['layers'].append(layer)
    return params


def pack_params(params, weight_dtype=jnp.float32):
    """Stack per-layer weights with a leading layer axis; fuse QKV; fold the
    attention scale into Q; optionally cast matmul weights (bf16 at real scale)."""
    D = N_EMBD
    scale = 1.0 / math.sqrt(D_HEAD)

    def stack(f):
        return jnp.stack([f(l) for l in params['layers']])

    def fuse_qkv_w(l):   # (D, 3D), attention scale folded into the Q columns
        return jnp.concatenate([l['wq'] * scale, l['wk'], l['wv']], axis=-1)

    def fuse_qkv_b(l):   # (1, 3D)
        return jnp.concatenate([l['bq'] * scale, l['bk'], l['bv']]).reshape(1, 3 * D)

    return dict(
        ln1_g=stack(lambda l: l['ln1_g'].reshape(1, D)),
        ln1_b=stack(lambda l: l['ln1_b'].reshape(1, D)),
        w_qkv=stack(fuse_qkv_w).astype(weight_dtype),
        b_qkv=stack(fuse_qkv_b),
        wo=stack(lambda l: l['wo']).astype(weight_dtype),
        bo=stack(lambda l: l['bo'].reshape(1, D)),
        ln2_g=stack(lambda l: l['ln2_g'].reshape(1, D)),
        ln2_b=stack(lambda l: l['ln2_b'].reshape(1, D)),
        w1=stack(lambda l: l['w1']).astype(weight_dtype),
        b1=stack(lambda l: l['b1'].reshape(1, 4 * D)),
        w2=stack(lambda l: l['w2']).astype(weight_dtype),
        b2=stack(lambda l: l['b2'].reshape(1, D)),
    )


# ----------------------------- forward (kernel + glue) ------------------------
def clip_forward(tokens, params, weight_dtype=jnp.float32):
    tokens = tokens.astype(jnp.int32)                    # .type(torch.long)
    # embedding gather + position add is plain-JAX glue
    x = params['token_embedding'][tokens] + params['position_embedding'][None]
    S = x.shape[1]
    # causal mask bias precomputed once (strict upper triangle -> large negative)
    mask = jnp.where(jnp.triu(jnp.ones((S, S), dtype=bool), 1),
                     MASK_BIAS, 0.0).astype(jnp.float32)
    packed = pack_params(params, weight_dtype)
    lnf_g = params['lnf_g'].reshape(1, -1)
    lnf_b = params['lnf_b'].reshape(1, -1)
    return clip_stack(x, mask, packed, lnf_g, lnf_b, n_head=N_HEAD)


# ----------------------------- pure-JAX reference -----------------------------
def _ref_forward(tokens, params):
    def ln(x, g, b):
        mu = x.mean(-1, keepdims=True)
        var = ((x - mu) ** 2).mean(-1, keepdims=True)
        return (x - mu) / jnp.sqrt(var + EPS) * g + b

    x = params['token_embedding'][tokens.astype(jnp.int32)] + params['position_embedding'][None]
    B, S, D = x.shape
    dh = D // N_HEAD
    mask = jnp.triu(jnp.ones((S, S), bool), 1)
    for lp in params['layers']:
        res = x
        h = ln(x, lp['ln1_g'], lp['ln1_b'])
        q = (h @ lp['wq'] + lp['bq']).reshape(B, S, N_HEAD, dh).transpose(0, 2, 1, 3)
        k = (h @ lp['wk'] + lp['bk']).reshape(B, S, N_HEAD, dh).transpose(0, 2, 1, 3)
        v = (h @ lp['wv'] + lp['bv']).reshape(B, S, N_HEAD, dh).transpose(0, 2, 1, 3)
        w = jnp.einsum('bhqd,bhkd->bhqk', q, k)
        w = jnp.where(mask, -jnp.inf, w) / jnp.sqrt(dh)
        p = jax.nn.softmax(w, axis=-1)
        o = jnp.einsum('bhqk,bhkd->bhqd', p, v).transpose(0, 2, 1, 3).reshape(B, S, D)
        x = o @ lp['wo'] + lp['bo'] + res
        res = x
        h = ln(x, lp['ln2_g'], lp['ln2_b'])
        h = h @ lp['w1'] + lp['b1']
        h = h * jax.nn.sigmoid(1.702 * h)
        x = h @ lp['w2'] + lp['b2'] + res
    return ln(x, params['lnf_g'], params['lnf_b'])


# ----------------------------- main --------------------------------------------
if __name__ == "__main__":
    key = jax.random.PRNGKey(0)
    pkey, tkey = jax.random.split(key)
    params = init_params(pkey)
    tokens = jax.random.randint(tkey, (BATCH, N_TOKENS), 0, N_VOCAB, dtype=jnp.int32)

    ref = _ref_forward(tokens, params)

    # f32-weight run: must match the f32 reference tightly.
    out = jax.jit(clip_forward)(tokens, params)
    out = jax.block_until_ready(out)
    assert out.shape == (BATCH, N_TOKENS, N_EMBD)
    assert jnp.allclose(out, ref, rtol=1e-3, atol=1e-3), (
        f"mismatch vs JAX reference, max abs err {float(jnp.max(jnp.abs(out - ref)))}")

    # bf16-weight run (real-scale configuration per the perf review): same
    # kernel, weights cast to bf16, f32 accumulation — loose sanity tolerance.
    out_bf16 = jax.jit(functools.partial(clip_forward, weight_dtype=jnp.bfloat16))(tokens, params)
    out_bf16 = jax.block_until_ready(out_bf16)
    assert float(jnp.max(jnp.abs(out_bf16 - ref))) < 0.1, "bf16 path diverged"

    print("KERNEL_OK")
</pallas_src>

<mosaic_0001>
module attributes {stable_mosaic.version = 11 : i64} {
  func.func @clip_stack_kernel(%arg0: i32, %arg1: i32, %arg2: memref<1x16x64xf32, #tpu.memory_space<vmem>>, %arg3: memref<8x8xf32, #tpu.memory_space<vmem>>, %arg4: memref<1x1x64xf32, #tpu.memory_space<vmem>>, %arg5: memref<1x1x64xf32, #tpu.memory_space<vmem>>, %arg6: memref<1x64x192xf32, #tpu.memory_space<vmem>>, %arg7: memref<1x1x192xf32, #tpu.memory_space<vmem>>, %arg8: memref<1x64x64xf32, #tpu.memory_space<vmem>>, %arg9: memref<1x1x64xf32, #tpu.memory_space<vmem>>, %arg10: memref<1x1x64xf32, #tpu.memory_space<vmem>>, %arg11: memref<1x1x64xf32, #tpu.memory_space<vmem>>, %arg12: memref<1x64x256xf32, #tpu.memory_space<vmem>>, %arg13: memref<1x1x256xf32, #tpu.memory_space<vmem>>, %arg14: memref<1x256x64xf32, #tpu.memory_space<vmem>>, %arg15: memref<1x1x64xf32, #tpu.memory_space<vmem>>, %arg16: memref<1x64xf32, #tpu.memory_space<vmem>>, %arg17: memref<1x64xf32, #tpu.memory_space<vmem>>, %arg18: memref<1x16x64xf32, #tpu.memory_space<vmem>>, %arg19: memref<16x64xf32, #tpu.memory_space<vmem>>) attributes {dimension_semantics = [#tpu.dimension_semantics<parallel>, #tpu.dimension_semantics<arbitrary>], iteration_bounds = array<i64: 1, 2>, scalar_prefetch = 0 : i64, scratch_operands = 1 : i64, tpu.core_type = #tpu.core_type<tc>, window_params = [{transform_indices = @transform_0, window_bounds = array<i64: 1, 16, 64>}, {pipeline_mode = #tpu.pipeline_mode<synchronous>, transform_indices = @transform_1, window_bounds = array<i64: 8, 8>}, {transform_indices = @transform_2, window_bounds = array<i64: 1, 1, 64>}, {transform_indices = @transform_3, window_bounds = array<i64: 1, 1, 64>}, {transform_indices = @transform_4, window_bounds = array<i64: 1, 64, 192>}, {transform_indices = @transform_5, window_bounds = array<i64: 1, 1, 192>}, {transform_indices = @transform_6, window_bounds = array<i64: 1, 64, 64>}, {transform_indices = @transform_7, window_bounds = array<i64: 1, 1, 64>}, {transform_indices = @transform_8, window_bounds = array<i64: 1, 1, 64>}, {transform_indices = @transform_9, window_bounds = array<i64: 1, 1, 64>}, {transform_indices = @transform_10, window_bounds = array<i64: 1, 64, 256>}, {transform_indices = @transform_11, window_bounds = array<i64: 1, 1, 256>}, {transform_indices = @transform_12, window_bounds = array<i64: 1, 256, 64>}, {transform_indices = @transform_13, window_bounds = array<i64: 1, 1, 64>}, {pipeline_mode = #tpu.pipeline_mode<synchronous>, transform_indices = @transform_14, window_bounds = array<i64: 1, 64>}, {pipeline_mode = #tpu.pipeline_mode<synchronous>, transform_indices = @transform_15, window_bounds = array<i64: 1, 64>}, {transform_indices = @transform_16, window_bounds = array<i64: 1, 16, 64>}]} {
    %c0_i32 = arith.constant 0 : i32
    %0 = arith.cmpi eq, %arg1, %c0_i32 : i32
    %1 = arith.extui %0 : i1 to i32
    %c0_i32_0 = arith.constant 0 : i32
    %2 = arith.cmpi ne, %1, %c0_i32_0 : i32
    scf.if %2 {
      %c0_62 = arith.constant 0 : index
      %c0_63 = arith.constant 0 : index
      %c0_64 = arith.constant 0 : index
      %128 = vector.load %arg2[%c0_62, %c0_63, %c0_64] : memref<1x16x64xf32, #tpu.memory_space<vmem>>, vector<1x16x64xf32>
      %129 = vector.shape_cast %128 : vector<1x16x64xf32> to vector<16x64xf32>
      %c0_65 = arith.constant 0 : index
      %c0_66 = arith.constant 0 : index
      %130 = vector.load %arg19[%c0_65, %c0_66] : memref<16x64xf32, #tpu.memory_space<vmem>>, vector<16x64xf32>
      tpu.vector_store %arg19[%c0_65, %c0_66], %129 {strides = array<i32>} : memref<16x64xf32, #tpu.memory_space<vmem>>, vector<16x64xf32>,
    } else {
    }
    %c0 = arith.constant 0 : index
    %c0_1 = arith.constant 0 : index
    %3 = vector.load %arg19[%c0, %c0_1] : memref<16x64xf32, #tpu.memory_space<vmem>>, vector<16x64xf32>
    %c0_2 = arith.constant 0 : index
    %c0_3 = arith.constant 0 : index
    %c0_4 = arith.constant 0 : index
    %4 = vector.load %arg4[%c0_2, %c0_3, %c0_4] : memref<1x1x64xf32, #tpu.memory_space<vmem>>, vector<1x1x64xf32>
    %5 = vector.shape_cast %4 : vector<1x1x64xf32> to vector<1x64xf32>
    %c0_5 = arith.constant 0 : index
    %c0_6 = arith.constant 0 : index
    %c0_7 = arith.constant 0 : index
    %6 = vector.load %arg5[%c0_5, %c0_6, %c0_7] : memref<1x1x64xf32, #tpu.memory_space<vmem>>, vector<1x1x64xf32>
    %7 = vector.shape_cast %6 : vector<1x1x64xf32> to vector<1x64xf32>
    %cst = arith.constant dense<0.000000e+00> : vector<16xf32>
    %8 = vector.multi_reduction <add>, %3, %cst [1] : vector<16x64xf32> to vector<16xf32>
    %9 = vector.shape_cast %8 : vector<16xf32> to vector<16x1xf32>
    %cst_8 = arith.constant 6.400000e+01 : f32
    %10 = vector.broadcast %cst_8 : f32 to vector<16x1xf32>
    %11 = arith.divf %9, %10 : vector<16x1xf32>
    %12 = vector.broadcast %11 : vector<16x1xf32> to vector<16x64xf32>
    %13 = arith.subf %3, %12 : vector<16x64xf32>
    %14 = arith.mulf %13, %13 : vector<16x64xf32>
    %cst_9 = arith.constant dense<0.000000e+00> : vector<16xf32>
    %15 = vector.multi_reduction <add>, %14, %cst_9 [1] : vector<16x64xf32> to vector<16xf32>
    %16 = vector.shape_cast %15 : vector<16xf32> to vector<16x1xf32>
    %cst_10 = arith.constant 6.400000e+01 : f32
    %17 = vector.broadcast %cst_10 : f32 to vector<16x1xf32>
    %18 = arith.divf %16, %17 : vector<16x1xf32>
    %19 = vector.broadcast %11 : vector<16x1xf32> to vector<16x64xf32>
    %20 = arith.subf %3, %19 : vector<16x64xf32>
    %cst_11 = arith.constant 9.99999974E-6 : f32
    %21 = vector.broadcast %cst_11 : f32 to vector<16x1xf32>
    %22 = arith.addf %18, %21 : vector<16x1xf32>
    %23 = math.rsqrt %22 : vector<16x1xf32>
    %24 = vector.broadcast %23 : vector<16x1xf32> to vector<16x64xf32>
    %25 = arith.mulf %20, %24 : vector<16x64xf32>
    %26 = vector.broadcast %5 : vector<1x64xf32> to vector<16x64xf32>
    %27 = arith.mulf %25, %26 : vector<16x64xf32>
    %28 = vector.broadcast %7 : vector<1x64xf32> to vector<16x64xf32>
    %29 = arith.addf %27, %28 : vector<16x64xf32>
    %c0_12 = arith.constant 0 : index
    %c0_13 = arith.constant 0 : index
    %c0_14 = arith.constant 0 : index
    %30 = vector.load %arg6[%c0_12, %c0_13, %c0_14] : memref<1x64x192xf32, #tpu.memory_space<vmem>>, vector<1x64x192xf32>
    %31 = vector.shape_cast %30 : vector<1x64x192xf32> to vector<64x192xf32>
    %cst_15 = arith.constant dense<0.000000e+00> : vector<16x192xf32>
    %32 = tpu.matmul %29, %31, %cst_15 {dimension_numbers = #tpu.dot_dimension_numbers<[1], [0], [0], [1], [0, 0, 1, 1], [], []>} : vector<16x64xf32>, vector<64x192xf32>, vector<16x192xf32> -> vector<16x192xf32>
    %c0_16 = arith.constant 0 : index
    %c0_17 = arith.constant 0 : index
    %c0_18 = arith.constant 0 : index
    %33 = vector.load %arg7[%c0_16, %c0_17, %c0_18] : memref<1x1x192xf32, #tpu.memory_space<vmem>>, vector<1x1x192xf32>
    %34 = vector.shape_cast %33 : vector<1x1x192xf32> to vector<1x192xf32>
    %35 = vector.broadcast %34 : vector<1x192xf32> to vector<16x192xf32>
    %36 = arith.addf %32, %35 : vector<16x192xf32>
    %37 = vector.extract_strided_slice %36 {offsets = [0, 0], sizes = [16, 64], strides = [1, 1]} : vector<16x192xf32> to vector<16x64xf32>
    %38 = vector.extract_strided_slice %36 {offsets = [0, 64], sizes = [16, 64], strides = [1, 1]} : vector<16x192xf32> to vector<16x64xf32>
    %39 = vector.extract_strided_slice %36 {offsets = [0, 128], sizes = [16, 64], strides = [1, 1]} : vector<16x192xf32> to vector<16x64xf32>
    %40 = vector.shape_cast %37 : vector<16x64xf32> to vector<2x8x4x16xf32>
    %41 = tpu.transpose %40, [0, 2, 1, 3] : vector<2x8x4x16xf32> -> vector<2x4x8x16xf32>
    %42 = vector.shape_cast %41 : vector<2x4x8x16xf32> to vector<8x8x16xf32>
    %43 = vector.shape_cast %38 : vector<16x64xf32> to vector<2x8x4x16xf32>
    %44 = tpu.transpose %43, [0, 2, 1, 3] : vector<2x8x4x16xf32> -> vector<2x4x8x16xf32>
    %45 = vector.shape_cast %44 : vector<2x4x8x16xf32> to vector<8x8x16xf32>
    %46 = vector.shape_cast %39 : vector<16x64xf32> to vector<2x8x4x16xf32>
    %47 = tpu.transpose %46, [0, 2, 1, 3] : vector<2x8x4x16xf32> -> vector<2x4x8x16xf32>
    %48 = vector.shape_cast %47 : vector<2x4x8x16xf32> to vector<8x8x16xf32>
    "tpu.trace_start"() <{level = 10 : i32, message = "gqf,gkf->gqk"}> : () -> ()
    %cst_19 = arith.constant dense<0.000000e+00> : vector<8x8x8xf32>
    %49 = tpu.matmul %42, %45, %cst_19 {dimension_numbers = #tpu.dot_dimension_numbers<[2], [2], [1], [1], [0, 0, 0, 1, 1, 1], [0], [0]>} : vector<8x8x16xf32>, vector<8x8x16xf32>, vector<8x8x8xf32> -> vector<8x8x8xf32>
    "tpu.trace_stop"() : () -> ()
    %c0_20 = arith.constant 0 : index
    %c0_21 = arith.constant 0 : index
    %50 = vector.load %arg3[%c0_20, %c0_21] : memref<8x8xf32, #tpu.memory_space<vmem>>, vector<8x8xf32>
    %51 = vector.shape_cast %50 : vector<8x8xf32> to vector<1x8x8xf32>
    %52 = vector.broadcast %51 : vector<1x8x8xf32> to vector<8x8x8xf32>
    %53 = arith.addf %49, %52 : vector<8x8x8xf32>
    %cst_22 = arith.constant dense<0xFF800000> : vector<8x8xf32>
    %54 = vector.multi_reduction <maximumf>, %53, %cst_22 [2] : vector<8x8x8xf32> to vector<8x8xf32>
    %55 = vector.shape_cast %54 : vector<8x8xf32> to vector<8x8x1xf32>
    %56 = vector.broadcast %55 : vector<8x8x1xf32> to vector<8x8x8xf32>
    %57 = arith.subf %53, %56 : vector<8x8x8xf32>
    %58 = math.exp %57 : vector<8x8x8xf32>
    %cst_23 = arith.constant dense<0.000000e+00> : vector<8x8xf32>
    %59 = vector.multi_reduction <add>, %58, %cst_23 [2] : vector<8x8x8xf32> to vector<8x8xf32>
    %60 = vector.shape_cast %59 : vector<8x8xf32> to vector<8x8x1xf32>
    %61 = vector.broadcast %60 : vector<8x8x1xf32> to vector<8x8x8xf32>
    %62 = arith.divf %58, %61 : vector<8x8x8xf32>
    "tpu.trace_start"() <{level = 10 : i32, message = "gqk,gkf->gqf"}> : () -> ()
    %cst_24 = arith.constant dense<0.000000e+00> : vector<8x8x16xf32>
    %63 = tpu.matmul %62, %48, %cst_24 {dimension_numbers = #tpu.dot_dimension_numbers<[2], [1], [1], [2], [0, 0, 0, 1, 1, 2], [0], [0]>} : vector<8x8x8xf32>, vector<8x8x16xf32>, vector<8x8x16xf32> -> vector<8x8x16xf32>
    "tpu.trace_stop"() : () -> ()
    %64 = vector.shape_cast %63 : vector<8x8x16xf32> to vector<2x4x8x16xf32>
    %65 = tpu.transpose %64, [0, 2, 1, 3] : vector<2x4x8x16xf32> -> vector<2x8x4x16xf32>
    %66 = vector.shape_cast %65 : vector<2x8x4x16xf32> to vector<16x64xf32>
    %c0_25 = arith.constant 0 : index
    %c0_26 = arith.constant 0 : index
    %c0_27 = arith.constant 0 : index
    %67 = vector.load %arg8[%c0_25, %c0_26, %c0_27] : memref<1x64x64xf32, #tpu.memory_space<vmem>>, vector<1x64x64xf32>
    %68 = vector.shape_cast %67 : vector<1x64x64xf32> to vector<64x64xf32>
    %cst_28 = arith.constant dense<0.000000e+00> : vector<16x64xf32>
    %69 = tpu.matmul %66, %68, %cst_28 {dimension_numbers = #tpu.dot_dimension_numbers<[1], [0], [0], [1], [0, 0, 1, 1], [], []>} : vector<16x64xf32>, vector<64x64xf32>, vector<16x64xf32> -> vector<16x64xf32>
    %70 = arith.addf %3, %69 : vector<16x64xf32>
    %c0_29 = arith.constant 0 : index
    %c0_30 = arith.constant 0 : index
    %c0_31 = arith.constant 0 : index
    %71 = vector.load %arg9[%c0_29, %c0_30, %c0_31] : memref<1x1x64xf32, #tpu.memory_space<vmem>>, vector<1x1x64xf32>
    %72 = vector.shape_cast %71 : vector<1x1x64xf32> to vector<1x64xf32>
    %73 = vector.broadcast %72 : vector<1x64xf32> to vector<16x64xf32>
    %74 = arith.addf %70, %73 : vector<16x64xf32>
    %c0_32 = arith.constant 0 : index
    %c0_33 = arith.constant 0 : index
    %c0_34 = arith.constant 0 : index
    %75 = vector.load %arg10[%c0_32, %c0_33, %c0_34] : memref<1x1x64xf32, #tpu.memory_space<vmem>>, vector<1x1x64xf32>
    %76 = vector.shape_cast %75 : vector<1x1x64xf32> to vector<1x64xf32>
    %c0_35 = arith.constant 0 : index
    %c0_36 = arith.constant 0 : index
    %c0_37 = arith.constant 0 : index
    %77 = vector.load %arg11[%c0_35, %c0_36, %c0_37] : memref<1x1x64xf32, #tpu.memory_space<vmem>>, vector<1x1x64xf32>
    %78 = vector.shape_cast %77 : vector<1x1x64xf32> to vector<1x64xf32>
    %cst_38 = arith.constant dense<0.000000e+00> : vector<16xf32>
    %79 = vector.multi_reduction <add>, %74, %cst_38 [1] : vector<16x64xf32> to vector<16xf32>
    %80 = vector.shape_cast %79 : vector<16xf32> to vector<16x1xf32>
    %cst_39 = arith.constant 6.400000e+01 : f32
    %81 = vector.broadcast %cst_39 : f32 to vector<16x1xf32>
    %82 = arith.divf %80, %81 : vector<16x1xf32>
    %83 = vector.broadcast %82 : vector<16x1xf32> to vector<16x64xf32>
    %84 = arith.subf %74, %83 : vector<16x64xf32>
    %85 = arith.mulf %84, %84 : vector<16x64xf32>
    %cst_40 = arith.constant dense<0.000000e+00> : vector<16xf32>
    %86 = vector.multi_reduction <add>, %85, %cst_40 [1] : vector<16x64xf32> to vector<16xf32>
    %87 = vector.shape_cast %86 : vector<16xf32> to vector<16x1xf32>
    %cst_41 = arith.constant 6.400000e+01 : f32
    %88 = vector.broadcast %cst_41 : f32 to vector<16x1xf32>
    %89 = arith.divf %87, %88 : vector<16x1xf32>
    %90 = vector.broadcast %82 : vector<16x1xf32> to vector<16x64xf32>
    %91 = arith.subf %74, %90 : vector<16x64xf32>
    %cst_42 = arith.constant 9.99999974E-6 : f32
    %92 = vector.broadcast %cst_42 : f32 to vector<16x1xf32>
    %93 = arith.addf %89, %92 : vector<16x1xf32>
    %94 = math.rsqrt %93 : vector<16x1xf32>
    %95 = vector.broadcast %94 : vector<16x1xf32> to vector<16x64xf32>
    %96 = arith.mulf %91, %95 : vector<16x64xf32>
    %97 = vector.broadcast %76 : vector<1x64xf32> to vector<16x64xf32>
    %98 = arith.mulf %96, %97 : vector<16x64xf32>
    %99 = vector.broadcast %78 : vector<1x64xf32> to vector<16x64xf32>
    %100 = arith.addf %98, %99 : vector<16x64xf32>
    %c0_43 = arith.constant 0 : index
    %c0_44 = arith.constant 0 : index
    %c0_45 = arith.constant 0 : index
    %101 = vector.load %arg12[%c0_43, %c0_44, %c0_45] : memref<1x64x256xf32, #tpu.memory_space<vmem>>, vector<1x64x256xf32>
    %102 = vector.shape_cast %101 : vector<1x64x256xf32> to vector<64x256xf32>
    %cst_46 = arith.constant dense<0.000000e+00> : vector<16x256xf32>
    %103 = tpu.matmul %100, %102, %cst_46 {dimension_numbers = #tpu.dot_dimension_numbers<[1], [0], [0], [1], [0, 0, 1, 1], [], []>} : vector<16x64xf32>, vector<64x256xf32>, vector<16x256xf32> -> vector<16x256xf32>
    %c0_47 = arith.constant 0 : index
    %c0_48 = arith.constant 0 : index
    %c0_49 = arith.constant 0 : index
    %104 = vector.load %arg13[%c0_47, %c0_48, %c0_49] : memref<1x1x256xf32, #tpu.memory_space<vmem>>, vector<1x1x256xf32>
    %105 = vector.shape_cast %104 : vector<1x1x256xf32> to vector<1x256xf32>
    %106 = vector.broadcast %105 : vector<1x256xf32> to vector<16x256xf32>
    %107 = arith.addf %103, %106 : vector<16x256xf32>
    %cst_50 = arith.constant 1.702000e+00 : f32
    %108 = vector.broadcast %cst_50 : f32 to vector<16x256xf32>
    %109 = arith.mulf %108, %107 : vector<16x256xf32>
    %110 = arith.negf %109 : vector<16x256xf32>
    %111 = math.exp %110 : vector<16x256xf32>
    %cst_51 = arith.constant 1.000000e+00 : f32
    %112 = vector.broadcast %cst_51 : f32 to vector<16x256xf32>
    %113 = arith.addf %112, %111 : vector<16x256xf32>
    %114 = arith.divf %112, %113 : vector<16x256xf32>
    %115 = arith.mulf %107, %114 : vector<16x256xf32>
    %c0_52 = arith.constant 0 : index
    %c0_53 = arith.constant 0 : index
    %c0_54 = arith.constant 0 : index
    %116 = vector.load %arg14[%c0_52, %c0_53, %c0_54] : memref<1x256x64xf32, #tpu.memory_space<vmem>>, vector<1x256x64xf32>
    %117 = vector.shape_cast %116 : vector<1x256x64xf32> to vector<256x64xf32>
    %cst_55 = arith.constant dense<0.000000e+00> : vector<16x64xf32>
    %118 = tpu.matmul %115, %117, %cst_55 {dimension_numbers = #tpu.dot_dimension_numbers<[1], [0], [0], [1], [0, 0, 1, 1], [], []>} : vector<16x256xf32>, vector<256x64xf32>, vector<16x64xf32> -> vector<16x64xf32>
    %c0_56 = arith.constant 0 : index
    %c0_57 = arith.constant 0 : index
    %c0_58 = arith.constant 0 : index
    %119 = vector.load %arg15[%c0_56, %c0_57, %c0_58] : memref<1x1x64xf32, #tpu.memory_space<vmem>>, vector<1x1x64xf32>
    %120 = vector.shape_cast %119 : vector<1x1x64xf32> to vector<1x64xf32>
    %121 = vector.broadcast %120 : vector<1x64xf32> to vector<16x64xf32>
    %122 = arith.addf %118, %121 : vector<16x64xf32>
    %123 = arith.addf %74, %122 : vector<16x64xf32>
    %c0_59 = arith.constant 0 : index
    %c0_60 = arith.constant 0 : index
    %124 = vector.load %arg19[%c0_59, %c0_60] : memref<16x64xf32, #tpu.memory_space<vmem>>, vector<16x64xf32>
    tpu.vector_store %arg19[%c0_59, %c0_60], %123 {strides = array<i32>} : memref<16x64xf32, #tpu.memory_space<vmem>>, vector<16x64xf32>,
    %c1_i32 = arith.constant 1 : i32
    %125 = arith.cmpi eq, %arg1, %c1_i32 : i32
    %126 = arith.extui %125 : i1 to i32
    %c0_i32_61 = arith.constant 0 : i32
    %127 = arith.cmpi ne, %126, %c0_i32_61 : i32
    scf.if %127 {
      %c0_62 = arith.constant 0 : index
      %c0_63 = arith.constant 0 : index
      %128 = vector.load %arg16[%c0_62, %c0_63] : memref<1x64xf32, #tpu.memory_space<vmem>>, vector<1x64xf32>
      %c0_64 = arith.constant 0 : index
      %c0_65 = arith.constant 0 : index
      %129 = vector.load %arg17[%c0_64, %c0_65] : memref<1x64xf32, #tpu.memory_space<vmem>>, vector<1x64xf32>
      %cst_66 = arith.constant dense<0.000000e+00> : vector<16xf32>
      %130 = vector.multi_reduction <add>, %123, %cst_66 [1] : vector<16x64xf32> to vector<16xf32>
      %131 = vector.shape_cast %130 : vector<16xf32> to vector<16x1xf32>
      %cst_67 = arith.constant 6.400000e+01 : f32
      %132 = vector.broadcast %cst_67 : f32 to vector<16x1xf32>
      %133 = arith.divf %131, %132 : vector<16x1xf32>
      %134 = vector.broadcast %133 : vector<16x1xf32> to vector<16x64xf32>
      %135 = arith.subf %123, %134 : vector<16x64xf32>
      %136 = arith.mulf %135, %135 : vector<16x64xf32>
      %cst_68 = arith.constant dense<0.000000e+00> : vector<16xf32>
      %137 = vector.multi_reduction <add>, %136, %cst_68 [1] : vector<16x64xf32> to vector<16xf32>
      %138 = vector.shape_cast %137 : vector<16xf32> to vector<16x1xf32>
      %cst_69 = arith.constant 6.400000e+01 : f32
      %139 = vector.broadcast %cst_69 : f32 to vector<16x1xf32>
      %140 = arith.divf %138, %139 : vector<16x1xf32>
      %141 = vector.broadcast %133 : vector<16x1xf32> to vector<16x64xf32>
      %142 = arith.subf %123, %141 : vector<16x64xf32>
      %cst_70 = arith.constant 9.99999974E-6 : f32
      %143 = vector.broadcast %cst_70 : f32 to vector<16x1xf32>
      %144 = arith.addf %140, %143 : vector<16x1xf32>
      %145 = math.rsqrt %144 : vector<16x1xf32>
      %146 = vector.broadcast %145 : vector<16x1xf32> to vector<16x64xf32>
      %147 = arith.mulf %142, %146 : vector<16x64xf32>
      %148 = vector.broadcast %128 : vector<1x64xf32> to vector<16x64xf32>
      %149 = arith.mulf %147, %148 : vector<16x64xf32>
      %150 = vector.broadcast %129 : vector<1x64xf32> to vector<16x64xf32>
      %151 = arith.addf %149, %150 : vector<16x64xf32>
      %c0_71 = arith.constant 0 : index
      %c0_72 = arith.constant 0 : index
      %c0_73 = arith.constant 0 : index
      %152 = vector.load %arg18[%c0_71, %c0_72, %c0_73] : memref<1x16x64xf32, #tpu.memory_space<vmem>>, vector<1x16x64xf32>
      %153 = vector.shape_cast %152 : vector<1x16x64xf32> to vector<16x64xf32>
      %154 = vector.shape_cast %151 : vector<16x64xf32> to vector<1x16x64xf32>
      tpu.vector_store %arg18[%c0_71, %c0_72, %c0_73], %154 {strides = array<i32>} : memref<1x16x64xf32, #tpu.memory_space<vmem>>, vector<1x16x64xf32>,
    } else {
    }
    return
  }
  func.func @transform_0(%arg0: i32, %arg1: i32) -> (i32, i32, i32) {
    %c0_i32 = arith.constant 0 : i32
    %c0_i32_0 = arith.constant 0 : i32
    %c0_i32_1 = arith.constant 0 : i32
    return %arg0, %c0_i32, %c0_i32_0 : i32, i32, i32
  }
  func.func @transform_1(%arg0: i32, %arg1: i32) -> (i32, i32) {
    %c0_i32 = arith.constant 0 : i32
    %c0_i32_0 = arith.constant 0 : i32
    %c0_i32_1 = arith.constant 0 : i32
    return %c0_i32, %c0_i32_0 : i32, i32
  }
  func.func @transform_2(%arg0: i32, %arg1: i32) -> (i32, i32, i32) {
    %c0_i32 = arith.constant 0 : i32
    %c0_i32_0 = arith.constant 0 : i32
    %c0_i32_1 = arith.constant 0 : i32
    return %arg1, %c0_i32, %c0_i32_0 : i32, i32, i32
  }
  func.func @transform_3(%arg0: i32, %arg1: i32) -> (i32, i32, i32) {
    %c0_i32 = arith.constant 0 : i32
    %c0_i32_0 = arith.constant 0 : i32
    %c0_i32_1 = arith.constant 0 : i32
    return %arg1, %c0_i32, %c0_i32_0 : i32, i32, i32
  }
  func.func @transform_4(%arg0: i32, %arg1: i32) -> (i32, i32, i32) {
    %c0_i32 = arith.constant 0 : i32
    %c0_i32_0 = arith.constant 0 : i32
    %c0_i32_1 = arith.constant 0 : i32
    return %arg1, %c0_i32, %c0_i32_0 : i32, i32, i32
  }
  func.func @transform_5(%arg0: i32, %arg1: i32) -> (i32, i32, i32) {
    %c0_i32 = arith.constant 0 : i32
    %c0_i32_0 = arith.constant 0 : i32
    %c0_i32_1 = arith.constant 0 : i32
    return %arg1, %c0_i32, %c0_i32_0 : i32, i32, i32
  }
  func.func @transform_6(%arg0: i32, %arg1: i32) -> (i32, i32, i32) {
    %c0_i32 = arith.constant 0 : i32
    %c0_i32_0 = arith.constant 0 : i32
    %c0_i32_1 = arith.constant 0 : i32
    return %arg1, %c0_i32, %c0_i32_0 : i32, i32, i32
  }
  func.func @transform_7(%arg0: i32, %arg1: i32) -> (i32, i32, i32) {
    %c0_i32 = arith.constant 0 : i32
    %c0_i32_0 = arith.constant 0 : i32
    %c0_i32_1 = arith.constant 0 : i32
    return %arg1, %c0_i32, %c0_i32_0 : i32, i32, i32
  }
  func.func @transform_8(%arg0: i32, %arg1: i32) -> (i32, i32, i32) {
    %c0_i32 = arith.constant 0 : i32
    %c0_i32_0 = arith.constant 0 : i32
    %c0_i32_1 = arith.constant 0 : i32
    return %arg1, %c0_i32, %c0_i32_0 : i32, i32, i32
  }
  func.func @transform_9(%arg0: i32, %arg1: i32) -> (i32, i32, i32) {
    %c0_i32 = arith.constant 0 : i32
    %c0_i32_0 = arith.constant 0 : i32
    %c0_i32_1 = arith.constant 0 : i32
    return %arg1, %c0_i32, %c0_i32_0 : i32, i32, i32
  }
  func.func @transform_10(%arg0: i32, %arg1: i32) -> (i32, i32, i32) {
    %c0_i32 = arith.constant 0 : i32
    %c0_i32_0 = arith.constant 0 : i32
    %c0_i32_1 = arith.constant 0 : i32
    return %arg1, %c0_i32, %c0_i32_0 : i32, i32, i32
  }
  func.func @transform_11(%arg0: i32, %arg1: i32) -> (i32, i32, i32) {
    %c0_i32 = arith.constant 0 : i32
    %c0_i32_0 = arith.constant 0 : i32
    %c0_i32_1 = arith.constant 0 : i32
    return %arg1, %c0_i32, %c0_i32_0 : i32, i32, i32
  }
  func.func @transform_12(%arg0: i32, %arg1: i32) -> (i32, i32, i32) {
    %c0_i32 = arith.constant 0 : i32
    %c0_i32_0 = arith.constant 0 : i32
    %c0_i32_1 = arith.constant 0 : i32
    return %arg1, %c0_i32, %c0_i32_0 : i32, i32, i32
  }
  func.func @transform_13(%arg0: i32, %arg1: i32) -> (i32, i32, i32) {
    %c0_i32 = arith.constant 0 : i32
    %c0_i32_0 = arith.constant 0 : i32
    %c0_i32_1 = arith.constant 0 : i32
    return %arg1, %c0_i32, %c0_i32_0 : i32, i32, i32
  }
  func.func @transform_14(%arg0: i32, %arg1: i32) -> (i32, i32) {
    %c0_i32 = arith.constant 0 : i32
    %c0_i32_0 = arith.constant 0 : i32
    %c0_i32_1 = arith.constant 0 : i32
    return %c0_i32, %c0_i32_0 : i32, i32
  }
  func.func @transform_15(%arg0: i32, %arg1: i32) -> (i32, i32) {
    %c0_i32 = arith.constant 0 : i32
    %c0_i32_0 = arith.constant 0 : i32
    %c0_i32_1 = arith.constant 0 : i32
    return %c0_i32, %c0_i32_0 : i32, i32
  }
  func.func @transform_16(%arg0: i32, %arg1: i32) -> (i32, i32, i32) {
    %c0_i32 = arith.constant 0 : i32
    %c0_i32_0 = arith.constant 0 : i32
    %c0_i32_1 = arith.constant 0 : i32
    return %arg0, %c0_i32, %c0_i32_0 : i32, i32, i32
  }
}

</mosaic_0001>

<llo_original>
// kernel: clip_forward.1
$region0: #{clip_forward.1}
  #allocation0 [shape = 'u32[]', space=smem, size = 0x4, offset = 0x4, fixed_abs, tag = 'smem constant byte address 0x4 - core index']
  #allocation1 [shape = 'u32[144,128]{1,0:T(1,128)}', space=vmem, size = 0x12000, scoped, tag = 'internal scratch']
  #allocation2 [shape = 'f32[16,64]{1,0:T(8,128)}', space=vmem, size = 0x2000, scoped, tag = 'scratch operand']
  %s0 = inlined_call_operand.hbm [shape: f32[1,16,64], index: 0, kind: input, shape index: {}]
  %s1 = inlined_call_operand.hbm [shape: f32[8,8], index: 1, kind: input, shape index: {}]
  %s2 = inlined_call_operand.hbm [shape: f32[2,1,64], index: 2, kind: input, shape index: {}]
  %s3 = inlined_call_operand.hbm [shape: f32[2,1,64], index: 3, kind: input, shape index: {}]
  %s4 = inlined_call_operand.hbm [shape: f32[2,64,192], index: 4, kind: input, shape index: {}]
  %s5 = inlined_call_operand.hbm [shape: f32[2,1,192], index: 5, kind: input, shape index: {}]
  %s6 = inlined_call_operand.hbm [shape: f32[2,64,64], index: 6, kind: input, shape index: {}]
  %s7 = inlined_call_operand.hbm [shape: f32[2,1,64], index: 7, kind: input, shape index: {}]
  %s8 = inlined_call_operand.hbm [shape: f32[2,1,64], index: 8, kind: input, shape index: {}]
  %s9 = inlined_call_operand.hbm [shape: f32[2,1,64], index: 9, kind: input, shape index: {}]
  %s10 = inlined_call_operand.hbm [shape: f32[2,64,256], index: 10, kind: input, shape index: {}]
  %s11 = inlined_call_operand.hbm [shape: f32[2,1,256], index: 11, kind: input, shape index: {}]
  %s12 = inlined_call_operand.hbm [shape: f32[2,256,64], index: 12, kind: input, shape index: {}]
  %s13 = inlined_call_operand.hbm [shape: f32[2,1,64], index: 13, kind: input, shape index: {}]
  %s14 = inlined_call_operand.hbm [shape: f32[1,64], index: 14, kind: input, shape index: {}]
  %s15 = inlined_call_operand.hbm [shape: f32[1,64], index: 15, kind: input, shape index: {}]
  %s16 = inlined_call_operand.hbm [shape: f32[1,16,64], index: 16, kind: output, shape index: {}]
  %s17 = sld [smem:[#allocation0]]
  $region169: #{clip_forward.1} parent=0
    _
  %s19 = ssub.s32 1, %s17
  %s20 = scalar_select 0, %s19, %s17
  $region1: #{clip_forward.1} parent=0
    #allocation3 [shape = 'u8[8192]{0}', space=vmem, size = 0x2000, scoped, tag = 'input window, operand 0, single buffered']
    #allocation4 [shape = 's32[2]{0}', space=sflag, size = 0x8, scoped, tag = 'scoped memory for clip_forward.1']
    #allocation5 [shape = 's32[2]{0}', space=sflag, size = 0x8, scoped, tag = 'scoped memory for clip_forward.1']
    #allocation6 [shape = 'u8[4096]{0}', space=vmem, size = 0x1000, scoped, tag = 'input window, operand 1, single buffered']
    #allocation7 [shape = 's32[1]{0}', space=sflag, size = 0x4, scoped, tag = 'scoped memory for clip_forward.1']
    #allocation8 [shape = 'u8[1024]{0}', space=vmem, size = 0x400, scoped, tag = 'input window, operand 2']
    #allocation9 [shape = 'u8[1024]{0}', space=vmem, size = 0x400, scoped, tag = 'input window, operand 3']
    #allocation10 [shape = 'u8[131072]{0}', space=vmem, size = 0x20000, scoped, tag = 'input window, operand 4']
    #allocation11 [shape = 'u8[2048]{0}', space=vmem, size = 0x800, scoped, tag = 'input window, operand 5']
    #allocation12 [shape = 'u8[65536]{0}', space=vmem, size = 0x10000, scoped, tag = 'input window, operand 6']
    #allocation13 [shape = 'u8[1024]{0}', space=vmem, size = 0x400, scoped, tag = 'input window, operand 7']
    #allocation14 [shape = 'u8[1024]{0}', space=vmem, size = 0x400, scoped, tag = 'input window, operand 8']
    #allocation15 [shape = 'u8[1024]{0}', space=vmem, size = 0x400, scoped, tag = 'input window, operand 9']
    #allocation16 [shape = 'u8[131072]{0}', space=vmem, size = 0x20000, scoped, tag = 'input window, operand 10']
    #allocation17 [shape = 'u8[2048]{0}', space=vmem, size = 0x800, scoped, tag = 'input window, operand 11']
    #allocation18 [shape = 'u8[262144]{0}', space=vmem, size = 0x40000, scoped, tag = 'input window, operand 12']
    #allocation19 [shape = 'u8[1024]{0}', space=vmem, size = 0x400, scoped, tag = 'input window, operand 13']
    #allocation20 [shape = 'u8[512]{0}', space=vmem, size = 0x400, scoped, tag = 'input window, operand 14, single buffered']
    #allocation21 [shape = 'u8[512]{0}', space=vmem, size = 0x400, scoped, tag = 'input window, operand 15, single buffered']
    #allocation22 [shape = 's32[1]{0}', space=sflag, size = 0x4, scoped, tag = 'scoped memory for clip_forward.1']
    #allocation23 [shape = 'u8[8192]{0}', space=vmem, size = 0x2000, scoped, tag = 'output window, operand 0, single buffered']
    %21 = vsyncpa [#allocation4], 0
    %22 = vsyncpa [#allocation7], 0
    %23 = vsyncpa [#allocation22], 0
    %24 = vsyncpa [#allocation5], 0
    loop: start=0, step=1, limit=4
    $region2: #{clip_forward.1} parent=1 // loop_pre_header
      _
    $region3: #{clip_forward.1} parent=1 // loop_header
      %s26 = sphi 0, %s30
      %p27 = scmp.ge.s32.totalorder %s26, 4
      %s33 = sphi 0, %s45
      %s34 = sphi 0, %s41
      %s35 = sphi 0, %s33
      %s36 = sphi 0, %s34
      %s37 = sphi 0, %s35
      %s38 = sphi 0, %s36
      %s48 = sphi 0, %s50
      %s51 = sphi 0, %s48
      %s52 = sphi 0, %s51
      %s68 = sphi 0, %s52
      %s72 = sphi 0, %s72
      %s74 = sphi 0, %s72
      %s75 = sphi 0, %s74
      %s89 = sphi 0, %s75
      %s95 = sphi 0, %s97
      %s98 = sphi 0, %s95
      %s99 = sphi 0, %s98
      %s115 = sphi 0, %s99
      %s121 = sphi 0, %s123
      %s124 = sphi 0, %s121
      %s125 = sphi 0, %s124
      %s141 = sphi 0, %s125
      %s147 = sphi 0, %s149
      %s150 = sphi 0, %s147
      %s151 = sphi 0, %s150
      %s167 = sphi 0, %s151
      %s173 = sphi 0, %s175
      %s176 = sphi 0, %s173
      %s177 = sphi 0, %s176
      %s193 = sphi 0, %s177
      %s199 = sphi 0, %s201
      %s202 = sphi 0, %s199
      %s203 = sphi 0, %s202
      %s219 = sphi 0, %s203
      %s225 = sphi 0, %s227
      %s228 = sphi 0, %s225
      %s229 = sphi 0, %s228
      %s245 = sphi 0, %s229
      %s251 = sphi 0, %s253
      %s254 = sphi 0, %s251
      %s255 = sphi 0, %s254
      %s271 = sphi 0, %s255
      %s277 = sphi 0, %s279
      %s280 = sphi 0, %s277
      %s281 = sphi 0, %s280
      %s297 = sphi 0, %s281
      %s303 = sphi 0, %s305
      %s306 = sphi 0, %s303
      %s307 = sphi 0, %s306
      %s323 = sphi 0, %s307
      %s329 = sphi 0, %s331
      %s332 = sphi 0, %s329
      %s333 = sphi 0, %s332
      %s349 = sphi 0, %s333
      %s355 = sphi 0, %s357
      %s358 = sphi 0, %s355
      %s359 = sphi 0, %s358
      %s375 = sphi 0, %s359
      %s381 = sphi 0, %s383
      %s384 = sphi 0, %s381
      %s385 = sphi 0, %s384
      %s401 = sphi 0, %s385
      %s405 = sphi 0, %s405
      %s407 = sphi 0, %s405
      %s408 = sphi 0, %s407
      %s422 = sphi 0, %s408
      %s426 = sphi 0, %s426
      %s428 = sphi 0, %s426
      %s429 = sphi 0, %s428
      %s443 = sphi 0, %s429
      %s449 = sphi 0, %s451
      %s452 = sphi 0, %s449
      %s453 = sphi 0, %s452
      %s469 = sphi 0, %s453
    $region4: #{clip_forward.1} parent=1 // loop_header_branch
      %29 = sbr.rel (%p27) target = $region8
    $region5: #{clip_forward.1} parent=1 // loop_body
      %s31 = ssub.s32 %s26, 1
      %s32 = ssub.s32 %s26, 2
      %s39 = sadd.s32 1, %s34
      %p40 = scmp.ge.s32.totalorder %s39, 2
      %s41 = scalar_select %p40, 0, %s39
      %s42 = sadd.s32 1, %s33
      %s43 = scalar_select %p40, %s42, %s33
      %p44 = scmp.ge.s32.totalorder %s43, 1
      %s45 = scalar_select %p44, 0, %s43
      %s46 = ssub.s32 %s33, %s45
      %p47 = scmp.eq.s32.totalorder %s46, 0
      %s49 = sadd.s32 %s48, 1
      %s50 = scalar_select %p47, %s48, %s49
      %p53 = pneg %p47
      %p54 = scmp.eq.s32.totalorder %s26, 1
      %p55 = por %p53, %p54
      %p56 = scmp.ne.s32.totalorder %s48, %s51
      %p57 = scmp.eq.s32.totalorder %s26, 0
      %p58 = por %p56, %p57
      %p59 = scmp.ne.s32.totalorder %s48, %s51
      %p60 = scmp.eq.s32.totalorder %s31, 1
      %p61 = por %p59, %p60
      %p62 = scmp.ne.s32.totalorder %s51, %s52
      %p63 = scmp.eq.s32.totalorder %s31, 0
      %p64 = por %p62, %p63
      %p65 = scmp.ne.s32.totalorder %s51, %s52
      %p66 = scmp.eq.s32.totalorder %s32, 1
      %p67 = por %p65, %p66
      %p69 = scmp.ne.s32.totalorder %s52, %s68
      %p70 = scmp.eq.s32.totalorder %s32, 0
      %p71 = por %p69, %p70
      %s73 = sadd.s32 %s72, 1
      %p76 = scmp.eq.s32.totalorder %s26, 1
      %p77 = scmp.ne.s32.totalorder %s72, %s74
      %p78 = scmp.eq.s32.totalorder %s26, 0
      %p79 = por %p77, %p78
      %p80 = scmp.ne.s32.totalorder %s72, %s74
      %p81 = scmp.eq.s32.totalorder %s31, 1
      %p82 = por %p80, %p81
      %p83 = scmp.ne.s32.totalorder %s74, %s75
      %p84 = scmp.eq.s32.totalorder %s31, 0
      %p85 = por %p83, %p84
      %p86 = scmp.ne.s32.totalorder %s74, %s75
      %p87 = scmp.eq.s32.totalorder %s32, 1
      %p88 = por %p86, %p87
      %p90 = scmp.ne.s32.totalorder %s75, %s89
      %p91 = scmp.eq.s32.totalorder %s32, 0
      %p92 = por %p90, %p91
      %s93 = ssub.s32 %s34, %s41
      %p94 = scmp.eq.s32.totalorder %s93, 0
      %s96 = sadd.s32 %s95, 1
      %s97 = scalar_select %p94, %s95, %s96
      %p100 = pneg %p94
      %p101 = scmp.eq.s32.totalorder %s26, 1
      %p102 = por %p100, %p101
      %p103 = scmp.ne.s32.totalorder %s95, %s98
      %p104 = scmp.eq.s32.totalorder %s26, 0
      %p105 = por %p103, %p104
      %p106 = scmp.ne.s32.totalorder %s95, %s98
      %p107 = scmp.eq.s32.totalorder %s31, 1
      %p108 = por %p106, %p107
      %p109 = scmp.ne.s32.totalorder %s98, %s99
      %p110 = scmp.eq.s32.totalorder %s31, 0
      %p111 = por %p109, %p110
      %p112 = scmp.ne.s32.totalorder %s98, %s99
      %p113 = scmp.eq.s32.totalorder %s32, 1
      %p114 = por %p112, %p113
      %p116 = scmp.ne.s32.totalorder %s99, %s115
      %p117 = scmp.eq.s32.totalorder %s32, 0
      %p118 = por %p116, %p117
      %s119 = ssub.s32 %s34, %s41
      %p120 = scmp.eq.s32.totalorder %s119, 0
      %s122 = sadd.s32 %s121, 1
      %s123 = scalar_select %p120, %s121, %s122
      %p126 = pneg %p120
      %p127 = scmp.eq.s32.totalorder %s26, 1
      %p128 = por %p126, %p127
      %p129 = scmp.ne.s32.totalorder %s121, %s124
      %p130 = scmp.eq.s32.totalorder %s26, 0
      %p131 = por %p129, %p130
      %p132 = scmp.ne.s32.totalorder %s121, %s124
      %p133 = scmp.eq.s32.totalorder %s31, 1
      %p134 = por %p132, %p133
      %p135 = scmp.ne.s32.totalorder %s124, %s125
      %p136 = scmp.eq.s32.totalorder %s31, 0
      %p137 = por %p135, %p136
      %p138 = scmp.ne.s32.totalorder %s124, %s125
      %p139 = scmp.eq.s32.totalorder %s32, 1
      %p140 = por %p138, %p139
      %p142 = scmp.ne.s32.totalorder %s125, %s141
      %p143 = scmp.eq.s32.totalorder %s32, 0
      %p144 = por %p142, %p143
      %s145 = ssub.s32 %s34, %s41
      %p146 = scmp.eq.s32.totalorder %s145, 0
      %s148 = sadd.s32 %s147, 1
      %s149 = scalar_select %p146, %s147, %s148
      %p152 = pneg %p146
      %p153 = scmp.eq.s32.totalorder %s26, 1
      %p154 = por %p152, %p153
      %p155 = scmp.ne.s32.totalorder %s147, %s150
      %p156 = scmp.eq.s32.totalorder %s26, 0
      %p157 = por %p155, %p156
      %p158 = scmp.ne.s32.totalorder %s147, %s150
      %p159 = scmp.eq.s32.totalorder %s31, 1
      %p160 = por %p158, %p159
      %p161 = scmp.ne.s32.totalorder %s150, %s151
      %p162 = scmp.eq.s32.totalorder %s31, 0
      %p163 = por %p161, %p162
      %p164 = scmp.ne.s32.totalorder %s150, %s151
      %p165 = scmp.eq.s32.totalorder %s32, 1
      %p166 = por %p164, %p165
      %p168 = scmp.ne.s32.totalorder %s151, %s167
      %p169 = scmp.eq.s32.totalorder %s32, 0
      %p170 = por %p168, %p169
      %s171 = ssub.s32 %s34, %s41
      %p172 = scmp.eq.s32.totalorder %s171, 0
      %s174 = sadd.s32 %s173, 1
      %s175 = scalar_select %p172, %s173, %s174
      %p178 = pneg %p172
      %p179 = scmp.eq.s32.totalorder %s26, 1
      %p180 = por %p178, %p179
      %p181 = scmp.ne.s32.totalorder %s173, %s176
      %p182 = scmp.eq.s32.totalorder %s26, 0
      %p183 = por %p181, %p182
      %p184 = scmp.ne.s32.totalorder %s173, %s176
      %p185 = scmp.eq.s32.totalorder %s31, 1
      %p186 = por %p184, %p185
      %p187 = scmp.ne.s32.totalorder %s176, %s177
      %p188 = scmp.eq.s32.totalorder %s31, 0
      %p189 = por %p187, %p188
      %p190 = scmp.ne.s32.totalorder %s176, %s177
      %p191 = scmp.eq.s32.totalorder %s32, 1
      %p192 = por %p190, %p191
      %p194 = scmp.ne.s32.totalorder %s177, %s193
      %p195 = scmp.eq.s32.totalorder %s32, 0
      %p196 = por %p194, %p195
      %s197 = ssub.s32 %s34, %s41
      %p198 = scmp.eq.s32.totalorder %s197, 0
      %s200 = sadd.s32 %s199, 1
      %s201 = scalar_select %p198, %s199, %s200
      %p204 = pneg %p198
      %p205 = scmp.eq.s32.totalorder %s26, 1
      %p206 = por %p204, %p205
      %p207 = scmp.ne.s32.totalorder %s199, %s202
      %p208 = scmp.eq.s32.totalorder %s26, 0
      %p209 = por %p207, %p208
      %p210 = scmp.ne.s32.totalorder %s199, %s202
      %p211 = scmp.eq.s32.totalorder %s31, 1
      %p212 = por %p210, %p211
      %p213 = scmp.ne.s32.totalorder %s202, %s203
      %p214 = scmp.eq.s32.totalorder %s31, 0
      %p215 = por %p213, %p214
      %p216 = scmp.ne.s32.totalorder %s202, %s203
      %p217 = scmp.eq.s32.totalorder %s32, 1
      %p218 = por %p216, %p217
      %p220 = scmp.ne.s32.totalorder %s203, %s219
      %p221 = scmp.eq.s32.totalorder %s32, 0
      %p222 = por %p220, %p221
      %s223 = ssub.s32 %s34, %s41
      %p224 = scmp.eq.s32.totalorder %s223, 0
      %s226 = sadd.s32 %s225, 1
      %s227 = scalar_select %p224, %s225, %s226
      %p230 = pneg %p224
      %p231 = scmp.eq.s32.totalorder %s26, 1
      %p232 = por %p230, %p231
      %p233 = scmp.ne.s32.totalorder %s225, %s228
      %p234 = scmp.eq.s32.totalorder %s26, 0
      %p235 = por %p233, %p234
      %p236 = scmp.ne.s32.totalorder %s225, %s228
      %p237 = scmp.eq.s32.totalorder %s31, 1
      %p238 = por %p236, %p237
      %p239 = scmp.ne.s32.totalorder %s228, %s229
      %p240 = scmp.eq.s32.totalorder %s31, 0
      %p241 = por %p239, %p240
      %p242 = scmp.ne.s32.totalorder %s228, %s229
      %p243 = scmp.eq.s32.totalorder %s32, 1
      %p244 = por %p242, %p243
      %p246 = scmp.ne.s32.totalorder %s229, %s245
      %p247 = scmp.eq.s32.totalorder %s32, 0
      %p248 = por %p246, %p247
      %s249 = ssub.s32 %s34, %s41
      %p250 = scmp.eq.s32.totalorder %s249, 0
      %s252 = sadd.s32 %s251, 1
      %s253 = scalar_select %p250, %s251, %s252
      %p256 = pneg %p250
      %p257 = scmp.eq.s32.totalorder %s26, 1
      %p258 = por %p256, %p257
      %p259 = scmp.ne.s32.totalorder %s251, %s254
      %p260 = scmp.eq.s32.totalorder %s26, 0
      %p261 = por %p259, %p260
      %p262 = scmp.ne.s32.totalorder %s251, %s254
      %p263 = scmp.eq.s32.totalorder %s31, 1
      %p264 = por %p262, %p263
      %p265 = scmp.ne.s32.totalorder %s254, %s255
      %p266 = scmp.eq.s32.totalorder %s31, 0
      %p267 = por %p265, %p266
      %p268 = scmp.ne.s32.totalorder %s254, %s255
      %p269 = scmp.eq.s32.totalorder %s32, 1
      %p270 = por %p268, %p269
      %p272 = scmp.ne.s32.totalorder %s255, %s271
      %p273 = scmp.eq.s32.totalorder %s32, 0
      %p274 = por %p272, %p273
      %s275 = ssub.s32 %s34, %s41
      %p276 = scmp.eq.s32.totalorder %s275, 0
      %s278 = sadd.s32 %s277, 1
      %s279 = scalar_select %p276, %s277, %s278
      %p282 = pneg %p276
      %p283 = scmp.eq.s32.totalorder %s26, 1
      %p284 = por %p282, %p283
      %p285 = scmp.ne.s32.totalorder %s277, %s280
      %p286 = scmp.eq.s32.totalorder %s26, 0
      %p287 = por %p285, %p286
      %p288 = scmp.ne.s32.totalorder %s277, %s280
      %p289 = scmp.eq.s32.totalorder %s31, 1
      %p290 = por %p288, %p289
      %p291 = scmp.ne.s32.totalorder %s280, %s281
      %p292 = scmp.eq.s32.totalorder %s31, 0
      %p293 = por %p291, %p292
      %p294 = scmp.ne.s32.totalorder %s280, %s281
      %p295 = scmp.eq.s32.totalorder %s32, 1
      %p296 = por %p294, %p295
      %p298 = scmp.ne.s32.totalorder %s281, %s297
      %p299 = scmp.eq.s32.totalorder %s32, 0
      %p300 = por %p298, %p299
      %s301 = ssub.s32 %s34, %s41
      %p302 = scmp.eq.s32.totalorder %s301, 0
      %s304 = sadd.s32 %s303, 1
      %s305 = scalar_select %p302, %s303, %s304
      %p308 = pneg %p302
      %p309 = scmp.eq.s32.totalorder %s26, 1
      %p310 = por %p308, %p309
      %p311 = scmp.ne.s32.totalorder %s303, %s306
      %p312 = scmp.eq.s32.totalorder %s26, 0
      %p313 = por %p311, %p312
      %p314 = scmp.ne.s32.totalorder %s303, %s306
      %p315 = scmp.eq.s32.totalorder %s31, 1
      %p316 = por %p314, %p315
      %p317 = scmp.ne.s32.totalorder %s306, %s307
      %p318 = scmp.eq.s32.totalorder %s31, 0
      %p319 = por %p317, %p318
      %p320 = scmp.ne.s32.totalorder %s306, %s307
      %p321 = scmp.eq.s32.totalorder %s32, 1
      %p322 = por %p320, %p321
      %p324 = scmp.ne.s32.totalorder %s307, %s323
      %p325 = scmp.eq.s32.totalorder %s32, 0
      %p326 = por %p324, %p325
      %s327 = ssub.s32 %s34, %s41
      %p328 = scmp.eq.s32.totalorder %s327, 0
      %s330 = sadd.s32 %s329, 1
      %s331 = scalar_select %p328, %s329, %s330
      %p334 = pneg %p328
      %p335 = scmp.eq.s32.totalorder %s26, 1
      %p336 = por %p334, %p335
      %p337 = scmp.ne.s32.totalorder %s329, %s332
      %p338 = scmp.eq.s32.totalorder %s26, 0
      %p339 = por %p337, %p338
      %p340 = scmp.ne.s32.totalorder %s329, %s332
      %p341 = scmp.eq.s32.totalorder %s31, 1
      %p342 = por %p340, %p341
      %p343 = scmp.ne.s32.totalorder %s332, %s333
      %p344 = scmp.eq.s32.totalorder %s31, 0
      %p345 = por %p343, %p344
      %p346 = scmp.ne.s32.totalorder %s332, %s333
      %p347 = scmp.eq.s32.totalorder %s32, 1
      %p348 = por %p346, %p347
      %p350 = scmp.ne.s32.totalorder %s333, %s349
      %p351 = scmp.eq.s32.totalorder %s32, 0
      %p352 = por %p350, %p351
      %s353 = ssub.s32 %s34, %s41
      %p354 = scmp.eq.s32.totalorder %s353, 0
      %s356 = sadd.s32 %s355, 1
      %s357 = scalar_select %p354, %s355, %s356
      %p360 = pneg %p354
      %p361 = scmp.eq.s32.totalorder %s26, 1
      %p362 = por %p360, %p361
      %p363 = scmp.ne.s32.totalorder %s355, %s358
      %p364 = scmp.eq.s32.totalorder %s26, 0
      %p365 = por %p363, %p364
      %p366 = scmp.ne.s32.totalorder %s355, %s358
      %p367 = scmp.eq.s32.totalorder %s31, 1
      %p368 = por %p366, %p367
      %p369 = scmp.ne.s32.totalorder %s358, %s359
      %p370 = scmp.eq.s32.totalorder %s31, 0
      %p371 = por %p369, %p370
      %p372 = scmp.ne.s32.totalorder %s358, %s359
      %p373 = scmp.eq.s32.totalorder %s32, 1
      %p374 = por %p372, %p373
      %p376 = scmp.ne.s32.totalorder %s359, %s375
      %p377 = scmp.eq.s32.totalorder %s32, 0
      %p378 = por %p376, %p377
      %s379 = ssub.s32 %s34, %s41
      %p380 = scmp.eq.s32.totalorder %s379, 0
      %s382 = sadd.s32 %s381, 1
      %s383 = scalar_select %p380, %s381, %s382
      %p386 = pneg %p380
      %p387 = scmp.eq.s32.totalorder %s26, 1
      %p388 = por %p386, %p387
      %p389 = scmp.ne.s32.totalorder %s381, %s384
      %p390 = scmp.eq.s32.totalorder %s26, 0
      %p391 = por %p389, %p390
      %p392 = scmp.ne.s32.totalorder %s381, %s384
      %p393 = scmp.eq.s32.totalorder %s31, 1
      %p394 = por %p392, %p393
      %p395 = scmp.ne.s32.totalorder %s384, %s385
      %p396 = scmp.eq.s32.totalorder %s31, 0
      %p397 = por %p395, %p396
      %p398 = scmp.ne.s32.totalorder %s384, %s385
      %p399 = scmp.eq.s32.totalorder %s32, 1
      %p400 = por %p398, %p399
      %p402 = scmp.ne.s32.totalorder %s385, %s401
      %p403 = scmp.eq.s32.totalorder %s32, 0
      %p404 = por %p402, %p403
      %s406 = sadd.s32 %s405, 1
      %p409 = scmp.eq.s32.totalorder %s26, 1
      %p410 = scmp.ne.s32.totalorder %s405, %s407
      %p411 = scmp.eq.s32.totalorder %s26, 0
      %p412 = por %p410, %p411
      %p413 = scmp.ne.s32.totalorder %s405, %s407
      %p414 = scmp.eq.s32.totalorder %s31, 1
      %p415 = por %p413, %p414
      %p416 = scmp.ne.s32.totalorder %s407, %s408
      %p417 = scmp.eq.s32.totalorder %s31, 0
      %p418 = por %p416, %p417
      %p419 = scmp.ne.s32.totalorder %s407, %s408
      %p420 = scmp.eq.s32.totalorder %s32, 1
      %p421 = por %p419, %p420
      %p423 = scmp.ne.s32.totalorder %s408, %s422
      %p424 = scmp.eq.s32.totalorder %s32, 0
      %p425 = por %p423, %p424
      %s427 = sadd.s32 %s426, 1
      %p430 = scmp.eq.s32.totalorder %s26, 1
      %p431 = scmp.ne.s32.totalorder %s426, %s428
      %p432 = scmp.eq.s32.totalorder %s26, 0
      %p433 = por %p431, %p432
      %p434 = scmp.ne.s32.totalorder %s426, %s428
      %p435 = scmp.eq.s32.totalorder %s31, 1
      %p436 = por %p434, %p435
      %p437 = scmp.ne.s32.totalorder %s428, %s429
      %p438 = scmp.eq.s32.totalorder %s31, 0
      %p439 = por %p437, %p438
      %p440 = scmp.ne.s32.totalorder %s428, %s429
      %p441 = scmp.eq.s32.totalorder %s32, 1
      %p442 = por %p440, %p441
      %p444 = scmp.ne.s32.totalorder %s429, %s443
      %p445 = scmp.eq.s32.totalorder %s32, 0
      %p446 = por %p444, %p445
      %s447 = ssub.s32 %s33, %s45
      %p448 = scmp.eq.s32.totalorder %s447, 0
      %s450 = sadd.s32 %s449, 1
      %s451 = scalar_select %p448, %s449, %s450
      %p454 = pneg %p448
      %p455 = scmp.eq.s32.totalorder %s26, 1
      %p456 = por %p454, %p455
      %p457 = scmp.ne.s32.totalorder %s449, %s452
      %p458 = scmp.eq.s32.totalorder %s26, 0
      %p459 = por %p457, %p458
      %p460 = scmp.ne.s32.totalorder %s449, %s452
      %p461 = scmp.eq.s32.totalorder %s31, 1
      %p462 = por %p460, %p461
      %p463 = scmp.ne.s32.totalorder %s452, %s453
      %p464 = scmp.eq.s32.totalorder %s31, 0
      %p465 = por %p463, %p464
      %p466 = scmp.ne.s32.totalorder %s452, %s453
      %p467 = scmp.eq.s32.totalorder %s32, 1
      %p468 = por %p466, %p467
      %p470 = scmp.ne.s32.totalorder %s453, %s469
      %p471 = scmp.eq.s32.totalorder %s32, 0
      %p472 = por %p470, %p471
      %p473 = scmp.le.s32.totalorder 1, %s26
      %p474 = scmp.lt.s32.totalorder %s26, 3
      %p475 = pnand %p473, %p474
      %p476 = pneg %p475
      // Predicated region
      $region9: #{clip_forward.1} parent=5 // pred_check
        _
      $region10: #{clip_forward.1} parent=5 // pred_check_branch
        %478 = sbr.rel (%p475) target = $region12
      $region11: #{clip_forward.1} parent=5 // pred_region
        %s479 = ssub.s32 %s26, 1
        // Predicated region
        $region13: #{clip_forward.1} parent=11 // pred_check
          %p480 = pneg %p64
        $region14: #{clip_forward.1} parent=11 // pred_check_branch
          %482 = sbr.rel (%p480) target = $region16
        $region15: #{clip_forward.1} parent=11 // pred_region
          %s484 = ssub.s32 256, 256
          %485 = vsyncadd [#allocation4], %s484
          %s486 = smul.addr %s35, 2
          %s487 = smul.addr %s486, 128
          %s488 = scalar_lea.hbm %s0, %s487
          %s489 = sshll.u32 [#allocation3], 4
          %s490 = int_to_ptr.vmem [resolvable:$true] %s489
          %495 = dma.hbm_to_vmem [thread:$0]  %s488, 256, %s490, [#allocation4], 128, 128, 8
        $region16: #{clip_forward.1} parent=11 // pred_fallthru
          _
        // Predicated region
        $region17: #{clip_forward.1} parent=11 // pred_check
          %p496 = pneg %p85
        $region18: #{clip_forward.1} parent=11 // pred_check_branch
          %498 = sbr.rel (%p496) target = $region20
        $region19: #{clip_forward.1} parent=11 // pred_region
          %s500 = ssub.s32 128, 128
          %501 = vsyncadd [#allocation7], %s500
          %s503 = sshll.u32 [#allocation6], 4
          %s504 = int_to_ptr.vmem [resolvable:$true] %s503
          %506 = dma.hbm_to_vmem [thread:$0]  %s1, 128, %s504, [#allocation7]
        $region20: #{clip_forward.1} parent=11 // pred_fallthru
          _
        // Predicated region
        $region21: #{clip_forward.1} parent=11 // pred_check
          %p507 = pneg %p418
        $region22: #{clip_forward.1} parent=11 // pred_check_branch
          %509 = sbr.rel (%p507) target = $region24
        $region23: #{clip_forward.1} parent=11 // pred_region
          %s511 = ssub.s32 16, 16
          %512 = vsyncadd [#allocation7], %s511
          %s514 = sshll.u32 [#allocation20], 4
          %s515 = int_to_ptr.vmem [resolvable:$true] %s514
          %517 = dma.hbm_to_vmem [thread:$0]  %s14, 16, %s515, [#allocation7]
        $region24: #{clip_forward.1} parent=11 // pred_fallthru
          _
        // Predicated region
        $region25: #{clip_forward.1} parent=11 // pred_check
          %p518 = pneg %p439
        $region26: #{clip_forward.1} parent=11 // pred_check_branch
          %520 = sbr.rel (%p518) target = $region28
        $region27: #{clip_forward.1} parent=11 // pred_region
          %s522 = ssub.s32 16, 16
          %523 = vsyncadd [#allocation22], %s522
          %s525 = sshll.u32 [#allocation21], 4
          %s526 = int_to_ptr.vmem [resolvable:$true] %s525
          %528 = dma.hbm_to_vmem [thread:$0]  %s15, 16, %s526, [#allocation22]
        $region28: #{clip_forward.1} parent=11 // pred_fallthru
          _
      $region12: #{clip_forward.1} parent=5 // pred_fallthru
        _
      %p529 = scmp.lt.s32.totalorder %s26, 2
      // Predicated region
      $region29: #{clip_forward.1} parent=5 // pred_check
        %p530 = pneg %p529
      $region30: #{clip_forward.1} parent=5 // pred_check_branch
        %532 = sbr.rel (%p530) target = $region32
      $region31: #{clip_forward.1} parent=5 // pred_region
        // Predicated region
        $region33: #{clip_forward.1} parent=31 // pred_check
          %p533 = pneg %p105
        $region34: #{clip_forward.1} parent=31 // pred_check_branch
          %535 = sbr.rel (%p533) target = $region36
        $region35: #{clip_forward.1} parent=31 // pred_region
          %s536 = sand.u32 %s26, 1
          %s537 = scalar_lea.sflag [#allocation4], %s536
          %s538 = sand.u32 %s95, 1
          %s539 = scalar_lea.vmem [#allocation8], %s538
          %s541 = ssub.s32 16, 16
          %542 = vsyncadd %s537, %s541
          %s543 = smul.addr %s34, 16
          %s544 = scalar_lea.hbm %s2, %s543
          %s546 = sshll.u32 %s539, 4
          %s547 = int_to_ptr.vmem [resolvable:$true] %s546
          %549 = dma.hbm_to_vmem [thread:$0]  %s544, 16, %s547, %s537
        $region36: #{clip_forward.1} parent=31 // pred_fallthru
          _
        // Predicated region
        $region37: #{clip_forward.1} parent=31 // pred_check
          %p550 = pneg %p131
        $region38: #{clip_forward.1} parent=31 // pred_check_branch
          %552 = sbr.rel (%p550) target = $region40
        $region39: #{clip_forward.1} parent=31 // pred_region
          %s553 = sand.u32 %s26, 1
          %s554 = scalar_lea.sflag [#allocation4], %s553
          %s555 = sand.u32 %s121, 1
          %s556 = scalar_lea.vmem [#allocation9], %s555
          %s558 = ssub.s32 16, 16
          %559 = vsyncadd %s554, %s558
          %s560 = smul.addr %s34, 16
          %s561 = scalar_lea.hbm %s3, %s560
          %s563 = sshll.u32 %s556, 4
          %s564 = int_to_ptr.vmem [resolvable:$true] %s563
          %566 = dma.hbm_to_vmem [thread:$0]  %s561, 16, %s564, %s554
        $region40: #{clip_forward.1} parent=31 // pred_fallthru
          _
        // Predicated region
        $region41: #{clip_forward.1} parent=31 // pred_check
          %p567 = pneg %p157
        $region42: #{clip_forward.1} parent=31 // pred_check_branch
          %569 = sbr.rel (%p567) target = $region44
        $region43: #{clip_forward.1} parent=31 // pred_region
          %s570 = sand.u32 %s26, 1
          %s571 = scalar_lea.sflag [#allocation4], %s570
          %s572 = sand.u32 %s147, 1
          %s573 = smul.addr %s572, 128
          %s574 = scalar_lea.vmem [#allocation10], %s573
          %s576 = ssub.s32 2048, 2048
          %577 = vsyncadd %s571, %s576
          %s578 = smul.addr %s34, 16
          %s579 = smul.addr %s578, 128
          %s580 = scalar_lea.hbm %s4, %s579
          %s581 = sshll.u32 %s574, 4
          %s582 = int_to_ptr.vmem [resolvable:$true] %s581
          %587 = dma.hbm_to_vmem [thread:$0]  %s580, 2048, %s582, %s571, 256, 256, 16
        $region44: #{clip_forward.1} parent=31 // pred_fallthru
          _
        // Predicated region
        $region45: #{clip_forward.1} parent=31 // pred_check
          %p588 = pneg %p183
        $region46: #{clip_forward.1} parent=31 // pred_check_branch
          %590 = sbr.rel (%p588) target = $region48
        $region47: #{clip_forward.1} parent=31 // pred_region
          %s591 = sand.u32 %s26, 1
          %s592 = scalar_lea.sflag [#allocation4], %s591
          %s593 = sand.u32 %s173, 1
          %s594 = smul.addr %s593, 2
          %s595 = scalar_lea.vmem [#allocation11], %s594
          %s597 = ssub.s32 32, 32
          %598 = vsyncadd %s592, %s597
          %s599 = smul.addr %s34, 2
          %s600 = smul.addr %s599, 16
          %s601 = scalar_lea.hbm %s5, %s600
          %s603 = sshll.u32 %s595, 4
          %s604 = int_to_ptr.vmem [resolvable:$true] %s603
          %606 = dma.hbm_to_vmem [thread:$0]  %s601, 32, %s604, %s592
        $region48: #{clip_forward.1} parent=31 // pred_fallthru
          _
        // Predicated region
        $region49: #{clip_forward.1} parent=31 // pred_check
          %p607 = pneg %p209
        $region50: #{clip_forward.1} parent=31 // pred_check_branch
          %609 = sbr.rel (%p607) target = $region52
        $region51: #{clip_forward.1} parent=31 // pred_region
          %s610 = sand.u32 %s26, 1
          %s611 = scalar_lea.sflag [#allocation4], %s610
          %s612 = sand.u32 %s199, 1
          %s613 = smul.addr %s612, 64
          %s614 = scalar_lea.vmem [#allocation12], %s613
          %s616 = ssub.s32 1024, 1024
          %617 = vsyncadd %s611, %s616
          %s618 = smul.addr %s34, 8
          %s619 = smul.addr %s618, 128
          %s620 = scalar_lea.hbm %s6, %s619
          %s621 = sshll.u32 %s614, 4
          %s622 = int_to_ptr.vmem [resolvable:$true] %s621
          %627 = dma.hbm_to_vmem [thread:$0]  %s620, 1024, %s622, %s611, 128, 128, 8
        $region52: #{clip_forward.1} parent=31 // pred_fallthru
          _
        // Predicated region
        $region53: #{clip_forward.1} parent=31 // pred_check
          %p628 = pneg %p235
        $region54: #{clip_forward.1} parent=31 // pred_check_branch
          %630 = sbr.rel (%p628) target = $region56
        $region55: #{clip_forward.1} parent=31 // pred_region
          %s631 = sand.u32 %s26, 1
          %s632 = scalar_lea.sflag [#allocation4], %s631
          %s633 = sand.u32 %s225, 1
          %s634 = scalar_lea.vmem [#allocation13], %s633
          %s636 = ssub.s32 16, 16
          %637 = vsyncadd %s632, %s636
          %s638 = smul.addr %s34, 16
          %s639 = scalar_lea.hbm %s7, %s638
          %s641 = sshll.u32 %s634, 4
          %s642 = int_to_ptr.vmem [resolvable:$true] %s641
          %644 = dma.hbm_to_vmem [thread:$0]  %s639, 16, %s642, %s632
        $region56: #{clip_forward.1} parent=31 // pred_fallthru
          _
        // Predicated region
        $region57: #{clip_forward.1} parent=31 // pred_check
          %p645 = pneg %p261
        $region58: #{clip_forward.1} parent=31 // pred_check_branch
          %647 = sbr.rel (%p645) target = $region60
        $region59: #{clip_forward.1} parent=31 // pred_region
          %s648 = sand.u32 %s26, 1
          %s649 = scalar_lea.sflag [#allocation4], %s648
          %s650 = sand.u32 %s251, 1
          %s651 = scalar_lea.vmem [#allocation14], %s650
          %s653 = ssub.s32 16, 16
          %654 = vsyncadd %s649, %s653
          %s655 = smul.addr %s34, 16
          %s656 = scalar_lea.hbm %s8, %s655
          %s658 = sshll.u32 %s651, 4
          %s659 = int_to_ptr.vmem [resolvable:$true] %s658
          %661 = dma.hbm_to_vmem [thread:$0]  %s656, 16, %s659, %s649
        $region60: #{clip_forward.1} parent=31 // pred_fallthru
          _
        // Predicated region
        $region61: #{clip_forward.1} parent=31 // pred_check
          %p662 = pneg %p287
        $region62: #{clip_forward.1} parent=31 // pred_check_branch
          %664 = sbr.rel (%p662) target = $region64
        $region63: #{clip_forward.1} parent=31 // pred_region
          %s665 = sand.u32 %s26, 1
          %s666 = scalar_lea.sflag [#allocation4], %s665
          %s667 = sand.u32 %s277, 1
          %s668 = scalar_lea.vmem [#allocation15], %s667
          %s670 = ssub.s32 16, 16
          %671 = vsyncadd %s666, %s670
          %s672 = smul.addr %s34, 16
          %s673 = scalar_lea.hbm %s9, %s672
          %s675 = sshll.u32 %s668, 4
          %s676 = int_to_ptr.vmem [resolvable:$true] %s675
          %678 = dma.hbm_to_vmem [thread:$0]  %s673, 16, %s676, %s666
        $region64: #{clip_forward.1} parent=31 // pred_fallthru
          _
        // Predicated region
        $region65: #{clip_forward.1} parent=31 // pred_check
          %p679 = pneg %p313
        $region66: #{clip_forward.1} parent=31 // pred_check_branch
          %681 = sbr.rel (%p679) target = $region68
        $region67: #{clip_forward.1} parent=31 // pred_region
          %s682 = sand.u32 %s26, 1
          %s683 = scalar_lea.sflag [#allocation4], %s682
          %s684 = sand.u32 %s303, 1
          %s685 = smul.addr %s684, 128
          %s686 = scalar_lea.vmem [#allocation16], %s685
          %s688 = ssub.s32 2048, 2048
          %689 = vsyncadd %s683, %s688
          %s690 = smul.addr %s34, 16
          %s691 = smul.addr %s690, 128
          %s692 = scalar_lea.hbm %s10, %s691
          %s693 = sshll.u32 %s686, 4
          %s694 = int_to_ptr.vmem [resolvable:$true] %s693
          %699 = dma.hbm_to_vmem [thread:$0]  %s692, 2048, %s694, %s683, 256, 256, 16
        $region68: #{clip_forward.1} parent=31 // pred_fallthru
          _
        // Predicated region
        $region69: #{clip_forward.1} parent=31 // pred_check
          %p700 = pneg %p339
        $region70: #{clip_forward.1} parent=31 // pred_check_branch
          %702 = sbr.rel (%p700) target = $region72
        $region71: #{clip_forward.1} parent=31 // pred_region
          %s703 = sand.u32 %s26, 1
          %s704 = scalar_lea.sflag [#allocation4], %s703
          %s705 = sand.u32 %s329, 1
          %s706 = smul.addr %s705, 2
          %s707 = scalar_lea.vmem [#allocation17], %s706
          %s709 = ssub.s32 32, 32
          %710 = vsyncadd %s704, %s709
          %s711 = smul.addr %s34, 2
          %s712 = smul.addr %s711, 16
          %s713 = scalar_lea.hbm %s11, %s712
          %s715 = sshll.u32 %s707, 4
          %s716 = int_to_ptr.vmem [resolvable:$true] %s715
          %718 = dma.hbm_to_vmem [thread:$0]  %s713, 32, %s716, %s704
        $region72: #{clip_forward.1} parent=31 // pred_fallthru
          _
        // Predicated region
        $region73: #{clip_forward.1} parent=31 // pred_check
          %p719 = pneg %p365
        $region74: #{clip_forward.1} parent=31 // pred_check_branch
          %721 = sbr.rel (%p719) target = $region76
        $region75: #{clip_forward.1} parent=31 // pred_region
          %s722 = sand.u32 %s26, 1
          %s723 = scalar_lea.sflag [#allocation4], %s722
          %s724 = sand.u32 %s355, 1
          %s725 = smul.addr %s724, 256
          %s726 = scalar_lea.vmem [#allocation18], %s725
          %s728 = ssub.s32 4096, 4096
          %729 = vsyncadd %s723, %s728
          %s730 = smul.addr %s34, 32
          %s731 = smul.addr %s730, 128
          %s732 = scalar_lea.hbm %s12, %s731
          %s733 = sshll.u32 %s726, 4
          %s734 = int_to_ptr.vmem [resolvable:$true] %s733
          %739 = dma.hbm_to_vmem [thread:$0]  %s732, 4096, %s734, %s723, 128, 128, 8
        $region76: #{clip_forward.1} parent=31 // pred_fallthru
          _
        // Predicated region
        $region77: #{clip_forward.1} parent=31 // pred_check
          %p740 = pneg %p391
        $region78: #{clip_forward.1} parent=31 // pred_check_branch
          %742 = sbr.rel (%p740) target = $region80
        $region79: #{clip_forward.1} parent=31 // pred_region
          %s743 = sand.u32 %s26, 1
          %s744 = scalar_lea.sflag [#allocation4], %s743
          %s745 = sand.u32 %s381, 1
          %s746 = scalar_lea.vmem [#allocation19], %s745
          %s748 = ssub.s32 16, 16
          %749 = vsyncadd %s744, %s748
          %s750 = smul.addr %s34, 16
          %s751 = scalar_lea.hbm %s13, %s750
          %s753 = sshll.u32 %s746, 4
          %s754 = int_to_ptr.vmem [resolvable:$true] %s753
          %756 = dma.hbm_to_vmem [thread:$0]  %s751, 16, %s754, %s744
        $region80: #{clip_forward.1} parent=31 // pred_fallthru
          _
      $region32: #{clip_forward.1} parent=5 // pred_fallthru
        _
      %p757 = scmp.le.s32.totalorder 1, %s26
      %p758 = scmp.lt.s32.totalorder %s26, 3
      %p759 = pnand %p757, %p758
      %p760 = pneg %p759
      // Predicated region
      $region81: #{clip_forward.1} parent=5 // pred_check
        _
      $region82: #{clip_forward.1} parent=5 // pred_check_branch
        %762 = sbr.rel (%p759) target = $region84
      $region83: #{clip_forward.1} parent=5 // pred_region
        %s763 = ssub.s32 %s26, 1
        // Predicated region
        $region85: #{clip_forward.1} parent=83 // pred_check
          %p764 = pneg %p64
        $region86: #{clip_forward.1} parent=83 // pred_check_branch
          %766 = sbr.rel (%p764) target = $region88
        $region87: #{clip_forward.1} parent=83 // pred_region
          %767 = dma.done [#allocation4], 256
        $region88: #{clip_forward.1} parent=83 // pred_fallthru
          _
        // Predicated region
        $region89: #{clip_forward.1} parent=83 // pred_check
          %p768 = pneg %p85
        $region90: #{clip_forward.1} parent=83 // pred_check_branch
          %770 = sbr.rel (%p768) target = $region92
        $region91: #{clip_forward.1} parent=83 // pred_region
          %771 = dma.done [#allocation7], 128
        $region92: #{clip_forward.1} parent=83 // pred_fallthru
          _
        %s772 = sand.u32 %s31, 1
        %s773 = scalar_lea.sflag [#allocation4], %s772
        %s774 = sand.u32 %s98, 1
        %s775 = scalar_lea.vmem [#allocation8], %s774
        // Predicated region
        $region93: #{clip_forward.1} parent=83 // pred_check
          %p776 = pneg %p111
        $region94: #{clip_forward.1} parent=83 // pred_check_branch
          %778 = sbr.rel (%p776) target = $region96
        $region95: #{clip_forward.1} parent=83 // pred_region
          %779 = dma.done %s773, 16
        $region96: #{clip_forward.1} parent=83 // pred_fallthru
          _
        %s780 = sand.u32 %s31, 1
        %s781 = scalar_lea.sflag [#allocation4], %s780
        %s782 = sand.u32 %s124, 1
        %s783 = scalar_lea.vmem [#allocation9], %s782
        // Predicated region
        $region97: #{clip_forward.1} parent=83 // pred_check
          %p784 = pneg %p137
        $region98: #{clip_forward.1} parent=83 // pred_check_branch
          %786 = sbr.rel (%p784) target = $region100
        $region99: #{clip_forward.1} parent=83 // pred_region
          %787 = dma.done %s781, 16
        $region100: #{clip_forward.1} parent=83 // pred_fallthru
          _
        %s788 = sand.u32 %s31, 1
        %s789 = scalar_lea.sflag [#allocation4], %s788
        %s790 = sand.u32 %s150, 1
        %s791 = smul.addr %s790, 128
        %s792 = scalar_lea.vmem [#allocation10], %s791
        // Predicated region
        $region101: #{clip_forward.1} parent=83 // pred_check
          %p793 = pneg %p163
        $region102: #{clip_forward.1} parent=83 // pred_check_branch
          %795 = sbr.rel (%p793) target = $region104
        $region103: #{clip_forward.1} parent=83 // pred_region
          %796 = dma.done %s789, 2048
        $region104: #{clip_forward.1} parent=83 // pred_fallthru
          _
        %s797 = sand.u32 %s31, 1
        %s798 = scalar_lea.sflag [#allocation4], %s797
        %s799 = sand.u32 %s176, 1
        %s800 = smul.addr %s799, 2
        %s801 = scalar_lea.vmem [#allocation11], %s800
        // Predicated region
        $region105: #{clip_forward.1} parent=83 // pred_check
          %p802 = pneg %p189
        $region106: #{clip_forward.1} parent=83 // pred_check_branch
          %804 = sbr.rel (%p802) target = $region108
        $region107: #{clip_forward.1} parent=83 // pred_region
          %805 = dma.done %s798, 32
        $region108: #{clip_forward.1} parent=83 // pred_fallthru
          _
        %s806 = sand.u32 %s31, 1
        %s807 = scalar_lea.sflag [#allocation4], %s806
        %s808 = sand.u32 %s202, 1
        %s809 = smul.addr %s808, 64
        %s810 = scalar_lea.vmem [#allocation12], %s809
        // Predicated region
        $region109: #{clip_forward.1} parent=83 // pred_check
          %p811 = pneg %p215
        $region110: #{clip_forward.1} parent=83 // pred_check_branch
          %813 = sbr.rel (%p811) target = $region112
        $region111: #{clip_forward.1} parent=83 // pred_region
          %814 = dma.done %s807, 1024
        $region112: #{clip_forward.1} parent=83 // pred_fallthru
          _
        %s815 = sand.u32 %s31, 1
        %s816 = scalar_lea.sflag [#allocation4], %s815
        %s817 = sand.u32 %s228, 1
        %s818 = scalar_lea.vmem [#allocation13], %s817
        // Predicated region
        $region113: #{clip_forward.1} parent=83 // pred_check
          %p819 = pneg %p241
        $region114: #{clip_forward.1} parent=83 // pred_check_branch
          %821 = sbr.rel (%p819) target = $region116
        $region115: #{clip_forward.1} parent=83 // pred_region
          %822 = dma.done %s816, 16
        $region116: #{clip_forward.1} parent=83 // pred_fallthru
          _
        %s823 = sand.u32 %s31, 1
        %s824 = scalar_lea.sflag [#allocation4], %s823
        %s825 = sand.u32 %s254, 1
        %s826 = scalar_lea.vmem [#allocation14], %s825
        // Predicated region
        $region117: #{clip_forward.1} parent=83 // pred_check
          %p827 = pneg %p267
        $region118: #{clip_forward.1} parent=83 // pred_check_branch
          %829 = sbr.rel (%p827) target = $region120
        $region119: #{clip_forward.1} parent=83 // pred_region
          %830 = dma.done %s824, 16
        $region120: #{clip_forward.1} parent=83 // pred_fallthru
          _
        %s831 = sand.u32 %s31, 1
        %s832 = scalar_lea.sflag [#allocation4], %s831
        %s833 = sand.u32 %s280, 1
        %s834 = scalar_lea.vmem [#allocation15], %s833
        // Predicated region
        $region121: #{clip_forward.1} parent=83 // pred_check
          %p835 = pneg %p293
        $region122: #{clip_forward.1} parent=83 // pred_check_branch
          %837 = sbr.rel (%p835) target = $region124
        $region123: #{clip_forward.1} parent=83 // pred_region
          %838 = dma.done %s832, 16
        $region124: #{clip_forward.1} parent=83 // pred_fallthru
          _
        %s839 = sand.u32 %s31, 1
        %s840 = scalar_lea.sflag [#allocation4], %s839
        %s841 = sand.u32 %s306, 1
        %s842 = smul.addr %s841, 128
        %s843 = scalar_lea.vmem [#allocation16], %s842
        // Predicated region
        $region125: #{clip_forward.1} parent=83 // pred_check
          %p844 = pneg %p319
        $region126: #{clip_forward.1} parent=83 // pred_check_branch
          %846 = sbr.rel (%p844) target = $region128
        $region127: #{clip_forward.1} parent=83 // pred_region
          %847 = dma.done %s840, 2048
        $region128: #{clip_forward.1} parent=83 // pred_fallthru
          _
        %s848 = sand.u32 %s31, 1
        %s849 = scalar_lea.sflag [#allocation4], %s848
        %s850 = sand.u32 %s332, 1
        %s851 = smul.addr %s850, 2
        %s852 = scalar_lea.vmem [#allocation17], %s851
        // Predicated region
        $region129: #{clip_forward.1} parent=83 // pred_check
          %p853 = pneg %p345
        $region130: #{clip_forward.1} parent=83 // pred_check_branch
          %855 = sbr.rel (%p853) target = $region132
        $region131: #{clip_forward.1} parent=83 // pred_region
          %856 = dma.done %s849, 32
        $region132: #{clip_forward.1} parent=83 // pred_fallthru
          _
        %s857 = sand.u32 %s31, 1
        %s858 = scalar_lea.sflag [#allocation4], %s857
        %s859 = sand.u32 %s358, 1
        %s860 = smul.addr %s859, 256
        %s861 = scalar_lea.vmem [#allocation18], %s860
        // Predicated region
        $region133: #{clip_forward.1} parent=83 // pred_check
          %p862 = pneg %p371
        $region134: #{clip_forward.1} parent=83 // pred_check_branch
          %864 = sbr.rel (%p862) target = $region136
        $region135: #{clip_forward.1} parent=83 // pred_region
          %865 = dma.done %s858, 4096
        $region136: #{clip_forward.1} parent=83 // pred_fallthru
          _
        %s866 = sand.u32 %s31, 1
        %s867 = scalar_lea.sflag [#allocation4], %s866
        %s868 = sand.u32 %s384, 1
        %s869 = scalar_lea.vmem [#allocation19], %s868
        // Predicated region
        $region137: #{clip_forward.1} parent=83 // pred_check
          %p870 = pneg %p397
        $region138: #{clip_forward.1} parent=83 // pred_check_branch
          %872 = sbr.rel (%p870) target = $region140
        $region139: #{clip_forward.1} parent=83 // pred_region
          %873 = dma.done %s867, 16
        $region140: #{clip_forward.1} parent=83 // pred_fallthru
          _
        // Predicated region
        $region141: #{clip_forward.1} parent=83 // pred_check
          %p874 = pneg %p418
        $region142: #{clip_forward.1} parent=83 // pred_check_branch
          %876 = sbr.rel (%p874) target = $region144
        $region143: #{clip_forward.1} parent=83 // pred_region
          %877 = dma.done [#allocation7], 16
        $region144: #{clip_forward.1} parent=83 // pred_fallthru
          _
        // Predicated region
        $region145: #{clip_forward.1} parent=83 // pred_check
          %p878 = pneg %p439
        $region146: #{clip_forward.1} parent=83 // pred_check_branch
          %880 = sbr.rel (%p878) target = $region148
        $region147: #{clip_forward.1} parent=83 // pred_region
          %881 = dma.done [#allocation22], 16
        $region148: #{clip_forward.1} parent=83 // pred_fallthru
          _
        %p882 = pneg %p64
        %p883 = pneg %p61
        %p884 = pneg %p85
        %p885 = pneg %p82
        %s886 = sand.u32 %s31, 1
        %s887 = scalar_lea.sflag [#allocation4], %s886
        %s888 = sand.u32 %s98, 1
        %s889 = scalar_lea.vmem [#allocation8], %s888
        %p890 = pneg %p111
        %p891 = pneg %p108
        %s892 = sand.u32 %s31, 1
        %s893 = scalar_lea.sflag [#allocation4], %s892
        %s894 = sand.u32 %s124, 1
        %s895 = scalar_lea.vmem [#allocation9], %s894
        %p896 = pneg %p137
        %p897 = pneg %p134
        %s898 = sand.u32 %s31, 1
        %s899 = scalar_lea.sflag [#allocation4], %s898
        %s900 = sand.u32 %s150, 1
        %s901 = smul.addr %s900, 128
        %s902 = scalar_lea.vmem [#allocation10], %s901
        %p903 = pneg %p163
        %p904 = pneg %p160
        %s905 = sand.u32 %s31, 1
        %s906 = scalar_lea.sflag [#allocation4], %s905
        %s907 = sand.u32 %s176, 1
        %s908 = smul.addr %s907, 2
        %s909 = scalar_lea.vmem [#allocation11], %s908
        %p910 = pneg %p189
        %p911 = pneg %p186
        %s912 = sand.u32 %s31, 1
        %s913 = scalar_lea.sflag [#allocation4], %s912
        %s914 = sand.u32 %s202, 1
        %s915 = smul.addr %s914, 64
        %s916 = scalar_lea.vmem [#allocation12], %s915
        %p917 = pneg %p215
        %p918 = pneg %p212
        %s919 = sand.u32 %s31, 1
        %s920 = scalar_lea.sflag [#allocation4], %s919
        %s921 = sand.u32 %s228, 1
        %s922 = scalar_lea.vmem [#allocation13], %s921
        %p923 = pneg %p241
        %p924 = pneg %p238
        %s925 = sand.u32 %s31, 1
        %s926 = scalar_lea.sflag [#allocation4], %s925
        %s927 = sand.u32 %s254, 1
        %s928 = scalar_lea.vmem [#allocation14], %s927
        %p929 = pneg %p267
        %p930 = pneg %p264
        %s931 = sand.u32 %s31, 1
        %s932 = scalar_lea.sflag [#allocation4], %s931
        %s933 = sand.u32 %s280, 1
        %s934 = scalar_lea.vmem [#allocation15], %s933
        %p935 = pneg %p293
        %p936 = pneg %p290
        %s937 = sand.u32 %s31, 1
        %s938 = scalar_lea.sflag [#allocation4], %s937
        %s939 = sand.u32 %s306, 1
        %s940 = smul.addr %s939, 128
        %s941 = scalar_lea.vmem [#allocation16], %s940
        %p942 = pneg %p319
        %p943 = pneg %p316
        %s944 = sand.u32 %s31, 1
        %s945 = scalar_lea.sflag [#allocation4], %s944
        %s946 = sand.u32 %s332, 1
        %s947 = smul.addr %s946, 2
        %s948 = scalar_lea.vmem [#allocation17], %s947
        %p949 = pneg %p345
        %p950 = pneg %p342
        %s951 = sand.u32 %s31, 1
        %s952 = scalar_lea.sflag [#allocation4], %s951
        %s953 = sand.u32 %s358, 1
        %s954 = smul.addr %s953, 256
        %s955 = scalar_lea.vmem [#allocation18], %s954
        %p956 = pneg %p371
        %p957 = pneg %p368
        %s958 = sand.u32 %s31, 1
        %s959 = scalar_lea.sflag [#allocation4], %s958
        %s960 = sand.u32 %s384, 1
        %s961 = scalar_lea.vmem [#allocation19], %s960
        %p962 = pneg %p397
        %p963 = pneg %p394
        %p964 = pneg %p418
        %p965 = pneg %p415
        %p966 = pneg %p439
        %p967 = pneg %p436
        %p968 = pneg %p465
        %p969 = pneg %p462
        %p970 = scmp.eq.s32.totalorder %s36, 0
        // Predicated region
        $region149: #{clip_forward.1} parent=83 // pred_check
          %p971 = pneg %p970
        $region150: #{clip_forward.1} parent=83 // pred_check_branch
          %973 = sbr.rel (%p971) target = $region152
        $region151: #{clip_forward.1} parent=83 // pred_region
          %v974 = vld [vmem:[#allocation3] sm:$0xff]
          %v975 = vld [vmem:[#allocation3 + $0x8] sm:$0xff]
          %vm976 = vcmask 523264
          %977 = vst.msk [vmem:[#allocation2] sm:$0xff] %vm976, %v974
          %978 = vst.msk [vmem:[#allocation2 + $0x8] sm:$0xff] %vm976, %v975
        $region152: #{clip_forward.1} parent=83 // pred_fallthru
          _
        %v979 = vld [vmem:[#allocation2] sm:$0xff]
        %v980 = vld [vmem:[#allocation2 + $0x8] sm:$0xff]
        %v981 = vld [vmem:[%s775] sm:$0x1]
        %v982 = vld [vmem:[%s783] sm:$0x1]
        %vm983 = vcmask 523264
        %v984 = vsel %vm983, %v979, 0.0
        %985 = vadd.xlane.f32.xlu0 %v984
        %v986 = vpop.xlane.xlu0 %985
        %v987 = vsel %vm983, %v980, 0.0
        %988 = vadd.xlane.f32.xlu0 %v987
        %v989 = vpop.xlane.xlu0 %988
        %v990 = vrcp.pop 64.0
        %v991 = vmul.f32 %v986, %v990
        %v992 = vmul.f32 %v989, %v990
        %v993 = vsub.f32 %v979, %v991
        %v994 = vsub.f32 %v980, %v992
        %v995 = vmul.f32 %v993, %v993
        %v996 = vmul.f32 %v994, %v994
        %v997 = vsel %vm983, %v995, 0.0
        %998 = vadd.xlane.f32.xlu0 %v997
        %v999 = vpop.xlane.xlu0 %998
        %v1000 = vsel %vm983, %v996, 0.0
        %1001 = vadd.xlane.f32.xlu0 %v1000
        %v1002 = vpop.xlane.xlu0 %1001
        %v1003 = vmul.f32 %v999, %v990
        %v1004 = vmul.f32 %v1002, %v990
        %v1005 = vadd.f32 %v1003, 1e-05
        %v1006 = vadd.f32 %v1004, 1e-05
        %v1007 = vrsqrt.pop %v1005
        %v1008 = vrsqrt.pop %v1006
        %v1009 = vmul.f32 %v993, %v1007
        %v1010 = vmul.f32 %v994, %v1008
        %v1012 = vlaneseq
        %v1013 = vshrl.u32 %v1012, 7
        %v1014 = vsub.s32 0, %v1013
        %v1015 = vrot.slane %v981, %v1014
        %v1017 = vmul.f32 %v1009, %v1015
        %v1018 = vmul.f32 %v1010, %v1015
        %v1020 = vlaneseq
        %v1021 = vshrl.u32 %v1020, 7
        %v1022 = vsub.s32 0, %v1021
        %v1023 = vrot.slane %v982, %v1022
        %v1025 = vadd.f32 %v1017, %v1023
        %v1026 = vadd.f32 %v1018, %v1023
        %v1027 = vld [vmem:[%s792] sm:$0xff]
        %v1028 = vld [vmem:[%s792 + $0x8] sm:$0xff]
        %v1029 = vld [vmem:[%s792 + $0x10] sm:$0xff]
        %v1030 = vld [vmem:[%s792 + $0x18] sm:$0xff]
        %v1031 = vld [vmem:[%s792 + $0x20] sm:$0xff]
        %v1032 = vld [vmem:[%s792 + $0x28] sm:$0xff]
        %v1033 = vld [vmem:[%s792 + $0x30] sm:$0xff]
        %v1034 = vld [vmem:[%s792 + $0x38] sm:$0xff]
        %v1035 = vld [vmem:[%s792 + $0x40] sm:$0xff]
        %v1036 = vld [vmem:[%s792 + $0x48] sm:$0xff]
        %v1037 = vld [vmem:[%s792 + $0x50] sm:$0xff]
        %v1038 = vld [vmem:[%s792 + $0x58] sm:$0xff]
        %v1039 = vld [vmem:[%s792 + $0x60] sm:$0xff]
        %v1040 = vld [vmem:[%s792 + $0x68] sm:$0xff]
        %v1041 = vld [vmem:[%s792 + $0x70] sm:$0xff]
        %v1042 = vld [vmem:[%s792 + $0x78] sm:$0xff]
        %v1043 = vld [vmem:[%s801] sm:$0x3]
        %v1045 = vlaneseq
        %v1046 = vshrl.u32 %v1045, 7
        %v1047 = vsub.s32 0, %v1046
        %v1048 = vrot.slane %v1043, %v1047
        %v1049 = vlaneseq
        %v1050 = vshrl.u32 %v1049, 7
        %v1051 = vsub.s32 1, %v1050
        %v1052 = vrot.slane %v1043, %v1051
        %v1056 = vsel %vm983, %v1025, 0
        %v1059 = vsel %vm983, %v1026, 0
        %1061 = vmatprep.subr.mxu0 %v1028
        %1062 = vmatpush1.msra.mxu0 %v1027
        %1063 = vmatprep.subr.mxu0 %v1030
        %1064 = vmatpush1.msra.mxu0 %v1029
        %1065 = vmatprep.subr.mxu0 %v1032
        %1066 = vmatpush1.msra.mxu0 %v1031
        %1067 = vmatprep.subr.mxu0 %v1034
        %1068 = vmatpush1.msra.mxu0 %v1033
        %1069 = vmatprep.subr.mxu0 %v1036
        %1070 = vmatpush1.msra.mxu0 %v1035
        %1071 = vmatprep.subr.mxu0 %v1038
        %1072 = vmatpush1.msra.mxu0 %v1037
        %1073 = vmatprep.subr.mxu0 %v1040
        %1074 = vmatpush1.msra.mxu0 %v1039
        %1075 = vmatprep.subr.mxu0 %v1042
        %1076 = vmatpush1.msra.mxu0 %v1041
        %1077 = vmatprep.subr.mxu0 0.0
        %1078 = vmatpush1.msra.mxu0 0.0
        %1079 = vmatprep.subr.mxu0 0.0
        %1080 = vmatpush1.msra.mxu0 0.0
        %1081 = vmatprep.subr.mxu0 0.0
        %1082 = vmatpush1.msra.mxu0 0.0
        %1083 = vmatprep.subr.mxu0 0.0
        %1084 = vmatpush1.msra.mxu0 0.0
        %1085 = vmatprep.subr.mxu0 0.0
        %1086 = vmatpush1.msra.mxu0 0.0
        %1087 = vmatprep.subr.mxu0 0.0
        %1088 = vmatpush1.msra.mxu0 0.0
        %1089 = vmatprep.subr.mxu0 0.0
        %1090 = vmatpush1.msra.mxu0 0.0
        %1091 = vmatprep.subr.mxu0 0.0
        %1092 = vmatpush1.msra.mxu0 0.0
        %1093 = vmatprep.subr.mxu0 0.0
        %1094 = vmatpush1.msra.mxu0 0.0
        %1095 = vmatprep.subr.mxu0 0.0
        %1096 = vmatpush1.msra.mxu0 0.0
        %1097 = vmatprep.subr.mxu0 0.0
        %1098 = vmatpush1.msra.mxu0 0.0
        %1099 = vmatprep.subr.mxu0 0.0
        %1100 = vmatpush1.msra.mxu0 0.0
        %1101 = vmatprep.subr.mxu0 0.0
        %1102 = vmatpush1.msra.mxu0 0.0
        %1103 = vmatprep.subr.mxu0 0.0
        %1104 = vmatpush1.msra.mxu0 0.0
        %1105 = vmatprep.subr.mxu0 0.0
        %1106 = vmatpush1.msra.mxu0 0.0
        %1107 = vmatprep.subr.mxu0 0.0
        %1108 = vmatpush1.msra.mxu0 0.0
        %1109 = vmatprep.subr.mxu0 0.0
        %1110 = vmatpush1.msra.mxu0 0.0
        %1111 = vmatprep.subr.mxu0 0.0
        %1112 = vmatpush1.msra.mxu0 0.0
        %1113 = vmatprep.subr.mxu0 0.0
        %1114 = vmatpush1.msra.mxu0 0.0
        %1115 = vmatprep.subr.mxu0 0.0
        %1116 = vmatpush1.msra.mxu0 0.0
        %1117 = vmatprep.subr.mxu0 0.0
        %1118 = vmatpush1.msra.mxu0 0.0
        %1119 = vmatprep.subr.mxu0 0.0
        %1120 = vmatpush1.msra.mxu0 0.0
        %1121 = vmatprep.subr.mxu0 0.0
        %1122 = vmatpush1.msra.mxu0 0.0
        %1123 = vmatprep.subr.mxu0 0.0
        %1124 = vmatpush1.msra.mxu0 0.0
        %1125 = vmatprep.mubr.f32.mxu0 0.0
        %1126 = vmatmul.mubr.f32.gmra.mrb[0].mxu0 %v1056
        %v1127 = vpop.f32.mrb[0].mxu0
        %v1128 = vadd.f32 %v1048, %v1127
        %v1129 = vpop.f32.mrb[0].mxu0
        %v1130 = vadd.f32 %v1052, %v1129
        %1131 = vmatprep.mubr.f32.mxu0 0.0
        %1132 = vmatmul.mubr.f32.gmra.mrb[0].mxu0 %v1059
        %v1133 = vpop.f32.mrb[0].mxu0
        %v1134 = vadd.f32 %v1048, %v1133
        %v1135 = vpop.f32.mrb[0].mxu0
        %v1136 = vadd.f32 %v1052, %v1135
        %1137 = vdwg.mxu0
        %1140 = vrot.lane.b32.xlu0 %v1128, 112
        %v1141 = vpop.permute.xlu0 %1140
        %1142 = vrot.lane.b32.xlu0 %v1134, 112
        %v1143 = vpop.permute.xlu0 %1142
        %1146 = vrot.lane.b32.xlu0 %v1128, 96
        %v1147 = vpop.permute.xlu0 %1146
        %1148 = vrot.lane.b32.xlu0 %v1134, 96
        %v1149 = vpop.permute.xlu0 %1148
        %1152 = vrot.lane.b32.xlu0 %v1128, 80
        %v1153 = vpop.permute.xlu0 %1152
        %1154 = vrot.lane.b32.xlu0 %v1134, 80
        %v1155 = vpop.permute.xlu0 %1154
        %v1158 = vcombine.low %v1128, %v1147
        %v1159 = vcombine.high %v1128, %v1147
        %v1161 = vunpack.c.l.s4 1983009808
        %v1162 = vunpack.c.0.s8 %v1161
        %v1163 = vlaneseq
        %v1164 = vshrl.u32 %v1163, 7
        %v1165 = vsub.s32 %v1162, %v1164
        %v1166 = vrot.slane %v1158, %v1165
        %v1168 = vunpack.c.l.s4 1983009808
        %v1169 = vunpack.c.0.s8 %v1168
        %v1170 = vlaneseq
        %v1171 = vshrl.u32 %v1170, 7
        %v1172 = vsub.s32 %v1169, %v1171
        %v1173 = vrot.slane %v1159, %v1172
        %v1174 = vcombine.low %v1141, %v1153
        %v1175 = vcombine.high %v1141, %v1153
        %v1177 = vunpack.c.l.s4 1983009808
        %v1178 = vunpack.c.0.s8 %v1177
        %v1179 = vlaneseq
        %v1180 = vshrl.u32 %v1179, 7
        %v1181 = vsub.s32 %v1178, %v1180
        %v1182 = vrot.slane %v1174, %v1181
        %v1184 = vunpack.c.l.s4 1983009808
        %v1185 = vunpack.c.0.s8 %v1184
        %v1186 = vlaneseq
        %v1187 = vshrl.u32 %v1186, 7
        %v1188 = vsub.s32 %v1185, %v1187
        %v1189 = vrot.slane %v1175, %v1188
        %v1190 = vcombine.low %v1166, %v1182
        %v1191 = vcombine.high %v1166, %v1182
        %v1193 = vunpack.c.l.s4 1934713408
        %v1194 = vunpack.c.0.s8 %v1193
        %v1195 = vlaneseq
        %v1196 = vshrl.u32 %v1195, 7
        %v1197 = vsub.s32 %v1194, %v1196
        %v1198 = vrot.slane %v1190, %v1197
        %v1200 = vunpack.c.l.s4 1934713408
        %v1201 = vunpack.c.0.s8 %v1200
        %v1202 = vlaneseq
        %v1203 = vshrl.u32 %v1202, 7
        %v1204 = vsub.s32 %v1201, %v1203
        %v1205 = vrot.slane %v1191, %v1204
        %v1206 = vcombine.low %v1173, %v1189
        %v1207 = vcombine.high %v1173, %v1189
        %v1209 = vunpack.c.l.s4 1934713408
        %v1210 = vunpack.c.0.s8 %v1209
        %v1211 = vlaneseq
        %v1212 = vshrl.u32 %v1211, 7
        %v1213 = vsub.s32 %v1210, %v1212
        %v1214 = vrot.slane %v1206, %v1213
        %v1216 = vunpack.c.l.s4 1934713408
        %v1217 = vunpack.c.0.s8 %v1216
        %v1218 = vlaneseq
        %v1219 = vshrl.u32 %v1218, 7
        %v1220 = vsub.s32 %v1217, %v1219
        %v1221 = vrot.slane %v1207, %v1220
        %v1222 = vcombine.high %v1198, 0.0
        %v1223 = vcombine.high %v1205, 0.0
        %v1224 = vcombine.high %v1214, 0.0
        %v1225 = vcombine.high %v1221, 0.0
        %v1226 = vcombine.low %v1134, %v1149
        %v1227 = vcombine.high %v1134, %v1149
        %v1229 = vunpack.c.l.s4 1983009808
        %v1230 = vunpack.c.0.s8 %v1229
        %v1231 = vlaneseq
        %v1232 = vshrl.u32 %v1231, 7
        %v1233 = vsub.s32 %v1230, %v1232
        %v1234 = vrot.slane %v1226, %v1233
        %v1236 = vunpack.c.l.s4 1983009808
        %v1237 = vunpack.c.0.s8 %v1236
        %v1238 = vlaneseq
        %v1239 = vshrl.u32 %v1238, 7
        %v1240 = vsub.s32 %v1237, %v1239
        %v1241 = vrot.slane %v1227, %v1240
        %v1242 = vcombine.low %v1143, %v1155
        %v1243 = vcombine.high %v1143, %v1155
        %v1245 = vunpack.c.l.s4 1983009808
        %v1246 = vunpack.c.0.s8 %v1245
        %v1247 = vlaneseq
        %v1248 = vshrl.u32 %v1247, 7
        %v1249 = vsub.s32 %v1246, %v1248
        %v1250 = vrot.slane %v1242, %v1249
        %v1252 = vunpack.c.l.s4 1983009808
        %v1253 = vunpack.c.0.s8 %v1252
        %v1254 = vlaneseq
        %v1255 = vshrl.u32 %v1254, 7
        %v1256 = vsub.s32 %v1253, %v1255
        %v1257 = vrot.slane %v1243, %v1256
        %v1258 = vcombine.low %v1234, %v1250
        %v1259 = vcombine.high %v1234, %v1250
        %v1261 = vunpack.c.l.s4 1934713408
        %v1262 = vunpack.c.0.s8 %v1261
        %v1263 = vlaneseq
        %v1264 = vshrl.u32 %v1263, 7
        %v1265 = vsub.s32 %v1262, %v1264
        %v1266 = vrot.slane %v1258, %v1265
        %v1268 = vunpack.c.l.s4 1934713408
        %v1269 = vunpack.c.0.s8 %v1268
        %v1270 = vlaneseq
        %v1271 = vshrl.u32 %v1270, 7
        %v1272 = vsub.s32 %v1269, %v1271
        %v1273 = vrot.slane %v1259, %v1272
        %v1274 = vcombine.low %v1241, %v1257
        %v1275 = vcombine.high %v1241, %v1257
        %v1277 = vunpack.c.l.s4 1934713408
        %v1278 = vunpack.c.0.s8 %v1277
        %v1279 = vlaneseq
        %v1280 = vshrl.u32 %v1279, 7
        %v1281 = vsub.s32 %v1278, %v1280
        %v1282 = vrot.slane %v1274, %v1281
        %v1284 = vunpack.c.l.s4 1934713408
        %v1285 = vunpack.c.0.s8 %v1284
        %v1286 = vlaneseq
        %v1287 = vshrl.u32 %v1286, 7
        %v1288 = vsub.s32 %v1285, %v1287
        %v1289 = vrot.slane %v1275, %v1288
        %v1290 = vcombine.high %v1266, 0.0
        %v1291 = vcombine.high %v1273, 0.0
        %v1292 = vcombine.high %v1282, 0.0
        %v1293 = vcombine.high %v1289, 0.0
        %v1294 = vcombine.low %v1198, %v1205
        %v1296 = vunpack.c.l.s4 1983009808
        %v1297 = vunpack.c.0.s8 %v1296
        %v1298 = vlaneseq
        %v1299 = vshrl.u32 %v1298, 7
        %v1300 = vsub.s32 %v1297, %v1299
        %v1301 = vrot.slane %v1294, %v1300
        %v1302 = vcombine.low %v1222, %v1223
        %v1304 = vunpack.c.l.s4 1983009808
        %v1305 = vunpack.c.0.s8 %v1304
        %v1306 = vlaneseq
        %v1307 = vshrl.u32 %v1306, 7
        %v1308 = vsub.s32 %v1305, %v1307
        %v1309 = vrot.slane %v1302, %v1308
        %v1310 = vcombine.low %v1214, %v1221
        %v1312 = vunpack.c.l.s4 1983009808
        %v1313 = vunpack.c.0.s8 %v1312
        %v1314 = vlaneseq
        %v1315 = vshrl.u32 %v1314, 7
        %v1316 = vsub.s32 %v1313, %v1315
        %v1317 = vrot.slane %v1310, %v1316
        %v1318 = vcombine.low %v1224, %v1225
        %v1320 = vunpack.c.l.s4 1983009808
        %v1321 = vunpack.c.0.s8 %v1320
        %v1322 = vlaneseq
        %v1323 = vshrl.u32 %v1322, 7
        %v1324 = vsub.s32 %v1321, %v1323
        %v1325 = vrot.slane %v1318, %v1324
        %v1326 = vcombine.low %v1301, %v1309
        %v1327 = vcombine.high %v1301, %v1309
        %v1329 = vunpack.c.l.s4 1934713408
        %v1330 = vunpack.c.0.s8 %v1329
        %v1331 = vlaneseq
        %v1332 = vshrl.u32 %v1331, 7
        %v1333 = vsub.s32 %v1330, %v1332
        %v1334 = vrot.slane %v1326, %v1333
        %v1336 = vunpack.c.l.s4 1934713408
        %v1337 = vunpack.c.0.s8 %v1336
        %v1338 = vlaneseq
        %v1339 = vshrl.u32 %v1338, 7
        %v1340 = vsub.s32 %v1337, %v1339
        %v1341 = vrot.slane %v1327, %v1340
        %v1342 = vcombine.low %v1317, %v1325
        %v1343 = vcombine.high %v1317, %v1325
        %v1345 = vunpack.c.l.s4 1934713408
        %v1346 = vunpack.c.0.s8 %v1345
        %v1347 = vlaneseq
        %v1348 = vshrl.u32 %v1347, 7
        %v1349 = vsub.s32 %v1346, %v1348
        %v1350 = vrot.slane %v1342, %v1349
        %v1352 = vunpack.c.l.s4 1934713408
        %v1353 = vunpack.c.0.s8 %v1352
        %v1354 = vlaneseq
        %v1355 = vshrl.u32 %v1354, 7
        %v1356 = vsub.s32 %v1353, %v1355
        %v1357 = vrot.slane %v1343, %v1356
        %v1358 = vcombine.low %v1334, %v1350
        %v1359 = vcombine.high %v1334, %v1350
        %v1360 = vcombine.low %v1341, %v1357
        %v1361 = vcombine.high %v1341, %v1357
        %v1362 = vcombine.low %v1266, %v1273
        %v1364 = vunpack.c.l.s4 1983009808
        %v1365 = vunpack.c.0.s8 %v1364
        %v1366 = vlaneseq
        %v1367 = vshrl.u32 %v1366, 7
        %v1368 = vsub.s32 %v1365, %v1367
        %v1369 = vrot.slane %v1362, %v1368
        %v1370 = vcombine.low %v1290, %v1291
        %v1372 = vunpack.c.l.s4 1983009808
        %v1373 = vunpack.c.0.s8 %v1372
        %v1374 = vlaneseq
        %v1375 = vshrl.u32 %v1374, 7
        %v1376 = vsub.s32 %v1373, %v1375
        %v1377 = vrot.slane %v1370, %v1376
        %v1378 = vcombine.low %v1282, %v1289
        %v1380 = vunpack.c.l.s4 1983009808
        %v1381 = vunpack.c.0.s8 %v1380
        %v1382 = vlaneseq
        %v1383 = vshrl.u32 %v1382, 7
        %v1384 = vsub.s32 %v1381, %v1383
        %v1385 = vrot.slane %v1378, %v1384
        %v1386 = vcombine.low %v1292, %v1293
        %v1388 = vunpack.c.l.s4 1983009808
        %v1389 = vunpack.c.0.s8 %v1388
        %v1390 = vlaneseq
        %v1391 = vshrl.u32 %v1390, 7
        %v1392 = vsub.s32 %v1389, %v1391
        %v1393 = vrot.slane %v1386, %v1392
        %v1394 = vcombine.low %v1369, %v1377
        %v1395 = vcombine.high %v1369, %v1377
        %v1397 = vunpack.c.l.s4 1934713408
        %v1398 = vunpack.c.0.s8 %v1397
        %v1399 = vlaneseq
        %v1400 = vshrl.u32 %v1399, 7
        %v1401 = vsub.s32 %v1398, %v1400
        %v1402 = vrot.slane %v1394, %v1401
        %v1404 = vunpack.c.l.s4 1934713408
        %v1405 = vunpack.c.0.s8 %v1404
        %v1406 = vlaneseq
        %v1407 = vshrl.u32 %v1406, 7
        %v1408 = vsub.s32 %v1405, %v1407
        %v1409 = vrot.slane %v1395, %v1408
        %v1410 = vcombine.low %v1385, %v1393
        %v1411 = vcombine.high %v1385, %v1393
        %v1413 = vunpack.c.l.s4 1934713408
        %v1414 = vunpack.c.0.s8 %v1413
        %v1415 = vlaneseq
        %v1416 = vshrl.u32 %v1415, 7
        %v1417 = vsub.s32 %v1414, %v1416
        %v1418 = vrot.slane %v1410, %v1417
        %v1420 = vunpack.c.l.s4 1934713408
        %v1421 = vunpack.c.0.s8 %v1420
        %v1422 = vlaneseq
        %v1423 = vshrl.u32 %v1422, 7
        %v1424 = vsub.s32 %v1421, %v1423
        %v1425 = vrot.slane %v1411, %v1424
        %v1426 = vcombine.low %v1402, %v1418
        %v1427 = vcombine.high %v1402, %v1418
        %v1428 = vcombine.low %v1409, %v1425
        %v1429 = vcombine.high %v1409, %v1425
        %1430 = vrot.lane.b32.xlu0 %v1128, 64
        %v1431 = vpop.permute.xlu0 %1430
        %1432 = vrot.lane.b32.xlu0 %v1134, 64
        %v1433 = vpop.permute.xlu0 %1432
        %1434 = vrot.lane.b32.xlu0 %v1141, 64
        %v1435 = vpop.permute.xlu0 %1434
        %1436 = vrot.lane.b32.xlu0 %v1143, 64
        %v1437 = vpop.permute.xlu0 %1436
        %1438 = vrot.lane.b32.xlu0 %v1147, 64
        %v1439 = vpop.permute.xlu0 %1438
        %1440 = vrot.lane.b32.xlu0 %v1149, 64
        %v1441 = vpop.permute.xlu0 %1440
        %1442 = vrot.lane.b32.xlu0 %v1153, 64
        %v1443 = vpop.permute.xlu0 %1442
        %1444 = vrot.lane.b32.xlu0 %v1155, 64
        %v1445 = vpop.permute.xlu0 %1444
        %v1454 = vcombine.low %v1431, %v1439
        %v1455 = vcombine.high %v1431, %v1439
        %v1457 = vunpack.c.l.s4 1983009808
        %v1458 = vunpack.c.0.s8 %v1457
        %v1459 = vlaneseq
        %v1460 = vshrl.u32 %v1459, 7
        %v1461 = vsub.s32 %v1458, %v1460
        %v1462 = vrot.slane %v1454, %v1461
        %v1464 = vunpack.c.l.s4 1983009808
        %v1465 = vunpack.c.0.s8 %v1464
        %v1466 = vlaneseq
        %v1467 = vshrl.u32 %v1466, 7
        %v1468 = vsub.s32 %v1465, %v1467
        %v1469 = vrot.slane %v1455, %v1468
        %v1470 = vcombine.low %v1435, %v1443
        %v1471 = vcombine.high %v1435, %v1443
        %v1473 = vunpack.c.l.s4 1983009808
        %v1474 = vunpack.c.0.s8 %v1473
        %v1475 = vlaneseq
        %v1476 = vshrl.u32 %v1475, 7
        %v1477 = vsub.s32 %v1474, %v1476
        %v1478 = vrot.slane %v1470, %v1477
        %v1480 = vunpack.c.l.s4 1983009808
        %v1481 = vunpack.c.0.s8 %v1480
        %v1482 = vlaneseq
        %v1483 = vshrl.u32 %v1482, 7
        %v1484 = vsub.s32 %v1481, %v1483
        %v1485 = vrot.slane %v1471, %v1484
        %v1486 = vcombine.low %v1462, %v1478
        %v1487 = vcombine.high %v1462, %v1478
        %v1489 = vunpack.c.l.s4 1934713408
        %v1490 = vunpack.c.0.s8 %v1489
        %v1491 = vlaneseq
        %v1492 = vshrl.u32 %v1491, 7
        %v1493 = vsub.s32 %v1490, %v1492
        %v1494 = vrot.slane %v1486, %v1493
        %v1496 = vunpack.c.l.s4 1934713408
        %v1497 = vunpack.c.0.s8 %v1496
        %v1498 = vlaneseq
        %v1499 = vshrl.u32 %v1498, 7
        %v1500 = vsub.s32 %v1497, %v1499
        %v1501 = vrot.slane %v1487, %v1500
        %v1502 = vcombine.low %v1469, %v1485
        %v1503 = vcombine.high %v1469, %v1485
        %v1505 = vunpack.c.l.s4 1934713408
        %v1506 = vunpack.c.0.s8 %v1505
        %v1507 = vlaneseq
        %v1508 = vshrl.u32 %v1507, 7
        %v1509 = vsub.s32 %v1506, %v1508
        %v1510 = vrot.slane %v1502, %v1509
        %v1512 = vunpack.c.l.s4 1934713408
        %v1513 = vunpack.c.0.s8 %v1512
        %v1514 = vlaneseq
        %v1515 = vshrl.u32 %v1514, 7
        %v1516 = vsub.s32 %v1513, %v1515
        %v1517 = vrot.slane %v1503, %v1516
        %v1518 = vcombine.high %v1494, 0.0
        %v1519 = vcombine.high %v1501, 0.0
        %v1520 = vcombine.high %v1510, 0.0
        %v1521 = vcombine.high %v1517, 0.0
        %v1522 = vcombine.low %v1433, %v1441
        %v1523 = vcombine.high %v1433, %v1441
        %v1525 = vunpack.c.l.s4 1983009808
        %v1526 = vunpack.c.0.s8 %v1525
        %v1527 = vlaneseq
        %v1528 = vshrl.u32 %v1527, 7
        %v1529 = vsub.s32 %v1526, %v1528
        %v1530 = vrot.slane %v1522, %v1529
        %v1532 = vunpack.c.l.s4 1983009808
        %v1533 = vunpack.c.0.s8 %v1532
        %v1534 = vlaneseq
        %v1535 = vshrl.u32 %v1534, 7
        %v1536 = vsub.s32 %v1533, %v1535
        %v1537 = vrot.slane %v1523, %v1536
        %v1538 = vcombine.low %v1437, %v1445
        %v1539 = vcombine.high %v1437, %v1445
        %v1541 = vunpack.c.l.s4 1983009808
        %v1542 = vunpack.c.0.s8 %v1541
        %v1543 = vlaneseq
        %v1544 = vshrl.u32 %v1543, 7
        %v1545 = vsub.s32 %v1542, %v1544
        %v1546 = vrot.slane %v1538, %v1545
        %v1548 = vunpack.c.l.s4 1983009808
        %v1549 = vunpack.c.0.s8 %v1548
        %v1550 = vlaneseq
        %v1551 = vshrl.u32 %v1550, 7
        %v1552 = vsub.s32 %v1549, %v1551
        %v1553 = vrot.slane %v1539, %v1552
        %v1554 = vcombine.low %v1530, %v1546
        %v1555 = vcombine.high %v1530, %v1546
        %v1557 = vunpack.c.l.s4 1934713408
        %v1558 = vunpack.c.0.s8 %v1557
        %v1559 = vlaneseq
        %v1560 = vshrl.u32 %v1559, 7
        %v1561 = vsub.s32 %v1558, %v1560
        %v1562 = vrot.slane %v1554, %v1561
        %v1564 = vunpack.c.l.s4 1934713408
        %v1565 = vunpack.c.0.s8 %v1564
        %v1566 = vlaneseq
        %v1567 = vshrl.u32 %v1566, 7
        %v1568 = vsub.s32 %v1565, %v1567
        %v1569 = vrot.slane %v1555, %v1568
        %v1570 = vcombine.low %v1537, %v1553
        %v1571 = vcombine.high %v1537, %v1553
        %v1573 = vunpack.c.l.s4 1934713408
        %v1574 = vunpack.c.0.s8 %v1573
        %v1575 = vlaneseq
        %v1576 = vshrl.u32 %v1575, 7
        %v1577 = vsub.s32 %v1574, %v1576
        %v1578 = vrot.slane %v1570, %v1577
        %v1580 = vunpack.c.l.s4 1934713408
        %v1581 = vunpack.c.0.s8 %v1580
        %v1582 = vlaneseq
        %v1583 = vshrl.u32 %v1582, 7
        %v1584 = vsub.s32 %v1581, %v1583
        %v1585 = vrot.slane %v1571, %v1584
        %v1586 = vcombine.high %v1562, 0.0
        %v1587 = vcombine.high %v1569, 0.0
        %v1588 = vcombine.high %v1578, 0.0
        %v1589 = vcombine.high %v1585, 0.0
        %v1590 = vcombine.low %v1494, %v1501
        %v1592 = vunpack.c.l.s4 1983009808
        %v1593 = vunpack.c.0.s8 %v1592
        %v1594 = vlaneseq
        %v1595 = vshrl.u32 %v1594, 7
        %v1596 = vsub.s32 %v1593, %v1595
        %v1597 = vrot.slane %v1590, %v1596
        %v1598 = vcombine.low %v1518, %v1519
        %v1600 = vunpack.c.l.s4 1983009808
        %v1601 = vunpack.c.0.s8 %v1600
        %v1602 = vlaneseq
        %v1603 = vshrl.u32 %v1602, 7
        %v1604 = vsub.s32 %v1601, %v1603
        %v1605 = vrot.slane %v1598, %v1604
        %v1606 = vcombine.low %v1510, %v1517
        %v1608 = vunpack.c.l.s4 1983009808
        %v1609 = vunpack.c.0.s8 %v1608
        %v1610 = vlaneseq
        %v1611 = vshrl.u32 %v1610, 7
        %v1612 = vsub.s32 %v1609, %v1611
        %v1613 = vrot.slane %v1606, %v1612
        %v1614 = vcombine.low %v1520, %v1521
        %v1616 = vunpack.c.l.s4 1983009808
        %v1617 = vunpack.c.0.s8 %v1616
        %v1618 = vlaneseq
        %v1619 = vshrl.u32 %v1618, 7
        %v1620 = vsub.s32 %v1617, %v1619
        %v1621 = vrot.slane %v1614, %v1620
        %v1622 = vcombine.low %v1597, %v1605
        %v1623 = vcombine.high %v1597, %v1605
        %v1625 = vunpack.c.l.s4 1934713408
        %v1626 = vunpack.c.0.s8 %v1625
        %v1627 = vlaneseq
        %v1628 = vshrl.u32 %v1627, 7
        %v1629 = vsub.s32 %v1626, %v1628
        %v1630 = vrot.slane %v1622, %v1629
        %v1632 = vunpack.c.l.s4 1934713408
        %v1633 = vunpack.c.0.s8 %v1632
        %v1634 = vlaneseq
        %v1635 = vshrl.u32 %v1634, 7
        %v1636 = vsub.s32 %v1633, %v1635
        %v1637 = vrot.slane %v1623, %v1636
        %v1638 = vcombine.low %v1613, %v1621
        %v1639 = vcombine.high %v1613, %v1621
        %v1641 = vunpack.c.l.s4 1934713408
        %v1642 = vunpack.c.0.s8 %v1641
        %v1643 = vlaneseq
        %v1644 = vshrl.u32 %v1643, 7
        %v1645 = vsub.s32 %v1642, %v1644
        %v1646 = vrot.slane %v1638, %v1645
        %v1648 = vunpack.c.l.s4 1934713408
        %v1649 = vunpack.c.0.s8 %v1648
        %v1650 = vlaneseq
        %v1651 = vshrl.u32 %v1650, 7
        %v1652 = vsub.s32 %v1649, %v1651
        %v1653 = vrot.slane %v1639, %v1652
        %v1654 = vcombine.low %v1630, %v1646
        %v1655 = vcombine.high %v1630, %v1646
        %v1656 = vcombine.low %v1637, %v1653
        %v1657 = vcombine.high %v1637, %v1653
        %v1658 = vcombine.low %v1562, %v1569
        %v1660 = vunpack.c.l.s4 1983009808
        %v1661 = vunpack.c.0.s8 %v1660
        %v1662 = vlaneseq
        %v1663 = vshrl.u32 %v1662, 7
        %v1664 = vsub.s32 %v1661, %v1663
        %v1665 = vrot.slane %v1658, %v1664
        %v1666 = vcombine.low %v1586, %v1587
        %v1668 = vunpack.c.l.s4 1983009808
        %v1669 = vunpack.c.0.s8 %v1668
        %v1670 = vlaneseq
        %v1671 = vshrl.u32 %v1670, 7
        %v1672 = vsub.s32 %v1669, %v1671
        %v1673 = vrot.slane %v1666, %v1672
        %v1674 = vcombine.low %v1578, %v1585
        %v1676 = vunpack.c.l.s4 1983009808
        %v1677 = vunpack.c.0.s8 %v1676
        %v1678 = vlaneseq
        %v1679 = vshrl.u32 %v1678, 7
        %v1680 = vsub.s32 %v1677, %v1679
        %v1681 = vrot.slane %v1674, %v1680
        %v1682 = vcombine.low %v1588, %v1589
        %v1684 = vunpack.c.l.s4 1983009808
        %v1685 = vunpack.c.0.s8 %v1684
        %v1686 = vlaneseq
        %v1687 = vshrl.u32 %v1686, 7
        %v1688 = vsub.s32 %v1685, %v1687
        %v1689 = vrot.slane %v1682, %v1688
        %v1690 = vcombine.low %v1665, %v1673
        %v1691 = vcombine.high %v1665, %v1673
        %v1693 = vunpack.c.l.s4 1934713408
        %v1694 = vunpack.c.0.s8 %v1693
        %v1695 = vlaneseq
        %v1696 = vshrl.u32 %v1695, 7
        %v1697 = vsub.s32 %v1694, %v1696
        %v1698 = vrot.slane %v1690, %v1697
        %v1700 = vunpack.c.l.s4 1934713408
        %v1701 = vunpack.c.0.s8 %v1700
        %v1702 = vlaneseq
        %v1703 = vshrl.u32 %v1702, 7
        %v1704 = vsub.s32 %v1701, %v1703
        %v1705 = vrot.slane %v1691, %v1704
        %v1706 = vcombine.low %v1681, %v1689
        %v1707 = vcombine.high %v1681, %v1689
        %v1709 = vunpack.c.l.s4 1934713408
        %v1710 = vunpack.c.0.s8 %v1709
        %v1711 = vlaneseq
        %v1712 = vshrl.u32 %v1711, 7
        %v1713 = vsub.s32 %v1710, %v1712
        %v1714 = vrot.slane %v1706, %v1713
        %v1716 = vunpack.c.l.s4 1934713408
        %v1717 = vunpack.c.0.s8 %v1716
        %v1718 = vlaneseq
        %v1719 = vshrl.u32 %v1718, 7
        %v1720 = vsub.s32 %v1717, %v1719
        %v1721 = vrot.slane %v1707, %v1720
        %v1722 = vcombine.low %v1698, %v1714
        %v1723 = vcombine.high %v1698, %v1714
        %v1724 = vcombine.low %v1705, %v1721
        %v1725 = vcombine.high %v1705, %v1721
        %1728 = vrot.lane.b32.xlu0 %v1130, 112
        %v1729 = vpop.permute.xlu0 %1728
        %1730 = vrot.lane.b32.xlu0 %v1136, 112
        %v1731 = vpop.permute.xlu0 %1730
        %1734 = vrot.lane.b32.xlu0 %v1130, 96
        %v1735 = vpop.permute.xlu0 %1734
        %1736 = vrot.lane.b32.xlu0 %v1136, 96
        %v1737 = vpop.permute.xlu0 %1736
        %1740 = vrot.lane.b32.xlu0 %v1130, 80
        %v1741 = vpop.permute.xlu0 %1740
        %1742 = vrot.lane.b32.xlu0 %v1136, 80
        %v1743 = vpop.permute.xlu0 %1742
        %v1746 = vcombine.low %v1130, %v1735
        %v1747 = vcombine.high %v1130, %v1735
        %v1749 = vunpack.c.l.s4 1983009808
        %v1750 = vunpack.c.0.s8 %v1749
        %v1751 = vlaneseq
        %v1752 = vshrl.u32 %v1751, 7
        %v1753 = vsub.s32 %v1750, %v1752
        %v1754 = vrot.slane %v1746, %v1753
        %v1756 = vunpack.c.l.s4 1983009808
        %v1757 = vunpack.c.0.s8 %v1756
        %v1758 = vlaneseq
        %v1759 = vshrl.u32 %v1758, 7
        %v1760 = vsub.s32 %v1757, %v1759
        %v1761 = vrot.slane %v1747, %v1760
        %v1762 = vcombine.low %v1729, %v1741
        %v1763 = vcombine.high %v1729, %v1741
        %v1765 = vunpack.c.l.s4 1983009808
        %v1766 = vunpack.c.0.s8 %v1765
        %v1767 = vlaneseq
        %v1768 = vshrl.u32 %v1767, 7
        %v1769 = vsub.s32 %v1766, %v1768
        %v1770 = vrot.slane %v1762, %v1769
        %v1772 = vunpack.c.l.s4 1983009808
        %v1773 = vunpack.c.0.s8 %v1772
        %v1774 = vlaneseq
        %v1775 = vshrl.u32 %v1774, 7
        %v1776 = vsub.s32 %v1773, %v1775
        %v1777 = vrot.slane %v1763, %v1776
        %v1778 = vcombine.low %v1754, %v1770
        %v1779 = vcombine.high %v1754, %v1770
        %v1781 = vunpack.c.l.s4 1934713408
        %v1782 = vunpack.c.0.s8 %v1781
        %v1783 = vlaneseq
        %v1784 = vshrl.u32 %v1783, 7
        %v1785 = vsub.s32 %v1782, %v1784
        %v1786 = vrot.slane %v1778, %v1785
        %v1788 = vunpack.c.l.s4 1934713408
        %v1789 = vunpack.c.0.s8 %v1788
        %v1790 = vlaneseq
        %v1791 = vshrl.u32 %v1790, 7
        %v1792 = vsub.s32 %v1789, %v1791
        %v1793 = vrot.slane %v1779, %v1792
        %v1794 = vcombine.low %v1761, %v1777
        %v1795 = vcombine.high %v1761, %v1777
        %v1797 = vunpack.c.l.s4 1934713408
        %v1798 = vunpack.c.0.s8 %v1797
        %v1799 = vlaneseq
        %v1800 = vshrl.u32 %v1799, 7
        %v1801 = vsub.s32 %v1798, %v1800
        %v1802 = vrot.slane %v1794, %v1801
        %v1804 = vunpack.c.l.s4 1934713408
        %v1805 = vunpack.c.0.s8 %v1804
        %v1806 = vlaneseq
        %v1807 = vshrl.u32 %v1806, 7
        %v1808 = vsub.s32 %v1805, %v1807
        %v1809 = vrot.slane %v1795, %v1808
        %v1810 = vcombine.high %v1786, 0.0
        %v1811 = vcombine.high %v1793, 0.0
        %v1812 = vcombine.high %v1802, 0.0
        %v1813 = vcombine.high %v1809, 0.0
        %v1814 = vcombine.low %v1136, %v1737
        %v1815 = vcombine.high %v1136, %v1737
        %v1817 = vunpack.c.l.s4 1983009808
        %v1818 = vunpack.c.0.s8 %v1817
        %v1819 = vlaneseq
        %v1820 = vshrl.u32 %v1819, 7
        %v1821 = vsub.s32 %v1818, %v1820
        %v1822 = vrot.slane %v1814, %v1821
        %v1824 = vunpack.c.l.s4 1983009808
        %v1825 = vunpack.c.0.s8 %v1824
        %v1826 = vlaneseq
        %v1827 = vshrl.u32 %v1826, 7
        %v1828 = vsub.s32 %v1825, %v1827
        %v1829 = vrot.slane %v1815, %v1828
        %v1830 = vcombine.low %v1731, %v1743
        %v1831 = vcombine.high %v1731, %v1743
        %v1833 = vunpack.c.l.s4 1983009808
        %v1834 = vunpack.c.0.s8 %v1833
        %v1835 = vlaneseq
        %v1836 = vshrl.u32 %v1835, 7
        %v1837 = vsub.s32 %v1834, %v1836
        %v1838 = vrot.slane %v1830, %v1837
        %v1840 = vunpack.c.l.s4 1983009808
        %v1841 = vunpack.c.0.s8 %v1840
        %v1842 = vlaneseq
        %v1843 = vshrl.u32 %v1842, 7
        %v1844 = vsub.s32 %v1841, %v1843
        %v1845 = vrot.slane %v1831, %v1844
        %v1846 = vcombine.low %v1822, %v1838
        %v1847 = vcombine.high %v1822, %v1838
        %v1849 = vunpack.c.l.s4 1934713408
        %v1850 = vunpack.c.0.s8 %v1849
        %v1851 = vlaneseq
        %v1852 = vshrl.u32 %v1851, 7
        %v1853 = vsub.s32 %v1850, %v1852
        %v1854 = vrot.slane %v1846, %v1853
        %v1856 = vunpack.c.l.s4 1934713408
        %v1857 = vunpack.c.0.s8 %v1856
        %v1858 = vlaneseq
        %v1859 = vshrl.u32 %v1858, 7
        %v1860 = vsub.s32 %v1857, %v1859
        %v1861 = vrot.slane %v1847, %v1860
        %v1862 = vcombine.low %v1829, %v1845
        %v1863 = vcombine.high %v1829, %v1845
        %v1865 = vunpack.c.l.s4 1934713408
        %v1866 = vunpack.c.0.s8 %v1865
        %v1867 = vlaneseq
        %v1868 = vshrl.u32 %v1867, 7
        %v1869 = vsub.s32 %v1866, %v1868
        %v1870 = vrot.slane %v1862, %v1869
        %v1872 = vunpack.c.l.s4 1934713408
        %v1873 = vunpack.c.0.s8 %v1872
        %v1874 = vlaneseq
        %v1875 = vshrl.u32 %v1874, 7
        %v1876 = vsub.s32 %v1873, %v1875
        %v1877 = vrot.slane %v1863, %v1876
        %v1878 = vcombine.high %v1854, 0.0
        %v1879 = vcombine.high %v1861, 0.0
        %v1880 = vcombine.high %v1870, 0.0
        %v1881 = vcombine.high %v1877, 0.0
        %v1882 = vcombine.low %v1786, %v1793
        %v1884 = vunpack.c.l.s4 1983009808
        %v1885 = vunpack.c.0.s8 %v1884
        %v1886 = vlaneseq
        %v1887 = vshrl.u32 %v1886, 7
        %v1888 = vsub.s32 %v1885, %v1887
        %v1889 = vrot.slane %v1882, %v1888
        %v1890 = vcombine.low %v1810, %v1811
        %v1892 = vunpack.c.l.s4 1983009808
        %v1893 = vunpack.c.0.s8 %v1892
        %v1894 = vlaneseq
        %v1895 = vshrl.u32 %v1894, 7
        %v1896 = vsub.s32 %v1893, %v1895
        %v1897 = vrot.slane %v1890, %v1896
        %v1898 = vcombine.low %v1802, %v1809
        %v1900 = vunpack.c.l.s4 1983009808
        %v1901 = vunpack.c.0.s8 %v1900
        %v1902 = vlaneseq
        %v1903 = vshrl.u32 %v1902, 7
        %v1904 = vsub.s32 %v1901, %v1903
        %v1905 = vrot.slane %v1898, %v1904
        %v1906 = vcombine.low %v1812, %v1813
        %v1908 = vunpack.c.l.s4 1983009808
        %v1909 = vunpack.c.0.s8 %v1908
        %v1910 = vlaneseq
        %v1911 = vshrl.u32 %v1910, 7
        %v1912 = vsub.s32 %v1909, %v1911
        %v1913 = vrot.slane %v1906, %v1912
        %v1914 = vcombine.low %v1889, %v1897
        %v1915 = vcombine.high %v1889, %v1897
        %v1917 = vunpack.c.l.s4 1934713408
        %v1918 = vunpack.c.0.s8 %v1917
        %v1919 = vlaneseq
        %v1920 = vshrl.u32 %v1919, 7
        %v1921 = vsub.s32 %v1918, %v1920
        %v1922 = vrot.slane %v1914, %v1921
        %v1924 = vunpack.c.l.s4 1934713408
        %v1925 = vunpack.c.0.s8 %v1924
        %v1926 = vlaneseq
        %v1927 = vshrl.u32 %v1926, 7
        %v1928 = vsub.s32 %v1925, %v1927
        %v1929 = vrot.slane %v1915, %v1928
        %v1930 = vcombine.low %v1905, %v1913
        %v1931 = vcombine.high %v1905, %v1913
        %v1933 = vunpack.c.l.s4 1934713408
        %v1934 = vunpack.c.0.s8 %v1933
        %v1935 = vlaneseq
        %v1936 = vshrl.u32 %v1935, 7
        %v1937 = vsub.s32 %v1934, %v1936
        %v1938 = vrot.slane %v1930, %v1937
        %v1940 = vunpack.c.l.s4 1934713408
        %v1941 = vunpack.c.0.s8 %v1940
        %v1942 = vlaneseq
        %v1943 = vshrl.u32 %v1942, 7
        %v1944 = vsub.s32 %v1941, %v1943
        %v1945 = vrot.slane %v1931, %v1944
        %v1946 = vcombine.low %v1922, %v1938
        %v1947 = vcombine.high %v1922, %v1938
        %v1948 = vcombine.low %v1929, %v1945
        %v1949 = vcombine.high %v1929, %v1945
        %v1950 = vcombine.low %v1854, %v1861
        %v1952 = vunpack.c.l.s4 1983009808
        %v1953 = vunpack.c.0.s8 %v1952
        %v1954 = vlaneseq
        %v1955 = vshrl.u32 %v1954, 7
        %v1956 = vsub.s32 %v1953, %v1955
        %v1957 = vrot.slane %v1950, %v1956
        %v1958 = vcombine.low %v1878, %v1879
        %v1960 = vunpack.c.l.s4 1983009808
        %v1961 = vunpack.c.0.s8 %v1960
        %v1962 = vlaneseq
        %v1963 = vshrl.u32 %v1962, 7
        %v1964 = vsub.s32 %v1961, %v1963
        %v1965 = vrot.slane %v1958, %v1964
        %v1966 = vcombine.low %v1870, %v1877
        %v1968 = vunpack.c.l.s4 1983009808
        %v1969 = vunpack.c.0.s8 %v1968
        %v1970 = vlaneseq
        %v1971 = vshrl.u32 %v1970, 7
        %v1972 = vsub.s32 %v1969, %v1971
        %v1973 = vrot.slane %v1966, %v1972
        %v1974 = vcombine.low %v1880, %v1881
        %v1976 = vunpack.c.l.s4 1983009808
        %v1977 = vunpack.c.0.s8 %v1976
        %v1978 = vlaneseq
        %v1979 = vshrl.u32 %v1978, 7
        %v1980 = vsub.s32 %v1977, %v1979
        %v1981 = vrot.slane %v1974, %v1980
        %v1982 = vcombine.low %v1957, %v1965
        %v1983 = vcombine.high %v1957, %v1965
        %v1985 = vunpack.c.l.s4 1934713408
        %v1986 = vunpack.c.0.s8 %v1985
        %v1987 = vlaneseq
        %v1988 = vshrl.u32 %v1987, 7
        %v1989 = vsub.s32 %v1986, %v1988
        %v1990 = vrot.slane %v1982, %v1989
        %v1992 = vunpack.c.l.s4 1934713408
        %v1993 = vunpack.c.0.s8 %v1992
        %v1994 = vlaneseq
        %v1995 = vshrl.u32 %v1994, 7
        %v1996 = vsub.s32 %v1993, %v1995
        %v1997 = vrot.slane %v1983, %v1996
        %v1998 = vcombine.low %v1973, %v1981
        %v1999 = vcombine.high %v1973, %v1981
        %v2001 = vunpack.c.l.s4 1934713408
        %v2002 = vunpack.c.0.s8 %v2001
        %v2003 = vlaneseq
        %v2004 = vshrl.u32 %v2003, 7
        %v2005 = vsub.s32 %v2002, %v2004
        %v2006 = vrot.slane %v1998, %v2005
        %v2008 = vunpack.c.l.s4 1934713408
        %v2009 = vunpack.c.0.s8 %v2008
        %v2010 = vlaneseq
        %v2011 = vshrl.u32 %v2010, 7
        %v2012 = vsub.s32 %v2009, %v2011
        %v2013 = vrot.slane %v1999, %v2012
        %v2014 = vcombine.low %v1990, %v2006
        %v2015 = vcombine.high %v1990, %v2006
        %v2016 = vcombine.low %v1997, %v2013
        %v2017 = vcombine.high %v1997, %v2013
        %v2018 = vld [vmem:[#allocation6] sm:$0xff]
        %vm2019 = vcmask 130048
        %v2021 = vsel %vm2019, %v1358, 0
        %v2024 = vsel %vm2019, %v1654, 0
        %2026 = vmatprep.subr.mxu0 0.0
        %2027 = vmatpush1.xpose.msra.mxu0 %v2024
        %2028 = vmatprep.subr.mxu0 0.0
        %2029 = vmatpush1.xpose.msra.mxu0 0.0
        %2030 = vmatprep.subr.mxu0 0.0
        %2031 = vmatpush1.xpose.msra.mxu0 0.0
        %2032 = vmatprep.subr.mxu0 0.0
        %2033 = vmatpush1.xpose.msra.mxu0 0.0
        %2034 = vmatprep.subr.mxu0 0.0
        %2035 = vmatpush1.xpose.msra.mxu0 0.0
        %2036 = vmatprep.subr.mxu0 0.0
        %2037 = vmatpush1.xpose.msra.mxu0 0.0
        %2038 = vmatprep.subr.mxu0 0.0
        %2039 = vmatpush1.xpose.msra.mxu0 0.0
        %2040 = vmatprep.subr.mxu0 0.0
        %2041 = vmatpush1.xpose.msra.mxu0 0.0
        %2042 = vmatprep.subr.mxu0 0.0
        %2043 = vmatpush1.xpose.msra.mxu0 0.0
        %2044 = vmatprep.subr.mxu0 0.0
        %2045 = vmatpush1.xpose.msra.mxu0 0.0
        %2046 = vmatprep.subr.mxu0 0.0
        %2047 = vmatpush1.xpose.msra.mxu0 0.0
        %2048 = vmatprep.subr.mxu0 0.0
        %2049 = vmatpush1.xpose.msra.mxu0 0.0
        %2050 = vmatprep.subr.mxu0 0.0
        %2051 = vmatpush1.xpose.msra.mxu0 0.0
        %2052 = vmatprep.subr.mxu0 0.0
        %2053 = vmatpush1.xpose.msra.mxu0 0.0
        %2054 = vmatprep.subr.mxu0 0.0
        %2055 = vmatpush1.xpose.msra.mxu0 0.0
        %2056 = vmatprep.subr.mxu0 0.0
        %2057 = vmatpush1.xpose.msra.mxu0 0.0
        %2058 = vmatprep.subr.mxu0 0.0
        %2059 = vmatpush1.xpose.msra.mxu0 0.0
        %2060 = vmatprep.subr.mxu0 0.0
        %2061 = vmatpush1.xpose.msra.mxu0 0.0
        %2062 = vmatprep.subr.mxu0 0.0
        %2063 = vmatpush1.xpose.msra.mxu0 0.0
        %2064 = vmatprep.subr.mxu0 0.0
        %2065 = vmatpush1.xpose.msra.mxu0 0.0
        %2066 = vmatprep.subr.mxu0 0.0
        %2067 = vmatpush1.xpose.msra.mxu0 0.0
        %2068 = vmatprep.subr.mxu0 0.0
        %2069 = vmatpush1.xpose.msra.mxu0 0.0
        %2070 = vmatprep.subr.mxu0 0.0
        %2071 = vmatpush1.xpose.msra.mxu0 0.0
        %2072 = vmatprep.subr.mxu0 0.0
        %2073 = vmatpush1.xpose.msra.mxu0 0.0
        %2074 = vmatprep.subr.mxu0 0.0
        %2075 = vmatpush1.xpose.msra.mxu0 0.0
        %2076 = vmatprep.subr.mxu0 0.0
        %2077 = vmatpush1.xpose.msra.mxu0 0.0
        %2078 = vmatprep.subr.mxu0 0.0
        %2079 = vmatpush1.xpose.msra.mxu0 0.0
        %2080 = vmatprep.subr.mxu0 0.0
        %2081 = vmatpush1.xpose.msra.mxu0 0.0
        %2082 = vmatprep.subr.mxu0 0.0
        %2083 = vmatpush1.xpose.msra.mxu0 0.0
        %2084 = vmatprep.subr.mxu0 0.0
        %2085 = vmatpush1.xpose.msra.mxu0 0.0
        %2086 = vmatprep.subr.mxu0 0.0
        %2087 = vmatpush1.xpose.msra.mxu0 0.0
        %2088 = vmatprep.subr.mxu0 0.0
        %2089 = vmatpush1.xpose.msra.mxu0 0.0
        %2090 = vmatprep.mubr.f32.mxu0 0.0
        %2091 = vmatmul.mubr.f32.gmra.mrb[0].mxu0 %v2021
        %v2092 = vpop.f32.mrb[0].mxu0
        %v2093 = vadd.f32 %v2018, %v2092
        %v2094 = vpop.f32.mrb[0].mxu0
        %2095 = vdwg.mxu0
        %v2097 = vsel %vm2019, %v1359, 0
        %v2100 = vsel %vm2019, %v1655, 0
        %2102 = vmatprep.subr.mxu0 0.0
        %2103 = vmatpush1.xpose.msra.mxu0 %v2100
        %2104 = vmatprep.subr.mxu0 0.0
        %2105 = vmatpush1.xpose.msra.mxu0 0.0
        %2106 = vmatprep.subr.mxu0 0.0
        %2107 = vmatpush1.xpose.msra.mxu0 0.0
        %2108 = vmatprep.subr.mxu0 0.0
        %2109 = vmatpush1.xpose.msra.mxu0 0.0
        %2110 = vmatprep.subr.mxu0 0.0
        %2111 = vmatpush1.xpose.msra.mxu0 0.0
        %2112 = vmatprep.subr.mxu0 0.0
        %2113 = vmatpush1.xpose.msra.mxu0 0.0
        %2114 = vmatprep.subr.mxu0 0.0
        %2115 = vmatpush1.xpose.msra.mxu0 0.0
        %2116 = vmatprep.subr.mxu0 0.0
        %2117 = vmatpush1.xpose.msra.mxu0 0.0
        %2118 = vmatprep.subr.mxu0 0.0
        %2119 = vmatpush1.xpose.msra.mxu0 0.0
        %2120 = vmatprep.subr.mxu0 0.0
        %2121 = vmatpush1.xpose.msra.mxu0 0.0
        %2122 = vmatprep.subr.mxu0 0.0
        %2123 = vmatpush1.xpose.msra.mxu0 0.0
        %2124 = vmatprep.subr.mxu0 0.0
        %2125 = vmatpush1.xpose.msra.mxu0 0.0
        %2126 = vmatprep.subr.mxu0 0.0
        %2127 = vmatpush1.xpose.msra.mxu0 0.0
        %2128 = vmatprep.subr.mxu0 0.0
        %2129 = vmatpush1.xpose.msra.mxu0 0.0
        %2130 = vmatprep.subr.mxu0 0.0
        %2131 = vmatpush1.xpose.msra.mxu0 0.0
        %2132 = vmatprep.subr.mxu0 0.0
        %2133 = vmatpush1.xpose.msra.mxu0 0.0
        %2134 = vmatprep.subr.mxu0 0.0
        %2135 = vmatpush1.xpose.msra.mxu0 0.0
        %2136 = vmatprep.subr.mxu0 0.0
        %2137 = vmatpush1.xpose.msra.mxu0 0.0
        %2138 = vmatprep.subr.mxu0 0.0
        %2139 = vmatpush1.xpose.msra.mxu0 0.0
        %2140 = vmatprep.subr.mxu0 0.0
        %2141 = vmatpush1.xpose.msra.mxu0 0.0
        %2142 = vmatprep.subr.mxu0 0.0
        %2143 = vmatpush1.xpose.msra.mxu0 0.0
        %2144 = vmatprep.subr.mxu0 0.0
        %2145 = vmatpush1.xpose.msra.mxu0 0.0
        %2146 = vmatprep.subr.mxu0 0.0
        %2147 = vmatpush1.xpose.msra.mxu0 0.0
        %2148 = vmatprep.subr.mxu0 0.0
        %2149 = vmatpush1.xpose.msra.mxu0 0.0
        %2150 = vmatprep.subr.mxu0 0.0
        %2151 = vmatpush1.xpose.msra.mxu0 0.0
        %2152 = vmatprep.subr.mxu0 0.0
        %2153 = vmatpush1.xpose.msra.mxu0 0.0
        %2154 = vmatprep.subr.mxu0 0.0
        %2155 = vmatpush1.xpose.msra.mxu0 0.0
        %2156 = vmatprep.subr.mxu0 0.0
        %2157 = vmatpush1.xpose.msra.mxu0 0.0
        %2158 = vmatprep.subr.mxu0 0.0
        %2159 = vmatpush1.xpose.msra.mxu0 0.0
        %2160 = vmatprep.subr.mxu0 0.0
        %2161 = vmatpush1.xpose.msra.mxu0 0.0
        %2162 = vmatprep.subr.mxu0 0.0
        %2163 = vmatpush1.xpose.msra.mxu0 0.0
        %2164 = vmatprep.subr.mxu0 0.0
        %2165 = vmatpush1.xpose.msra.mxu0 0.0
        %2166 = vmatprep.mubr.f32.mxu0 0.0
        %2167 = vmatmul.mubr.f32.gmra.mrb[0].mxu0 %v2097
        %v2168 = vpop.f32.mrb[0].mxu0
        %v2169 = vadd.f32 %v2018, %v2168
        %v2170 = vpop.f32.mrb[0].mxu0
        %2171 = vdwg.mxu0
        %v2173 = vsel %vm2019, %v1360, 0
        %v2176 = vsel %vm2019, %v1656, 0
        %2178 = vmatprep.subr.mxu0 0.0
        %2179 = vmatpush1.xpose.msra.mxu0 %v2176
        %2180 = vmatprep.subr.mxu0 0.0
        %2181 = vmatpush1.xpose.msra.mxu0 0.0
        %2182 = vmatprep.subr.mxu0 0.0
        %2183 = vmatpush1.xpose.msra.mxu0 0.0
        %2184 = vmatprep.subr.mxu0 0.0
        %2185 = vmatpush1.xpose.msra.mxu0 0.0
        %2186 = vmatprep.subr.mxu0 0.0
        %2187 = vmatpush1.xpose.msra.mxu0 0.0
        %2188 = vmatprep.subr.mxu0 0.0
        %2189 = vmatpush1.xpose.msra.mxu0 0.0
        %2190 = vmatprep.subr.mxu0 0.0
        %2191 = vmatpush1.xpose.msra.mxu0 0.0
        %2192 = vmatprep.subr.mxu0 0.0
        %2193 = vmatpush1.xpose.msra.mxu0 0.0
        %2194 = vmatprep.subr.mxu0 0.0
        %2195 = vmatpush1.xpose.msra.mxu0 0.0
        %2196 = vmatprep.subr.mxu0 0.0
        %2197 = vmatpush1.xpose.msra.mxu0 0.0
        %2198 = vmatprep.subr.mxu0 0.0
        %2199 = vmatpush1.xpose.msra.mxu0 0.0
        %2200 = vmatprep.subr.mxu0 0.0
        %2201 = vmatpush1.xpose.msra.mxu0 0.0
        %2202 = vmatprep.subr.mxu0 0.0
        %2203 = vmatpush1.xpose.msra.mxu0 0.0
        %2204 = vmatprep.subr.mxu0 0.0
        %2205 = vmatpush1.xpose.msra.mxu0 0.0
        %2206 = vmatprep.subr.mxu0 0.0
        %2207 = vmatpush1.xpose.msra.mxu0 0.0
        %2208 = vmatprep.subr.mxu0 0.0
        %2209 = vmatpush1.xpose.msra.mxu0 0.0
        %2210 = vmatprep.subr.mxu0 0.0
        %2211 = vmatpush1.xpose.msra.mxu0 0.0
        %2212 = vmatprep.subr.mxu0 0.0
        %2213 = vmatpush1.xpose.msra.mxu0 0.0
        %2214 = vmatprep.subr.mxu0 0.0
        %2215 = vmatpush1.xpose.msra.mxu0 0.0
        %2216 = vmatprep.subr.mxu0 0.0
        %2217 = vmatpush1.xpose.msra.mxu0 0.0
        %2218 = vmatprep.subr.mxu0 0.0
        %2219 = vmatpush1.xpose.msra.mxu0 0.0
        %2220 = vmatprep.subr.mxu0 0.0
        %2221 = vmatpush1.xpose.msra.mxu0 0.0
        %2222 = vmatprep.subr.mxu0 0.0
        %2223 = vmatpush1.xpose.msra.mxu0 0.0
        %2224 = vmatprep.subr.mxu0 0.0
        %2225 = vmatpush1.xpose.msra.mxu0 0.0
        %2226 = vmatprep.subr.mxu0 0.0
        %2227 = vmatpush1.xpose.msra.mxu0 0.0
        %2228 = vmatprep.subr.mxu0 0.0
        %2229 = vmatpush1.xpose.msra.mxu0 0.0
        %2230 = vmatprep.subr.mxu0 0.0
        %2231 = vmatpush1.xpose.msra.mxu0 0.0
        %2232 = vmatprep.subr.mxu0 0.0
        %2233 = vmatpush1.xpose.msra.mxu0 0.0
        %2234 = vmatprep.subr.mxu0 0.0
        %2235 = vmatpush1.xpose.msra.mxu0 0.0
        %2236 = vmatprep.subr.mxu0 0.0
        %2237 = vmatpush1.xpose.msra.mxu0 0.0
        %2238 = vmatprep.subr.mxu0 0.0
        %2239 = vmatpush1.xpose.msra.mxu0 0.0
        %2240 = vmatprep.subr.mxu0 0.0
        %2241 = vmatpush1.xpose.msra.mxu0 0.0
        %2242 = vmatprep.mubr.f32.mxu0 0.0
        %2243 = vmatmul.mubr.f32.gmra.mrb[0].mxu0 %v2173
        %v2244 = vpop.f32.mrb[0].mxu0
        %v2245 = vadd.f32 %v2018, %v2244
        %v2246 = vpop.f32.mrb[0].mxu0
        %2247 = vdwg.mxu0
        %v2249 = vsel %vm2019, %v1361, 0
        %v2252 = vsel %vm2019, %v1657, 0
        %2254 = vmatprep.subr.mxu0 0.0
        %2255 = vmatpush1.xpose.msra.mxu0 %v2252
        %2256 = vmatprep.subr.mxu0 0.0
        %2257 = vmatpush1.xpose.msra.mxu0 0.0
        %2258 = vmatprep.subr.mxu0 0.0
        %2259 = vmatpush1.xpose.msra.mxu0 0.0
        %2260 = vmatprep.subr.mxu0 0.0
        %2261 = vmatpush1.xpose.msra.mxu0 0.0
        %2262 = vmatprep.subr.mxu0 0.0
        %2263 = vmatpush1.xpose.msra.mxu0 0.0
        %2264 = vmatprep.subr.mxu0 0.0
        %2265 = vmatpush1.xpose.msra.mxu0 0.0
        %2266 = vmatprep.subr.mxu0 0.0
        %2267 = vmatpush1.xpose.msra.mxu0 0.0
        %2268 = vmatprep.subr.mxu0 0.0
        %2269 = vmatpush1.xpose.msra.mxu0 0.0
        %2270 = vmatprep.subr.mxu0 0.0
        %2271 = vmatpush1.xpose.msra.mxu0 0.0
        %2272 = vmatprep.subr.mxu0 0.0
        %2273 = vmatpush1.xpose.msra.mxu0 0.0
        %2274 = vmatprep.subr.mxu0 0.0
        %2275 = vmatpush1.xpose.msra.mxu0 0.0
        %2276 = vmatprep.subr.mxu0 0.0
        %2277 = vmatpush1.xpose.msra.mxu0 0.0
        %2278 = vmatprep.subr.mxu0 0.0
        %2279 = vmatpush1.xpose.msra.mxu0 0.0
        %2280 = vmatprep.subr.mxu0 0.0
        %2281 = vmatpush1.xpose.msra.mxu0 0.0
        %2282 = vmatprep.subr.mxu0 0.0
        %2283 = vmatpush1.xpose.msra.mxu0 0.0
        %2284 = vmatprep.subr.mxu0 0.0
        %2285 = vmatpush1.xpose.msra.mxu0 0.0
        %2286 = vmatprep.subr.mxu0 0.0
        %2287 = vmatpush1.xpose.msra.mxu0 0.0
        %2288 = vmatprep.subr.mxu0 0.0
        %2289 = vmatpush1.xpose.msra.mxu0 0.0
        %2290 = vmatprep.subr.mxu0 0.0
        %2291 = vmatpush1.xpose.msra.mxu0 0.0
        %2292 = vmatprep.subr.mxu0 0.0
        %2293 = vmatpush1.xpose.msra.mxu0 0.0
        %2294 = vmatprep.subr.mxu0 0.0
        %2295 = vmatpush1.xpose.msra.mxu0 0.0
        %2296 = vmatprep.subr.mxu0 0.0
        %2297 = vmatpush1.xpose.msra.mxu0 0.0
        %2298 = vmatprep.subr.mxu0 0.0
        %2299 = vmatpush1.xpose.msra.mxu0 0.0
        %2300 = vmatprep.subr.mxu0 0.0
        %2301 = vmatpush1.xpose.msra.mxu0 0.0
        %2302 = vmatprep.subr.mxu0 0.0
        %2303 = vmatpush1.xpose.msra.mxu0 0.0
        %2304 = vmatprep.subr.mxu0 0.0
        %2305 = vmatpush1.xpose.msra.mxu0 0.0
        %2306 = vmatprep.subr.mxu0 0.0
        %2307 = vmatpush1.xpose.msra.mxu0 0.0
        %2308 = vmatprep.subr.mxu0 0.0
        %2309 = vmatpush1.xpose.msra.mxu0 0.0
        %2310 = vmatprep.subr.mxu0 0.0
        %2311 = vmatpush1.xpose.msra.mxu0 0.0
        %2312 = vmatprep.subr.mxu0 0.0
        %2313 = vmatpush1.xpose.msra.mxu0 0.0
        %2314 = vmatprep.subr.mxu0 0.0
        %2315 = vmatpush1.xpose.msra.mxu0 0.0
        %2316 = vmatprep.subr.mxu0 0.0
        %2317 = vmatpush1.xpose.msra.mxu0 0.0
        %2318 = vmatprep.mubr.f32.mxu0 0.0
        %2319 = vmatmul.mubr.f32.gmra.mrb[0].mxu0 %v2249
        %v2320 = vpop.f32.mrb[0].mxu0
        %v2321 = vadd.f32 %v2018, %v2320
        %v2322 = vpop.f32.mrb[0].mxu0
        %2323 = vdwg.mxu0
        %v2325 = vsel %vm2019, %v1426, 0
        %v2328 = vsel %vm2019, %v1722, 0
        %2330 = vmatprep.subr.mxu0 0.0
        %2331 = vmatpush1.xpose.msra.mxu0 %v2328
        %2332 = vmatprep.subr.mxu0 0.0
        %2333 = vmatpush1.xpose.msra.mxu0 0.0
        %2334 = vmatprep.subr.mxu0 0.0
        %2335 = vmatpush1.xpose.msra.mxu0 0.0
        %2336 = vmatprep.subr.mxu0 0.0
        %2337 = vmatpush1.xpose.msra.mxu0 0.0
        %2338 = vmatprep.subr.mxu0 0.0
        %2339 = vmatpush1.xpose.msra.mxu0 0.0
        %2340 = vmatprep.subr.mxu0 0.0
        %2341 = vmatpush1.xpose.msra.mxu0 0.0
        %2342 = vmatprep.subr.mxu0 0.0
        %2343 = vmatpush1.xpose.msra.mxu0 0.0
        %2344 = vmatprep.subr.mxu0 0.0
        %2345 = vmatpush1.xpose.msra.mxu0 0.0
        %2346 = vmatprep.subr.mxu0 0.0
        %2347 = vmatpush1.xpose.msra.mxu0 0.0
        %2348 = vmatprep.subr.mxu0 0.0
        %2349 = vmatpush1.xpose.msra.mxu0 0.0
        %2350 = vmatprep.subr.mxu0 0.0
        %2351 = vmatpush1.xpose.msra.mxu0 0.0
        %2352 = vmatprep.subr.mxu0 0.0
        %2353 = vmatpush1.xpose.msra.mxu0 0.0
        %2354 = vmatprep.subr.mxu0 0.0
        %2355 = vmatpush1.xpose.msra.mxu0 0.0
        %2356 = vmatprep.subr.mxu0 0.0
        %2357 = vmatpush1.xpose.msra.mxu0 0.0
        %2358 = vmatprep.subr.mxu0 0.0
        %2359 = vmatpush1.xpose.msra.mxu0 0.0
        %2360 = vmatprep.subr.mxu0 0.0
        %2361 = vmatpush1.xpose.msra.mxu0 0.0
        %2362 = vmatprep.subr.mxu0 0.0
        %2363 = vmatpush1.xpose.msra.mxu0 0.0
        %2364 = vmatprep.subr.mxu0 0.0
        %2365 = vmatpush1.xpose.msra.mxu0 0.0
        %2366 = vmatprep.subr.mxu0 0.0
        %2367 = vmatpush1.xpose.msra.mxu0 0.0
        %2368 = vmatprep.subr.mxu0 0.0
        %2369 = vmatpush1.xpose.msra.mxu0 0.0
        %2370 = vmatprep.subr.mxu0 0.0
        %2371 = vmatpush1.xpose.msra.mxu0 0.0
        %2372 = vmatprep.subr.mxu0 0.0
        %2373 = vmatpush1.xpose.msra.mxu0 0.0
        %2374 = vmatprep.subr.mxu0 0.0
        %2375 = vmatpush1.xpose.msra.mxu0 0.0
        %2376 = vmatprep.subr.mxu0 0.0
        %2377 = vmatpush1.xpose.msra.mxu0 0.0
        %2378 = vmatprep.subr.mxu0 0.0
        %2379 = vmatpush1.xpose.msra.mxu0 0.0
        %2380 = vmatprep.subr.mxu0 0.0
        %2381 = vmatpush1.xpose.msra.mxu0 0.0
        %2382 = vmatprep.subr.mxu0 0.0
        %2383 = vmatpush1.xpose.msra.mxu0 0.0
        %2384 = vmatprep.subr.mxu0 0.0
        %2385 = vmatpush1.xpose.msra.mxu0 0.0
        %2386 = vmatprep.subr.mxu0 0.0
        %2387 = vmatpush1.xpose.msra.mxu0 0.0
        %2388 = vmatprep.subr.mxu0 0.0
        %2389 = vmatpush1.xpose.msra.mxu0 0.0
        %2390 = vmatprep.subr.mxu0 0.0
        %2391 = vmatpush1.xpose.msra.mxu0 0.0
        %2392 = vmatprep.subr.mxu0 0.0
        %2393 = vmatpush1.xpose.msra.mxu0 0.0
        %2394 = vmatprep.mubr.f32.mxu0 0.0
        %2395 = vmatmul.mubr.f32.gmra.mrb[0].mxu0 %v2325
        %v2396 = vpop.f32.mrb[0].mxu0
        %v2397 = vadd.f32 %v2018, %v2396
        %v2398 = vpop.f32.mrb[0].mxu0
        %2399 = vdwg.mxu0
        %v2401 = vsel %vm2019, %v1427, 0
        %v2404 = vsel %vm2019, %v1723, 0
        %2406 = vmatprep.subr.mxu0 0.0
        %2407 = vmatpush1.xpose.msra.mxu0 %v2404
        %2408 = vmatprep.subr.mxu0 0.0
        %2409 = vmatpush1.xpose.msra.mxu0 0.0
        %2410 = vmatprep.subr.mxu0 0.0
        %2411 = vmatpush1.xpose.msra.mxu0 0.0
        %2412 = vmatprep.subr.mxu0 0.0
        %2413 = vmatpush1.xpose.msra.mxu0 0.0
        %2414 = vmatprep.subr.mxu0 0.0
        %2415 = vmatpush1.xpose.msra.mxu0 0.0
        %2416 = vmatprep.subr.mxu0 0.0
        %2417 = vmatpush1.xpose.msra.mxu0 0.0
        %2418 = vmatprep.subr.mxu0 0.0
        %2419 = vmatpush1.xpose.msra.mxu0 0.0
        %2420 = vmatprep.subr.mxu0 0.0
        %2421 = vmatpush1.xpose.msra.mxu0 0.0
        %2422 = vmatprep.subr.mxu0 0.0
        %2423 = vmatpush1.xpose.msra.mxu0 0.0
        %2424 = vmatprep.subr.mxu0 0.0
        %2425 = vmatpush1.xpose.msra.mxu0 0.0
        %2426 = vmatprep.subr.mxu0 0.0
        %2427 = vmatpush1.xpose.msra.mxu0 0.0
        %2428 = vmatprep.subr.mxu0 0.0
        %2429 = vmatpush1.xpose.msra.mxu0 0.0
        %2430 = vmatprep.subr.mxu0 0.0
        %2431 = vmatpush1.xpose.msra.mxu0 0.0
        %2432 = vmatprep.subr.mxu0 0.0
        %2433 = vmatpush1.xpose.msra.mxu0 0.0
        %2434 = vmatprep.subr.mxu0 0.0
        %2435 = vmatpush1.xpose.msra.mxu0 0.0
        %2436 = vmatprep.subr.mxu0 0.0
        %2437 = vmatpush1.xpose.msra.mxu0 0.0
        %2438 = vmatprep.subr.mxu0 0.0
        %2439 = vmatpush1.xpose.msra.mxu0 0.0
        %2440 = vmatprep.subr.mxu0 0.0
        %2441 = vmatpush1.xpose.msra.mxu0 0.0
        %2442 = vmatprep.subr.mxu0 0.0
        %2443 = vmatpush1.xpose.msra.mxu0 0.0
        %2444 = vmatprep.subr.mxu0 0.0
        %2445 = vmatpush1.xpose.msra.mxu0 0.0
        %2446 = vmatprep.subr.mxu0 0.0
        %2447 = vmatpush1.xpose.msra.mxu0 0.0
        %2448 = vmatprep.subr.mxu0 0.0
        %2449 = vmatpush1.xpose.msra.mxu0 0.0
        %2450 = vmatprep.subr.mxu0 0.0
        %2451 = vmatpush1.xpose.msra.mxu0 0.0
        %2452 = vmatprep.subr.mxu0 0.0
        %2453 = vmatpush1.xpose.msra.mxu0 0.0
        %2454 = vmatprep.subr.mxu0 0.0
        %2455 = vmatpush1.xpose.msra.mxu0 0.0
        %2456 = vmatprep.subr.mxu0 0.0
        %2457 = vmatpush1.xpose.msra.mxu0 0.0
        %2458 = vmatprep.subr.mxu0 0.0
        %2459 = vmatpush1.xpose.msra.mxu0 0.0
        %2460 = vmatprep.subr.mxu0 0.0
        %2461 = vmatpush1.xpose.msra.mxu0 0.0
        %2462 = vmatprep.subr.mxu0 0.0
        %2463 = vmatpush1.xpose.msra.mxu0 0.0
        %2464 = vmatprep.subr.mxu0 0.0
        %2465 = vmatpush1.xpose.msra.mxu0 0.0
        %2466 = vmatprep.subr.mxu0 0.0
        %2467 = vmatpush1.xpose.msra.mxu0 0.0
        %2468 = vmatprep.subr.mxu0 0.0
        %2469 = vmatpush1.xpose.msra.mxu0 0.0
        %2470 = vmatprep.mubr.f32.mxu0 0.0
        %2471 = vmatmul.mubr.f32.gmra.mrb[0].mxu0 %v2401
        %v2472 = vpop.f32.mrb[0].mxu0
        %v2473 = vadd.f32 %v2018, %v2472
        %v2474 = vpop.f32.mrb[0].mxu0
        %2475 = vdwg.mxu0
        %v2477 = vsel %vm2019, %v1428, 0
        %v2480 = vsel %vm2019, %v1724, 0
        %2482 = vmatprep.subr.mxu0 0.0
        %2483 = vmatpush1.xpose.msra.mxu0 %v2480
        %2484 = vmatprep.subr.mxu0 0.0
        %2485 = vmatpush1.xpose.msra.mxu0 0.0
        %2486 = vmatprep.subr.mxu0 0.0
        %2487 = vmatpush1.xpose.msra.mxu0 0.0
        %2488 = vmatprep.subr.mxu0 0.0
        %2489 = vmatpush1.xpose.msra.mxu0 0.0
        %2490 = vmatprep.subr.mxu0 0.0
        %2491 = vmatpush1.xpose.msra.mxu0 0.0
        %2492 = vmatprep.subr.mxu0 0.0
        %2493 = vmatpush1.xpose.msra.mxu0 0.0
        %2494 = vmatprep.subr.mxu0 0.0
        %2495 = vmatpush1.xpose.msra.mxu0 0.0
        %2496 = vmatprep.subr.mxu0 0.0
        %2497 = vmatpush1.xpose.msra.mxu0 0.0
        %2498 = vmatprep.subr.mxu0 0.0
        %2499 = vmatpush1.xpose.msra.mxu0 0.0
        %2500 = vmatprep.subr.mxu0 0.0
        %2501 = vmatpush1.xpose.msra.mxu0 0.0
        %2502 = vmatprep.subr.mxu0 0.0
        %2503 = vmatpush1.xpose.msra.mxu0 0.0
        %2504 = vmatprep.subr.mxu0 0.0
        %2505 = vmatpush1.xpose.msra.mxu0 0.0
        %2506 = vmatprep.subr.mxu0 0.0
        %2507 = vmatpush1.xpose.msra.mxu0 0.0
        %2508 = vmatprep.subr.mxu0 0.0
        %2509 = vmatpush1.xpose.msra.mxu0 0.0
        %2510 = vmatprep.subr.mxu0 0.0
        %2511 = vmatpush1.xpose.msra.mxu0 0.0
        %2512 = vmatprep.subr.mxu0 0.0
        %2513 = vmatpush1.xpose.msra.mxu0 0.0
        %2514 = vmatprep.subr.mxu0 0.0
        %2515 = vmatpush1.xpose.msra.mxu0 0.0
        %2516 = vmatprep.subr.mxu0 0.0
        %2517 = vmatpush1.xpose.msra.mxu0 0.0
        %2518 = vmatprep.subr.mxu0 0.0
        %2519 = vmatpush1.xpose.msra.mxu0 0.0
        %2520 = vmatprep.subr.mxu0 0.0
        %2521 = vmatpush1.xpose.msra.mxu0 0.0
        %2522 = vmatprep.subr.mxu0 0.0
        %2523 = vmatpush1.xpose.msra.mxu0 0.0
        %2524 = vmatprep.subr.mxu0 0.0
        %2525 = vmatpush1.xpose.msra.mxu0 0.0
        %2526 = vmatprep.subr.mxu0 0.0
        %2527 = vmatpush1.xpose.msra.mxu0 0.0
        %2528 = vmatprep.subr.mxu0 0.0
        %2529 = vmatpush1.xpose.msra.mxu0 0.0
        %2530 = vmatprep.subr.mxu0 0.0
        %2531 = vmatpush1.xpose.msra.mxu0 0.0
        %2532 = vmatprep.subr.mxu0 0.0
        %2533 = vmatpush1.xpose.msra.mxu0 0.0
        %2534 = vmatprep.subr.mxu0 0.0
        %2535 = vmatpush1.xpose.msra.mxu0 0.0
        %2536 = vmatprep.subr.mxu0 0.0
        %2537 = vmatpush1.xpose.msra.mxu0 0.0
        %2538 = vmatprep.subr.mxu0 0.0
        %2539 = vmatpush1.xpose.msra.mxu0 0.0
        %2540 = vmatprep.subr.mxu0 0.0
        %2541 = vmatpush1.xpose.msra.mxu0 0.0
        %2542 = vmatprep.subr.mxu0 0.0
        %2543 = vmatpush1.xpose.msra.mxu0 0.0
        %2544 = vmatprep.subr.mxu0 0.0
        %2545 = vmatpush1.xpose.msra.mxu0 0.0
        %2546 = vmatprep.mubr.f32.mxu0 0.0
        %2547 = vmatmul.mubr.f32.gmra.mrb[0].mxu0 %v2477
        %v2548 = vpop.f32.mrb[0].mxu0
        %v2549 = vadd.f32 %v2018, %v2548
        %v2550 = vpop.f32.mrb[0].mxu0
        %2551 = vdwg.mxu0
        %v2553 = vsel %vm2019, %v1429, 0
        %v2556 = vsel %vm2019, %v1725, 0
        %2558 = vmatprep.subr.mxu0 0.0
        %2559 = vmatpush1.xpose.msra.mxu0 %v2556
        %2560 = vmatprep.subr.mxu0 0.0
        %2561 = vmatpush1.xpose.msra.mxu0 0.0
        %2562 = vmatprep.subr.mxu0 0.0
        %2563 = vmatpush1.xpose.msra.mxu0 0.0
        %2564 = vmatprep.subr.mxu0 0.0
        %2565 = vmatpush1.xpose.msra.mxu0 0.0
        %2566 = vmatprep.subr.mxu0 0.0
        %2567 = vmatpush1.xpose.msra.mxu0 0.0
        %2568 = vmatprep.subr.mxu0 0.0
        %2569 = vmatpush1.xpose.msra.mxu0 0.0
        %2570 = vmatprep.subr.mxu0 0.0
        %2571 = vmatpush1.xpose.msra.mxu0 0.0
        %2572 = vmatprep.subr.mxu0 0.0
        %2573 = vmatpush1.xpose.msra.mxu0 0.0
        %2574 = vmatprep.subr.mxu0 0.0
        %2575 = vmatpush1.xpose.msra.mxu0 0.0
        %2576 = vmatprep.subr.mxu0 0.0
        %2577 = vmatpush1.xpose.msra.mxu0 0.0
        %2578 = vmatprep.subr.mxu0 0.0
        %2579 = vmatpush1.xpose.msra.mxu0 0.0
        %2580 = vmatprep.subr.mxu0 0.0
        %2581 = vmatpush1.xpose.msra.mxu0 0.0
        %2582 = vmatprep.subr.mxu0 0.0
        %2583 = vmatpush1.xpose.msra.mxu0 0.0
        %2584 = vmatprep.subr.mxu0 0.0
        %2585 = vmatpush1.xpose.msra.mxu0 0.0
        %2586 = vmatprep.subr.mxu0 0.0
        %2587 = vmatpush1.xpose.msra.mxu0 0.0
        %2588 = vmatprep.subr.mxu0 0.0
        %2589 = vmatpush1.xpose.msra.mxu0 0.0
        %2590 = vmatprep.subr.mxu0 0.0
        %2591 = vmatpush1.xpose.msra.mxu0 0.0
        %2592 = vmatprep.subr.mxu0 0.0
        %2593 = vmatpush1.xpose.msra.mxu0 0.0
        %2594 = vmatprep.subr.mxu0 0.0
        %2595 = vmatpush1.xpose.msra.mxu0 0.0
        %2596 = vmatprep.subr.mxu0 0.0
        %2597 = vmatpush1.xpose.msra.mxu0 0.0
        %2598 = vmatprep.subr.mxu0 0.0
        %2599 = vmatpush1.xpose.msra.mxu0 0.0
        %2600 = vmatprep.subr.mxu0 0.0
        %2601 = vmatpush1.xpose.msra.mxu0 0.0
        %2602 = vmatprep.subr.mxu0 0.0
        %2603 = vmatpush1.xpose.msra.mxu0 0.0
        %2604 = vmatprep.subr.mxu0 0.0
        %2605 = vmatpush1.xpose.msra.mxu0 0.0
        %2606 = vmatprep.subr.mxu0 0.0
        %2607 = vmatpush1.xpose.msra.mxu0 0.0
        %2608 = vmatprep.subr.mxu0 0.0
        %2609 = vmatpush1.xpose.msra.mxu0 0.0
        %2610 = vmatprep.subr.mxu0 0.0
        %2611 = vmatpush1.xpose.msra.mxu0 0.0
        %2612 = vmatprep.subr.mxu0 0.0
        %2613 = vmatpush1.xpose.msra.mxu0 0.0
        %2614 = vmatprep.subr.mxu0 0.0
        %2615 = vmatpush1.xpose.msra.mxu0 0.0
        %2616 = vmatprep.subr.mxu0 0.0
        %2617 = vmatpush1.xpose.msra.mxu0 0.0
        %2618 = vmatprep.subr.mxu0 0.0
        %2619 = vmatpush1.xpose.msra.mxu0 0.0
        %2620 = vmatprep.subr.mxu0 0.0
        %2621 = vmatpush1.xpose.msra.mxu0 0.0
        %2622 = vmatprep.mubr.f32.mxu0 0.0
        %2623 = vmatmul.mubr.f32.gmra.mrb[0].mxu0 %v2553
        %v2624 = vpop.f32.mrb[0].mxu0
        %v2625 = vadd.f32 %v2018, %v2624
        %v2626 = vpop.f32.mrb[0].mxu0
        %2627 = vdwg.mxu0
        %vm2628 = vcmask 64512
        %v2629 = vsel %vm2628, %v2093, -inf
        %2630 = vmax.xlane.f32.xlu0 %v2629
        %v2631 = vpop.xlane.xlu0 %2630
        %v2632 = vsel %vm2628, %v2169, -inf
        %2633 = vmax.xlane.f32.xlu0 %v2632
        %v2634 = vpop.xlane.xlu0 %2633
        %v2635 = vsel %vm2628, %v2245, -inf
        %2636 = vmax.xlane.f32.xlu0 %v2635
        %v2637 = vpop.xlane.xlu0 %2636
        %v2638 = vsel %vm2628, %v2321, -inf
        %2639 = vmax.xlane.f32.xlu0 %v2638
        %v2640 = vpop.xlane.xlu0 %2639
        %v2641 = vsel %vm2628, %v2397, -inf
        %2642 = vmax.xlane.f32.xlu0 %v2641
        %v2643 = vpop.xlane.xlu0 %2642
        %v2644 = vsel %vm2628, %v2473, -inf
        %2645 = vmax.xlane.f32.xlu0 %v2644
        %v2646 = vpop.xlane.xlu0 %2645
        %v2647 = vsel %vm2628, %v2549, -inf
        %2648 = vmax.xlane.f32.xlu0 %v2647
        %v2649 = vpop.xlane.xlu0 %2648
        %v2650 = vsel %vm2628, %v2625, -inf
        %2651 = vmax.xlane.f32.xlu0 %v2650
        %v2652 = vpop.xlane.xlu0 %2651
        %v2653 = vsub.f32 %v2093, %v2631
        %v2654 = vsub.f32 %v2169, %v2634
        %v2655 = vsub.f32 %v2245, %v2637
        %v2656 = vsub.f32 %v2321, %v2640
        %v2657 = vsub.f32 %v2397, %v2643
        %v2658 = vsub.f32 %v2473, %v2646
        %v2659 = vsub.f32 %v2549, %v2649
        %v2660 = vsub.f32 %v2625, %v2652
        %v2661 = vmul.f32 %v2653, 1.442695
        %v2662 = vpow.pop %v2661
        %v2663 = vmul.f32 %v2654, 1.442695
        %v2664 = vpow.pop %v2663
        %v2665 = vmul.f32 %v2655, 1.442695
        %v2666 = vpow.pop %v2665
        %v2667 = vmul.f32 %v2656, 1.442695
        %v2668 = vpow.pop %v2667
        %v2669 = vmul.f32 %v2657, 1.442695
        %v2670 = vpow.pop %v2669
        %v2671 = vmul.f32 %v2658, 1.442695
        %v2672 = vpow.pop %v2671
        %v2673 = vmul.f32 %v2659, 1.442695
        %v2674 = vpow.pop %v2673
        %v2675 = vmul.f32 %v2660, 1.442695
        %v2676 = vpow.pop %v2675
        %v2677 = vsel %vm2628, %v2662, 0.0
        %2678 = vadd.xlane.f32.xlu0 %v2677
        %v2679 = vpop.xlane.xlu0 %2678
        %v2680 = vsel %vm2628, %v2664, 0.0
        %2681 = vadd.xlane.f32.xlu0 %v2680
        %v2682 = vpop.xlane.xlu0 %2681
        %v2683 = vsel %vm2628, %v2666, 0.0
        %2684 = vadd.xlane.f32.xlu0 %v2683
        %v2685 = vpop.xlane.xlu0 %2684
        %v2686 = vsel %vm2628, %v2668, 0.0
        %2687 = vadd.xlane.f32.xlu0 %v2686
        %v2688 = vpop.xlane.xlu0 %2687
        %v2689 = vsel %vm2628, %v2670, 0.0
        %2690 = vadd.xlane.f32.xlu0 %v2689
        %v2691 = vpop.xlane.xlu0 %2690
        %v2692 = vsel %vm2628, %v2672, 0.0
        %2693 = vadd.xlane.f32.xlu0 %v2692
        %v2694 = vpop.xlane.xlu0 %2693
        %v2695 = vsel %vm2628, %v2674, 0.0
        %2696 = vadd.xlane.f32.xlu0 %v2695
        %v2697 = vpop.xlane.xlu0 %2696
        %v2698 = vsel %vm2628, %v2676, 0.0
        %2699 = vadd.xlane.f32.xlu0 %v2698
        %v2700 = vpop.xlane.xlu0 %2699
        %v2701 = vrcp.pop %v2679
        %v2702 = vmul.f32 %v2662, %v2701
        %v2703 = vrcp.pop %v2682
        %v2704 = vmul.f32 %v2664, %v2703
        %v2705 = vrcp.pop %v2685
        %v2706 = vmul.f32 %v2666, %v2705
        %v2707 = vrcp.pop %v2688
        %v2708 = vmul.f32 %v2668, %v2707
        %v2709 = vrcp.pop %v2691
        %v2710 = vmul.f32 %v2670, %v2709
        %v2711 = vrcp.pop %v2694
        %v2712 = vmul.f32 %v2672, %v2711
        %v2713 = vrcp.pop %v2697
        %v2714 = vmul.f32 %v2674, %v2713
        %v2715 = vrcp.pop %v2700
        %v2716 = vmul.f32 %v2676, %v2715
        %v2718 = vsel %vm2628, %v2702, 0
        %2720 = vmatprep.subr.mxu0 0.0
        %2721 = vmatpush1.msra.mxu0 %v1946
        %2722 = vmatprep.subr.mxu0 0.0
        %2723 = vmatpush1.msra.mxu0 0.0
        %2724 = vmatprep.subr.mxu0 0.0
        %2725 = vmatpush1.msra.mxu0 0.0
        %2726 = vmatprep.subr.mxu0 0.0
        %2727 = vmatpush1.msra.mxu0 0.0
        %2728 = vmatprep.subr.mxu0 0.0
        %2729 = vmatpush1.msra.mxu0 0.0
        %2730 = vmatprep.subr.mxu0 0.0
        %2731 = vmatpush1.msra.mxu0 0.0
        %2732 = vmatprep.subr.mxu0 0.0
        %2733 = vmatpush1.msra.mxu0 0.0
        %2734 = vmatprep.subr.mxu0 0.0
        %2735 = vmatpush1.msra.mxu0 0.0
        %2736 = vmatprep.subr.mxu0 0.0
        %2737 = vmatpush1.msra.mxu0 0.0
        %2738 = vmatprep.subr.mxu0 0.0
        %2739 = vmatpush1.msra.mxu0 0.0
        %2740 = vmatprep.subr.mxu0 0.0
        %2741 = vmatpush1.msra.mxu0 0.0
        %2742 = vmatprep.subr.mxu0 0.0
        %2743 = vmatpush1.msra.mxu0 0.0
        %2744 = vmatprep.subr.mxu0 0.0
        %2745 = vmatpush1.msra.mxu0 0.0
        %2746 = vmatprep.subr.mxu0 0.0
        %2747 = vmatpush1.msra.mxu0 0.0
        %2748 = vmatprep.subr.mxu0 0.0
        %2749 = vmatpush1.msra.mxu0 0.0
        %2750 = vmatprep.subr.mxu0 0.0
        %2751 = vmatpush1.msra.mxu0 0.0
        %2752 = vmatprep.subr.mxu0 0.0
        %2753 = vmatpush1.msra.mxu0 0.0
        %2754 = vmatprep.subr.mxu0 0.0
        %2755 = vmatpush1.msra.mxu0 0.0
        %2756 = vmatprep.subr.mxu0 0.0
        %2757 = vmatpush1.msra.mxu0 0.0
        %2758 = vmatprep.subr.mxu0 0.0
        %2759 = vmatpush1.msra.mxu0 0.0
        %2760 = vmatprep.subr.mxu0 0.0
        %2761 = vmatpush1.msra.mxu0 0.0
        %2762 = vmatprep.subr.mxu0 0.0
        %2763 = vmatpush1.msra.mxu0 0.0
        %2764 = vmatprep.subr.mxu0 0.0
        %2765 = vmatpush1.msra.mxu0 0.0
        %2766 = vmatprep.subr.mxu0 0.0
        %2767 = vmatpush1.msra.mxu0 0.0
        %2768 = vmatprep.subr.mxu0 0.0
        %2769 = vmatpush1.msra.mxu0 0.0
        %2770 = vmatprep.subr.mxu0 0.0
        %2771 = vmatpush1.msra.mxu0 0.0
        %2772 = vmatprep.subr.mxu0 0.0
        %2773 = vmatpush1.msra.mxu0 0.0
        %2774 = vmatprep.subr.mxu0 0.0
        %2775 = vmatpush1.msra.mxu0 0.0
        %2776 = vmatprep.subr.mxu0 0.0
        %2777 = vmatpush1.msra.mxu0 0.0
        %2778 = vmatprep.subr.mxu0 0.0
        %2779 = vmatpush1.msra.mxu0 0.0
        %2780 = vmatprep.subr.mxu0 0.0
        %2781 = vmatpush1.msra.mxu0 0.0
        %2782 = vmatprep.subr.mxu0 0.0
        %2783 = vmatpush1.msra.mxu0 0.0
        %2784 = vmatprep.mubr.f32.mxu0 0.0
        %2785 = vmatmul.mubr.f32.gmra.mrb[0].mxu0 %v2718
        %v2786 = vpop.f32.mrb[0].mxu0
        %v2787 = vadd.f32 0.0, %v2786
        %v2788 = vpop.f32.mrb[0].mxu0
        %2789 = vdwg.mxu0
        %v2791 = vsel %vm2628, %v2704, 0
        %2793 = vmatprep.subr.mxu0 0.0
        %2794 = vmatpush1.msra.mxu0 %v1947
        %2795 = vmatprep.subr.mxu0 0.0
        %2796 = vmatpush1.msra.mxu0 0.0
        %2797 = vmatprep.subr.mxu0 0.0
        %2798 = vmatpush1.msra.mxu0 0.0
        %2799 = vmatprep.subr.mxu0 0.0
        %2800 = vmatpush1.msra.mxu0 0.0
        %2801 = vmatprep.subr.mxu0 0.0
        %2802 = vmatpush1.msra.mxu0 0.0
        %2803 = vmatprep.subr.mxu0 0.0
        %2804 = vmatpush1.msra.mxu0 0.0
        %2805 = vmatprep.subr.mxu0 0.0
        %2806 = vmatpush1.msra.mxu0 0.0
        %2807 = vmatprep.subr.mxu0 0.0
        %2808 = vmatpush1.msra.mxu0 0.0
        %2809 = vmatprep.subr.mxu0 0.0
        %2810 = vmatpush1.msra.mxu0 0.0
        %2811 = vmatprep.subr.mxu0 0.0
        %2812 = vmatpush1.msra.mxu0 0.0
        %2813 = vmatprep.subr.mxu0 0.0
        %2814 = vmatpush1.msra.mxu0 0.0
        %2815 = vmatprep.subr.mxu0 0.0
        %2816 = vmatpush1.msra.mxu0 0.0
        %2817 = vmatprep.subr.mxu0 0.0
        %2818 = vmatpush1.msra.mxu0 0.0
        %2819 = vmatprep.subr.mxu0 0.0
        %2820 = vmatpush1.msra.mxu0 0.0
        %2821 = vmatprep.subr.mxu0 0.0
        %2822 = vmatpush1.msra.mxu0 0.0
        %2823 = vmatprep.subr.mxu0 0.0
        %2824 = vmatpush1.msra.mxu0 0.0
        %2825 = vmatprep.subr.mxu0 0.0
        %2826 = vmatpush1.msra.mxu0 0.0
        %2827 = vmatprep.subr.mxu0 0.0
        %2828 = vmatpush1.msra.mxu0 0.0
        %2829 = vmatprep.subr.mxu0 0.0
        %2830 = vmatpush1.msra.mxu0 0.0
        %2831 = vmatprep.subr.mxu0 0.0
        %2832 = vmatpush1.msra.mxu0 0.0
        %2833 = vmatprep.subr.mxu0 0.0
        %2834 = vmatpush1.msra.mxu0 0.0
        %2835 = vmatprep.subr.mxu0 0.0
        %2836 = vmatpush1.msra.mxu0 0.0
        %2837 = vmatprep.subr.mxu0 0.0
        %2838 = vmatpush1.msra.mxu0 0.0
        %2839 = vmatprep.subr.mxu0 0.0
        %2840 = vmatpush1.msra.mxu0 0.0
        %2841 = vmatprep.subr.mxu0 0.0
        %2842 = vmatpush1.msra.mxu0 0.0
        %2843 = vmatprep.subr.mxu0 0.0
        %2844 = vmatpush1.msra.mxu0 0.0
        %2845 = vmatprep.subr.mxu0 0.0
        %2846 = vmatpush1.msra.mxu0 0.0
        %2847 = vmatprep.subr.mxu0 0.0
        %2848 = vmatpush1.msra.mxu0 0.0
        %2849 = vmatprep.subr.mxu0 0.0
        %2850 = vmatpush1.msra.mxu0 0.0
        %2851 = vmatprep.subr.mxu0 0.0
        %2852 = vmatpush1.msra.mxu0 0.0
        %2853 = vmatprep.subr.mxu0 0.0
        %2854 = vmatpush1.msra.mxu0 0.0
        %2855 = vmatprep.subr.mxu0 0.0
        %2856 = vmatpush1.msra.mxu0 0.0
        %2857 = vmatprep.mubr.f32.mxu0 0.0
        %2858 = vmatmul.mubr.f32.gmra.mrb[0].mxu0 %v2791
        %v2859 = vpop.f32.mrb[0].mxu0
        %v2860 = vadd.f32 0.0, %v2859
        %v2861 = vpop.f32.mrb[0].mxu0
        %2862 = vdwg.mxu0
        %v2864 = vsel %vm2628, %v2706, 0
        %2866 = vmatprep.subr.mxu0 0.0
        %2867 = vmatpush1.msra.mxu0 %v1948
        %2868 = vmatprep.subr.mxu0 0.0
        %2869 = vmatpush1.msra.mxu0 0.0
        %2870 = vmatprep.subr.mxu0 0.0
        %2871 = vmatpush1.msra.mxu0 0.0
        %2872 = vmatprep.subr.mxu0 0.0
        %2873 = vmatpush1.msra.mxu0 0.0
        %2874 = vmatprep.subr.mxu0 0.0
        %2875 = vmatpush1.msra.mxu0 0.0
        %2876 = vmatprep.subr.mxu0 0.0
        %2877 = vmatpush1.msra.mxu0 0.0
        %2878 = vmatprep.subr.mxu0 0.0
        %2879 = vmatpush1.msra.mxu0 0.0
        %2880 = vmatprep.subr.mxu0 0.0
        %2881 = vmatpush1.msra.mxu0 0.0
        %2882 = vmatprep.subr.mxu0 0.0
        %2883 = vmatpush1.msra.mxu0 0.0
        %2884 = vmatprep.subr.mxu0 0.0
        %2885 = vmatpush1.msra.mxu0 0.0
        %2886 = vmatprep.subr.mxu0 0.0
        %2887 = vmatpush1.msra.mxu0 0.0
        %2888 = vmatprep.subr.mxu0 0.0
        %2889 = vmatpush1.msra.mxu0 0.0
        %2890 = vmatprep.subr.mxu0 0.0
        %2891 = vmatpush1.msra.mxu0 0.0
        %2892 = vmatprep.subr.mxu0 0.0
        %2893 = vmatpush1.msra.mxu0 0.0
        %2894 = vmatprep.subr.mxu0 0.0
        %2895 = vmatpush1.msra.mxu0 0.0
        %2896 = vmatprep.subr.mxu0 0.0
        %2897 = vmatpush1.msra.mxu0 0.0
        %2898 = vmatprep.subr.mxu0 0.0
        %2899 = vmatpush1.msra.mxu0 0.0
        %2900 = vmatprep.subr.mxu0 0.0
        %2901 = vmatpush1.msra.mxu0 0.0
        %2902 = vmatprep.subr.mxu0 0.0
        %2903 = vmatpush1.msra.mxu0 0.0
        %2904 = vmatprep.subr.mxu0 0.0
        %2905 = vmatpush1.msra.mxu0 0.0
        %2906 = vmatprep.subr.mxu0 0.0
        %2907 = vmatpush1.msra.mxu0 0.0
        %2908 = vmatprep.subr.mxu0 0.0
        %2909 = vmatpush1.msra.mxu0 0.0
        %2910 = vmatprep.subr.mxu0 0.0
        %2911 = vmatpush1.msra.mxu0 0.0
        %2912 = vmatprep.subr.mxu0 0.0
        %2913 = vmatpush1.msra.mxu0 0.0
        %2914 = vmatprep.subr.mxu0 0.0
        %2915 = vmatpush1.msra.mxu0 0.0
        %2916 = vmatprep.subr.mxu0 0.0
        %2917 = vmatpush1.msra.mxu0 0.0
        %2918 = vmatprep.subr.mxu0 0.0
        %2919 = vmatpush1.msra.mxu0 0.0
        %2920 = vmatprep.subr.mxu0 0.0
        %2921 = vmatpush1.msra.mxu0 0.0
        %2922 = vmatprep.subr.mxu0 0.0
        %2923 = vmatpush1.msra.mxu0 0.0
        %2924 = vmatprep.subr.mxu0 0.0
        %2925 = vmatpush1.msra.mxu0 0.0
        %2926 = vmatprep.subr.mxu0 0.0
        %2927 = vmatpush1.msra.mxu0 0.0
        %2928 = vmatprep.subr.mxu0 0.0
        %2929 = vmatpush1.msra.mxu0 0.0
        %2930 = vmatprep.mubr.f32.mxu0 0.0
        %2931 = vmatmul.mubr.f32.gmra.mrb[0].mxu0 %v2864
        %v2932 = vpop.f32.mrb[0].mxu0
        %v2933 = vadd.f32 0.0, %v2932
        %v2934 = vpop.f32.mrb[0].mxu0
        %2935 = vdwg.mxu0
        %v2937 = vsel %vm2628, %v2708, 0
        %2939 = vmatprep.subr.mxu0 0.0
        %2940 = vmatpush1.msra.mxu0 %v1949
        %2941 = vmatprep.subr.mxu0 0.0
        %2942 = vmatpush1.msra.mxu0 0.0
        %2943 = vmatprep.subr.mxu0 0.0
        %2944 = vmatpush1.msra.mxu0 0.0
        %2945 = vmatprep.subr.mxu0 0.0
        %2946 = vmatpush1.msra.mxu0 0.0
        %2947 = vmatprep.subr.mxu0 0.0
        %2948 = vmatpush1.msra.mxu0 0.0
        %2949 = vmatprep.subr.mxu0 0.0
        %2950 = vmatpush1.msra.mxu0 0.0
        %2951 = vmatprep.subr.mxu0 0.0
        %2952 = vmatpush1.msra.mxu0 0.0
        %2953 = vmatprep.subr.mxu0 0.0
        %2954 = vmatpush1.msra.mxu0 0.0
        %2955 = vmatprep.subr.mxu0 0.0
        %2956 = vmatpush1.msra.mxu0 0.0
        %2957 = vmatprep.subr.mxu0 0.0
        %2958 = vmatpush1.msra.mxu0 0.0
        %2959 = vmatprep.subr.mxu0 0.0
        %2960 = vmatpush1.msra.mxu0 0.0
        %2961 = vmatprep.subr.mxu0 0.0
        %2962 = vmatpush1.msra.mxu0 0.0
        %2963 = vmatprep.subr.mxu0 0.0
        %2964 = vmatpush1.msra.mxu0 0.0
        %2965 = vmatprep.subr.mxu0 0.0
        %2966 = vmatpush1.msra.mxu0 0.0
        %2967 = vmatprep.subr.mxu0 0.0
        %2968 = vmatpush1.msra.mxu0 0.0
        %2969 = vmatprep.subr.mxu0 0.0
        %2970 = vmatpush1.msra.mxu0 0.0
        %2971 = vmatprep.subr.mxu0 0.0
        %2972 = vmatpush1.msra.mxu0 0.0
        %2973 = vmatprep.subr.mxu0 0.0
        %2974 = vmatpush1.msra.mxu0 0.0
        %2975 = vmatprep.subr.mxu0 0.0
        %2976 = vmatpush1.msra.mxu0 0.0
        %2977 = vmatprep.subr.mxu0 0.0
        %2978 = vmatpush1.msra.mxu0 0.0
        %2979 = vmatprep.subr.mxu0 0.0
        %2980 = vmatpush1.msra.mxu0 0.0
        %2981 = vmatprep.subr.mxu0 0.0
        %2982 = vmatpush1.msra.mxu0 0.0
        %2983 = vmatprep.subr.mxu0 0.0
        %2984 = vmatpush1.msra.mxu0 0.0
        %2985 = vmatprep.subr.mxu0 0.0
        %2986 = vmatpush1.msra.mxu0 0.0
        %2987 = vmatprep.subr.mxu0 0.0
        %2988 = vmatpush1.msra.mxu0 0.0
        %2989 = vmatprep.subr.mxu0 0.0
        %2990 = vmatpush1.msra.mxu0 0.0
        %2991 = vmatprep.subr.mxu0 0.0
        %2992 = vmatpush1.msra.mxu0 0.0
        %2993 = vmatprep.subr.mxu0 0.0
        %2994 = vmatpush1.msra.mxu0 0.0
        %2995 = vmatprep.subr.mxu0 0.0
        %2996 = vmatpush1.msra.mxu0 0.0
        %2997 = vmatprep.subr.mxu0 0.0
        %2998 = vmatpush1.msra.mxu0 0.0
        %2999 = vmatprep.subr.mxu0 0.0
        %3000 = vmatpush1.msra.mxu0 0.0
        %3001 = vmatprep.subr.mxu0 0.0
        %3002 = vmatpush1.msra.mxu0 0.0
        %3003 = vmatprep.mubr.f32.mxu0 0.0
        %3004 = vmatmul.mubr.f32.gmra.mrb[0].mxu0 %v2937
        %v3005 = vpop.f32.mrb[0].mxu0
        %v3006 = vadd.f32 0.0, %v3005
        %v3007 = vpop.f32.mrb[0].mxu0
        %3008 = vdwg.mxu0
        %v3010 = vsel %vm2628, %v2710, 0
        %3012 = vmatprep.subr.mxu0 0.0
        %3013 = vmatpush1.msra.mxu0 %v2014
        %3014 = vmatprep.subr.mxu0 0.0
        %3015 = vmatpush1.msra.mxu0 0.0
        %3016 = vmatprep.subr.mxu0 0.0
        %3017 = vmatpush1.msra.mxu0 0.0
        %3018 = vmatprep.subr.mxu0 0.0
        %3019 = vmatpush1.msra.mxu0 0.0
        %3020 = vmatprep.subr.mxu0 0.0
        %3021 = vmatpush1.msra.mxu0 0.0
        %3022 = vmatprep.subr.mxu0 0.0
        %3023 = vmatpush1.msra.mxu0 0.0
        %3024 = vmatprep.subr.mxu0 0.0
        %3025 = vmatpush1.msra.mxu0 0.0
        %3026 = vmatprep.subr.mxu0 0.0
        %3027 = vmatpush1.msra.mxu0 0.0
        %3028 = vmatprep.subr.mxu0 0.0
        %3029 = vmatpush1.msra.mxu0 0.0
        %3030 = vmatprep.subr.mxu0 0.0
        %3031 = vmatpush1.msra.mxu0 0.0
        %3032 = vmatprep.subr.mxu0 0.0
        %3033 = vmatpush1.msra.mxu0 0.0
        %3034 = vmatprep.subr.mxu0 0.0
        %3035 = vmatpush1.msra.mxu0 0.0
        %3036 = vmatprep.subr.mxu0 0.0
        %3037 = vmatpush1.msra.mxu0 0.0
        %3038 = vmatprep.subr.mxu0 0.0
        %3039 = vmatpush1.msra.mxu0 0.0
        %3040 = vmatprep.subr.mxu0 0.0
        %3041 = vmatpush1.msra.mxu0 0.0
        %3042 = vmatprep.subr.mxu0 0.0
        %3043 = vmatpush1.msra.mxu0 0.0
        %3044 = vmatprep.subr.mxu0 0.0
        %3045 = vmatpush1.msra.mxu0 0.0
        %3046 = vmatprep.subr.mxu0 0.0
        %3047 = vmatpush1.msra.mxu0 0.0
        %3048 = vmatprep.subr.mxu0 0.0
        %3049 = vmatpush1.msra.mxu0 0.0
        %3050 = vmatprep.subr.mxu0 0.0
        %3051 = vmatpush1.msra.mxu0 0.0
        %3052 = vmatprep.subr.mxu0 0.0
        %3053 = vmatpush1.msra.mxu0 0.0
        %3054 = vmatprep.subr.mxu0 0.0
        %3055 = vmatpush1.msra.mxu0 0.0
        %3056 = vmatprep.subr.mxu0 0.0
        %3057 = vmatpush1.msra.mxu0 0.0
        %3058 = vmatprep.subr.mxu0 0.0
        %3059 = vmatpush1.msra.mxu0 0.0
        %3060 = vmatprep.subr.mxu0 0.0
        %3061 = vmatpush1.msra.mxu0 0.0
        %3062 = vmatprep.subr.mxu0 0.0
        %3063 = vmatpush1.msra.mxu0 0.0
        %3064 = vmatprep.subr.mxu0 0.0
        %3065 = vmatpush1.msra.mxu0 0.0
        %3066 = vmatprep.subr.mxu0 0.0
        %3067 = vmatpush1.msra.mxu0 0.0
        %3068 = vmatprep.subr.mxu0 0.0
        %3069 = vmatpush1.msra.mxu0 0.0
        %3070 = vmatprep.subr.mxu0 0.0
        %3071 = vmatpush1.msra.mxu0 0.0
        %3072 = vmatprep.subr.mxu0 0.0
        %3073 = vmatpush1.msra.mxu0 0.0
        %3074 = vmatprep.subr.mxu0 0.0
        %3075 = vmatpush1.msra.mxu0 0.0
        %3076 = vmatprep.mubr.f32.mxu0 0.0
        %3077 = vmatmul.mubr.f32.gmra.mrb[0].mxu0 %v3010
        %v3078 = vpop.f32.mrb[0].mxu0
        %v3079 = vadd.f32 0.0, %v3078
        %v3080 = vpop.f32.mrb[0].mxu0
        %3081 = vdwg.mxu0
        %v3083 = vsel %vm2628, %v2712, 0
        %3085 = vmatprep.subr.mxu0 0.0
        %3086 = vmatpush1.msra.mxu0 %v2015
        %3087 = vmatprep.subr.mxu0 0.0
        %3088 = vmatpush1.msra.mxu0 0.0
        %3089 = vmatprep.subr.mxu0 0.0
        %3090 = vmatpush1.msra.mxu0 0.0
        %3091 = vmatprep.subr.mxu0 0.0
        %3092 = vmatpush1.msra.mxu0 0.0
        %3093 = vmatprep.subr.mxu0 0.0
        %3094 = vmatpush1.msra.mxu0 0.0
        %3095 = vmatprep.subr.mxu0 0.0
        %3096 = vmatpush1.msra.mxu0 0.0
        %3097 = vmatprep.subr.mxu0 0.0
        %3098 = vmatpush1.msra.mxu0 0.0
        %3099 = vmatprep.subr.mxu0 0.0
        %3100 = vmatpush1.msra.mxu0 0.0
        %3101 = vmatprep.subr.mxu0 0.0
        %3102 = vmatpush1.msra.mxu0 0.0
        %3103 = vmatprep.subr.mxu0 0.0
        %3104 = vmatpush1.msra.mxu0 0.0
        %3105 = vmatprep.subr.mxu0 0.0
        %3106 = vmatpush1.msra.mxu0 0.0
        %3107 = vmatprep.subr.mxu0 0.0
        %3108 = vmatpush1.msra.mxu0 0.0
        %3109 = vmatprep.subr.mxu0 0.0
        %3110 = vmatpush1.msra.mxu0 0.0
        %3111 = vmatprep.subr.mxu0 0.0
        %3112 = vmatpush1.msra.mxu0 0.0
        %3113 = vmatprep.subr.mxu0 0.0
        %3114 = vmatpush1.msra.mxu0 0.0
        %3115 = vmatprep.subr.mxu0 0.0
        %3116 = vmatpush1.msra.mxu0 0.0
        %3117 = vmatprep.subr.mxu0 0.0
        %3118 = vmatpush1.msra.mxu0 0.0
        %3119 = vmatprep.subr.mxu0 0.0
        %3120 = vmatpush1.msra.mxu0 0.0
        %3121 = vmatprep.subr.mxu0 0.0
        %3122 = vmatpush1.msra.mxu0 0.0
        %3123 = vmatprep.subr.mxu0 0.0
        %3124 = vmatpush1.msra.mxu0 0.0
        %3125 = vmatprep.subr.mxu0 0.0
        %3126 = vmatpush1.msra.mxu0 0.0
        %3127 = vmatprep.subr.mxu0 0.0
        %3128 = vmatpush1.msra.mxu0 0.0
        %3129 = vmatprep.subr.mxu0 0.0
        %3130 = vmatpush1.msra.mxu0 0.0
        %3131 = vmatprep.subr.mxu0 0.0
        %3132 = vmatpush1.msra.mxu0 0.0
        %3133 = vmatprep.subr.mxu0 0.0
        %3134 = vmatpush1.msra.mxu0 0.0
        %3135 = vmatprep.subr.mxu0 0.0
        %3136 = vmatpush1.msra.mxu0 0.0
        %3137 = vmatprep.subr.mxu0 0.0
        %3138 = vmatpush1.msra.mxu0 0.0
        %3139 = vmatprep.subr.mxu0 0.0
        %3140 = vmatpush1.msra.mxu0 0.0
        %3141 = vmatprep.subr.mxu0 0.0
        %3142 = vmatpush1.msra.mxu0 0.0
        %3143 = vmatprep.subr.mxu0 0.0
        %3144 = vmatpush1.msra.mxu0 0.0
        %3145 = vmatprep.subr.mxu0 0.0
        %3146 = vmatpush1.msra.mxu0 0.0
        %3147 = vmatprep.subr.mxu0 0.0
        %3148 = vmatpush1.msra.mxu0 0.0
        %3149 = vmatprep.mubr.f32.mxu0 0.0
        %3150 = vmatmul.mubr.f32.gmra.mrb[0].mxu0 %v3083
        %v3151 = vpop.f32.mrb[0].mxu0
        %v3152 = vadd.f32 0.0, %v3151
        %v3153 = vpop.f32.mrb[0].mxu0
        %3154 = vdwg.mxu0
        %v3156 = vsel %vm2628, %v2714, 0
        %3158 = vmatprep.subr.mxu0 0.0
        %3159 = vmatpush1.msra.mxu0 %v2016
        %3160 = vmatprep.subr.mxu0 0.0
        %3161 = vmatpush1.msra.mxu0 0.0
        %3162 = vmatprep.subr.mxu0 0.0
        %3163 = vmatpush1.msra.mxu0 0.0
        %3164 = vmatprep.subr.mxu0 0.0
        %3165 = vmatpush1.msra.mxu0 0.0
        %3166 = vmatprep.subr.mxu0 0.0
        %3167 = vmatpush1.msra.mxu0 0.0
        %3168 = vmatprep.subr.mxu0 0.0
        %3169 = vmatpush1.msra.mxu0 0.0
        %3170 = vmatprep.subr.mxu0 0.0
        %3171 = vmatpush1.msra.mxu0 0.0
        %3172 = vmatprep.subr.mxu0 0.0
        %3173 = vmatpush1.msra.mxu0 0.0
        %3174 = vmatprep.subr.mxu0 0.0
        %3175 = vmatpush1.msra.mxu0 0.0
        %3176 = vmatprep.subr.mxu0 0.0
        %3177 = vmatpush1.msra.mxu0 0.0
        %3178 = vmatprep.subr.mxu0 0.0
        %3179 = vmatpush1.msra.mxu0 0.0
        %3180 = vmatprep.subr.mxu0 0.0
        %3181 = vmatpush1.msra.mxu0 0.0
        %3182 = vmatprep.subr.mxu0 0.0
        %3183 = vmatpush1.msra.mxu0 0.0
        %3184 = vmatprep.subr.mxu0 0.0
        %3185 = vmatpush1.msra.mxu0 0.0
        %3186 = vmatprep.subr.mxu0 0.0
        %3187 = vmatpush1.msra.mxu0 0.0
        %3188 = vmatprep.subr.mxu0 0.0
        %3189 = vmatpush1.msra.mxu0 0.0
        %3190 = vmatprep.subr.mxu0 0.0
        %3191 = vmatpush1.msra.mxu0 0.0
        %3192 = vmatprep.subr.mxu0 0.0
        %3193 = vmatpush1.msra.mxu0 0.0
        %3194 = vmatprep.subr.mxu0 0.0
        %3195 = vmatpush1.msra.mxu0 0.0
        %3196 = vmatprep.subr.mxu0 0.0
        %3197 = vmatpush1.msra.mxu0 0.0
        %3198 = vmatprep.subr.mxu0 0.0
        %3199 = vmatpush1.msra.mxu0 0.0
        %3200 = vmatprep.subr.mxu0 0.0
        %3201 = vmatpush1.msra.mxu0 0.0
        %3202 = vmatprep.subr.mxu0 0.0
        %3203 = vmatpush1.msra.mxu0 0.0
        %3204 = vmatprep.subr.mxu0 0.0
        %3205 = vmatpush1.msra.mxu0 0.0
        %3206 = vmatprep.subr.mxu0 0.0
        %3207 = vmatpush1.msra.mxu0 0.0
        %3208 = vmatprep.subr.mxu0 0.0
        %3209 = vmatpush1.msra.mxu0 0.0
        %3210 = vmatprep.subr.mxu0 0.0
        %3211 = vmatpush1.msra.mxu0 0.0
        %3212 = vmatprep.subr.mxu0 0.0
        %3213 = vmatpush1.msra.mxu0 0.0
        %3214 = vmatprep.subr.mxu0 0.0
        %3215 = vmatpush1.msra.mxu0 0.0
        %3216 = vmatprep.subr.mxu0 0.0
        %3217 = vmatpush1.msra.mxu0 0.0
        %3218 = vmatprep.subr.mxu0 0.0
        %3219 = vmatpush1.msra.mxu0 0.0
        %3220 = vmatprep.subr.mxu0 0.0
        %3221 = vmatpush1.msra.mxu0 0.0
        %3222 = vmatprep.mubr.f32.mxu0 0.0
        %3223 = vmatmul.mubr.f32.gmra.mrb[0].mxu0 %v3156
        %v3224 = vpop.f32.mrb[0].mxu0
        %v3225 = vadd.f32 0.0, %v3224
        %v3226 = vpop.f32.mrb[0].mxu0
        %3227 = vdwg.mxu0
        %v3229 = vsel %vm2628, %v2716, 0
        %3231 = vmatprep.subr.mxu0 0.0
        %3232 = vmatpush1.msra.mxu0 %v2017
        %3233 = vmatprep.subr.mxu0 0.0
        %3234 = vmatpush1.msra.mxu0 0.0
        %3235 = vmatprep.subr.mxu0 0.0
        %3236 = vmatpush1.msra.mxu0 0.0
        %3237 = vmatprep.subr.mxu0 0.0
        %3238 = vmatpush1.msra.mxu0 0.0
        %3239 = vmatprep.subr.mxu0 0.0
        %3240 = vmatpush1.msra.mxu0 0.0
        %3241 = vmatprep.subr.mxu0 0.0
        %3242 = vmatpush1.msra.mxu0 0.0
        %3243 = vmatprep.subr.mxu0 0.0
        %3244 = vmatpush1.msra.mxu0 0.0
        %3245 = vmatprep.subr.mxu0 0.0
        %3246 = vmatpush1.msra.mxu0 0.0
        %3247 = vmatprep.subr.mxu0 0.0
        %3248 = vmatpush1.msra.mxu0 0.0
        %3249 = vmatprep.subr.mxu0 0.0
        %3250 = vmatpush1.msra.mxu0 0.0
        %3251 = vmatprep.subr.mxu0 0.0
        %3252 = vmatpush1.msra.mxu0 0.0
        %3253 = vmatprep.subr.mxu0 0.0
        %3254 = vmatpush1.msra.mxu0 0.0
        %3255 = vmatprep.subr.mxu0 0.0
        %3256 = vmatpush1.msra.mxu0 0.0
        %3257 = vmatprep.subr.mxu0 0.0
        %3258 = vmatpush1.msra.mxu0 0.0
        %3259 = vmatprep.subr.mxu0 0.0
        %3260 = vmatpush1.msra.mxu0 0.0
        %3261 = vmatprep.subr.mxu0 0.0
        %3262 = vmatpush1.msra.mxu0 0.0
        %3263 = vmatprep.subr.mxu0 0.0
        %3264 = vmatpush1.msra.mxu0 0.0
        %3265 = vmatprep.subr.mxu0 0.0
        %3266 = vmatpush1.msra.mxu0 0.0
        %3267 = vmatprep.subr.mxu0 0.0
        %3268 = vmatpush1.msra.mxu0 0.0
        %3269 = vmatprep.subr.mxu0 0.0
        %3270 = vmatpush1.msra.mxu0 0.0
        %3271 = vmatprep.subr.mxu0 0.0
        %3272 = vmatpush1.msra.mxu0 0.0
        %3273 = vmatprep.subr.mxu0 0.0
        %3274 = vmatpush1.msra.mxu0 0.0
        %3275 = vmatprep.subr.mxu0 0.0
        %3276 = vmatpush1.msra.mxu0 0.0
        %3277 = vmatprep.subr.mxu0 0.0
        %3278 = vmatpush1.msra.mxu0 0.0
        %3279 = vmatprep.subr.mxu0 0.0
        %3280 = vmatpush1.msra.mxu0 0.0
        %3281 = vmatprep.subr.mxu0 0.0
        %3282 = vmatpush1.msra.mxu0 0.0
        %3283 = vmatprep.subr.mxu0 0.0
        %3284 = vmatpush1.msra.mxu0 0.0
        %3285 = vmatprep.subr.mxu0 0.0
        %3286 = vmatpush1.msra.mxu0 0.0
        %3287 = vmatprep.subr.mxu0 0.0
        %3288 = vmatpush1.msra.mxu0 0.0
        %3289 = vmatprep.subr.mxu0 0.0
        %3290 = vmatpush1.msra.mxu0 0.0
        %3291 = vmatprep.subr.mxu0 0.0
        %3292 = vmatpush1.msra.mxu0 0.0
        %3293 = vmatprep.subr.mxu0 0.0
        %3294 = vmatpush1.msra.mxu0 0.0
        %3295 = vmatprep.mubr.f32.mxu0 0.0
        %3296 = vmatmul.mubr.f32.gmra.mrb[0].mxu0 %v3229
        %v3297 = vpop.f32.mrb[0].mxu0
        %v3298 = vadd.f32 0.0, %v3297
        %v3299 = vpop.f32.mrb[0].mxu0
        %3300 = vdwg.mxu0
        %v3301 = vcombine.low %v2787, %v2933
        %v3302 = vcombine.high %v2787, %v2933
        %v3304 = vunpack.c.l.s4 1983009808
        %v3305 = vunpack.c.0.s8 %v3304
        %v3306 = vlaneseq
        %v3307 = vshrl.u32 %v3306, 7
        %v3308 = vsub.s32 %v3305, %v3307
        %v3309 = vrot.slane %v3301, %v3308
        %v3311 = vunpack.c.l.s4 1983009808
        %v3312 = vunpack.c.0.s8 %v3311
        %v3313 = vlaneseq
        %v3314 = vshrl.u32 %v3313, 7
        %v3315 = vsub.s32 %v3312, %v3314
        %v3316 = vrot.slane %v3302, %v3315
        %v3317 = vcombine.low %v2860, %v3006
        %v3318 = vcombine.high %v2860, %v3006
        %v3320 = vunpack.c.l.s4 1983009808
        %v3321 = vunpack.c.0.s8 %v3320
        %v3322 = vlaneseq
        %v3323 = vshrl.u32 %v3322, 7
        %v3324 = vsub.s32 %v3321, %v3323
        %v3325 = vrot.slane %v3317, %v3324
        %v3327 = vunpack.c.l.s4 1983009808
        %v3328 = vunpack.c.0.s8 %v3327
        %v3329 = vlaneseq
        %v3330 = vshrl.u32 %v3329, 7
        %v3331 = vsub.s32 %v3328, %v3330
        %v3332 = vrot.slane %v3318, %v3331
        %v3333 = vcombine.low %v3309, %v3325
        %v3334 = vcombine.high %v3309, %v3325
        %v3336 = vunpack.c.l.s4 1934713408
        %v3337 = vunpack.c.0.s8 %v3336
        %v3338 = vlaneseq
        %v3339 = vshrl.u32 %v3338, 7
        %v3340 = vsub.s32 %v3337, %v3339
        %v3341 = vrot.slane %v3333, %v3340
        %v3343 = vunpack.c.l.s4 1934713408
        %v3344 = vunpack.c.0.s8 %v3343
        %v3345 = vlaneseq
        %v3346 = vshrl.u32 %v3345, 7
        %v3347 = vsub.s32 %v3344, %v3346
        %v3348 = vrot.slane %v3334, %v3347
        %v3349 = vcombine.low %v3316, %v3332
        %v3350 = vcombine.high %v3316, %v3332
        %v3352 = vunpack.c.l.s4 1934713408
        %v3353 = vunpack.c.0.s8 %v3352
        %v3354 = vlaneseq
        %v3355 = vshrl.u32 %v3354, 7
        %v3356 = vsub.s32 %v3353, %v3355
        %v3357 = vrot.slane %v3349, %v3356
        %v3359 = vunpack.c.l.s4 1934713408
        %v3360 = vunpack.c.0.s8 %v3359
        %v3361 = vlaneseq
        %v3362 = vshrl.u32 %v3361, 7
        %v3363 = vsub.s32 %v3360, %v3362
        %v3364 = vrot.slane %v3350, %v3363
        %v3365 = vcombine.high %v3341, 0.0
        %v3366 = vcombine.high %v3348, 0.0
        %v3367 = vcombine.high %v3357, 0.0
        %v3368 = vcombine.high %v3364, 0.0
        %v3369 = vcombine.low %v3079, %v3225
        %v3370 = vcombine.high %v3079, %v3225
        %v3372 = vunpack.c.l.s4 1983009808
        %v3373 = vunpack.c.0.s8 %v3372
        %v3374 = vlaneseq
        %v3375 = vshrl.u32 %v3374, 7
        %v3376 = vsub.s32 %v3373, %v3375
        %v3377 = vrot.slane %v3369, %v3376
        %v3379 = vunpack.c.l.s4 1983009808
        %v3380 = vunpack.c.0.s8 %v3379
        %v3381 = vlaneseq
        %v3382 = vshrl.u32 %v3381, 7
        %v3383 = vsub.s32 %v3380, %v3382
        %v3384 = vrot.slane %v3370, %v3383
        %v3385 = vcombine.low %v3152, %v3298
        %v3386 = vcombine.high %v3152, %v3298
        %v3388 = vunpack.c.l.s4 1983009808
        %v3389 = vunpack.c.0.s8 %v3388
        %v3390 = vlaneseq
        %v3391 = vshrl.u32 %v3390, 7
        %v3392 = vsub.s32 %v3389, %v3391
        %v3393 = vrot.slane %v3385, %v3392
        %v3395 = vunpack.c.l.s4 1983009808
        %v3396 = vunpack.c.0.s8 %v3395
        %v3397 = vlaneseq
        %v3398 = vshrl.u32 %v3397, 7
        %v3399 = vsub.s32 %v3396, %v3398
        %v3400 = vrot.slane %v3386, %v3399
        %v3401 = vcombine.low %v3377, %v3393
        %v3402 = vcombine.high %v3377, %v3393
        %v3404 = vunpack.c.l.s4 1934713408
        %v3405 = vunpack.c.0.s8 %v3404
        %v3406 = vlaneseq
        %v3407 = vshrl.u32 %v3406, 7
        %v3408 = vsub.s32 %v3405, %v3407
        %v3409 = vrot.slane %v3401, %v3408
        %v3411 = vunpack.c.l.s4 1934713408
        %v3412 = vunpack.c.0.s8 %v3411
        %v3413 = vlaneseq
        %v3414 = vshrl.u32 %v3413, 7
        %v3415 = vsub.s32 %v3412, %v3414
        %v3416 = vrot.slane %v3402, %v3415
        %v3417 = vcombine.low %v3384, %v3400
        %v3418 = vcombine.high %v3384, %v3400
        %v3420 = vunpack.c.l.s4 1934713408
        %v3421 = vunpack.c.0.s8 %v3420
        %v3422 = vlaneseq
        %v3423 = vshrl.u32 %v3422, 7
        %v3424 = vsub.s32 %v3421, %v3423
        %v3425 = vrot.slane %v3417, %v3424
        %v3427 = vunpack.c.l.s4 1934713408
        %v3428 = vunpack.c.0.s8 %v3427
        %v3429 = vlaneseq
        %v3430 = vshrl.u32 %v3429, 7
        %v3431 = vsub.s32 %v3428, %v3430
        %v3432 = vrot.slane %v3418, %v3431
        %v3433 = vcombine.high %v3409, 0.0
        %v3434 = vcombine.high %v3416, 0.0
        %v3435 = vcombine.high %v3425, 0.0
        %v3436 = vcombine.high %v3432, 0.0
        %v3437 = vcombine.low %v3341, %v3348
        %v3439 = vunpack.c.l.s4 1983009808
        %v3440 = vunpack.c.0.s8 %v3439
        %v3441 = vlaneseq
        %v3442 = vshrl.u32 %v3441, 7
        %v3443 = vsub.s32 %v3440, %v3442
        %v3444 = vrot.slane %v3437, %v3443
        %v3445 = vcombine.low %v3365, %v3366
        %v3447 = vunpack.c.l.s4 1983009808
        %v3448 = vunpack.c.0.s8 %v3447
        %v3449 = vlaneseq
        %v3450 = vshrl.u32 %v3449, 7
        %v3451 = vsub.s32 %v3448, %v3450
        %v3452 = vrot.slane %v3445, %v3451
        %v3453 = vcombine.low %v3357, %v3364
        %v3455 = vunpack.c.l.s4 1983009808
        %v3456 = vunpack.c.0.s8 %v3455
        %v3457 = vlaneseq
        %v3458 = vshrl.u32 %v3457, 7
        %v3459 = vsub.s32 %v3456, %v3458
        %v3460 = vrot.slane %v3453, %v3459
        %v3461 = vcombine.low %v3367, %v3368
        %v3463 = vunpack.c.l.s4 1983009808
        %v3464 = vunpack.c.0.s8 %v3463
        %v3465 = vlaneseq
        %v3466 = vshrl.u32 %v3465, 7
        %v3467 = vsub.s32 %v3464, %v3466
        %v3468 = vrot.slane %v3461, %v3467
        %v3469 = vcombine.low %v3444, %v3452
        %v3470 = vcombine.high %v3444, %v3452
        %v3472 = vunpack.c.l.s4 1934713408
        %v3473 = vunpack.c.0.s8 %v3472
        %v3474 = vlaneseq
        %v3475 = vshrl.u32 %v3474, 7
        %v3476 = vsub.s32 %v3473, %v3475
        %v3477 = vrot.slane %v3469, %v3476
        %v3479 = vunpack.c.l.s4 1934713408
        %v3480 = vunpack.c.0.s8 %v3479
        %v3481 = vlaneseq
        %v3482 = vshrl.u32 %v3481, 7
        %v3483 = vsub.s32 %v3480, %v3482
        %v3484 = vrot.slane %v3470, %v3483
        %v3485 = vcombine.low %v3460, %v3468
        %v3486 = vcombine.high %v3460, %v3468
        %v3488 = vunpack.c.l.s4 1934713408
        %v3489 = vunpack.c.0.s8 %v3488
        %v3490 = vlaneseq
        %v3491 = vshrl.u32 %v3490, 7
        %v3492 = vsub.s32 %v3489, %v3491
        %v3493 = vrot.slane %v3485, %v3492
        %v3495 = vunpack.c.l.s4 1934713408
        %v3496 = vunpack.c.0.s8 %v3495
        %v3497 = vlaneseq
        %v3498 = vshrl.u32 %v3497, 7
        %v3499 = vsub.s32 %v3496, %v3498
        %v3500 = vrot.slane %v3486, %v3499
        %v3501 = vcombine.low %v3477, %v3493
        %v3502 = vcombine.high %v3477, %v3493
        %v3503 = vcombine.low %v3484, %v3500
        %v3504 = vcombine.high %v3484, %v3500
        %v3505 = vcombine.low %v3409, %v3416
        %v3507 = vunpack.c.l.s4 1983009808
        %v3508 = vunpack.c.0.s8 %v3507
        %v3509 = vlaneseq
        %v3510 = vshrl.u32 %v3509, 7
        %v3511 = vsub.s32 %v3508, %v3510
        %v3512 = vrot.slane %v3505, %v3511
        %v3513 = vcombine.low %v3433, %v3434
        %v3515 = vunpack.c.l.s4 1983009808
        %v3516 = vunpack.c.0.s8 %v3515
        %v3517 = vlaneseq
        %v3518 = vshrl.u32 %v3517, 7
        %v3519 = vsub.s32 %v3516, %v3518
        %v3520 = vrot.slane %v3513, %v3519
        %v3521 = vcombine.low %v3425, %v3432
        %v3523 = vunpack.c.l.s4 1983009808
        %v3524 = vunpack.c.0.s8 %v3523
        %v3525 = vlaneseq
        %v3526 = vshrl.u32 %v3525, 7
        %v3527 = vsub.s32 %v3524, %v3526
        %v3528 = vrot.slane %v3521, %v3527
        %v3529 = vcombine.low %v3435, %v3436
        %v3531 = vunpack.c.l.s4 1983009808
        %v3532 = vunpack.c.0.s8 %v3531
        %v3533 = vlaneseq
        %v3534 = vshrl.u32 %v3533, 7
        %v3535 = vsub.s32 %v3532, %v3534
        %v3536 = vrot.slane %v3529, %v3535
        %v3537 = vcombine.low %v3512, %v3520
        %v3538 = vcombine.high %v3512, %v3520
        %v3540 = vunpack.c.l.s4 1934713408
        %v3541 = vunpack.c.0.s8 %v3540
        %v3542 = vlaneseq
        %v3543 = vshrl.u32 %v3542, 7
        %v3544 = vsub.s32 %v3541, %v3543
        %v3545 = vrot.slane %v3537, %v3544
        %v3547 = vunpack.c.l.s4 1934713408
        %v3548 = vunpack.c.0.s8 %v3547
        %v3549 = vlaneseq
        %v3550 = vshrl.u32 %v3549, 7
        %v3551 = vsub.s32 %v3548, %v3550
        %v3552 = vrot.slane %v3538, %v3551
        %v3553 = vcombine.low %v3528, %v3536
        %v3554 = vcombine.high %v3528, %v3536
        %v3556 = vunpack.c.l.s4 1934713408
        %v3557 = vunpack.c.0.s8 %v3556
        %v3558 = vlaneseq
        %v3559 = vshrl.u32 %v3558, 7
        %v3560 = vsub.s32 %v3557, %v3559
        %v3561 = vrot.slane %v3553, %v3560
        %v3563 = vunpack.c.l.s4 1934713408
        %v3564 = vunpack.c.0.s8 %v3563
        %v3565 = vlaneseq
        %v3566 = vshrl.u32 %v3565, 7
        %v3567 = vsub.s32 %v3564, %v3566
        %v3568 = vrot.slane %v3554, %v3567
        %v3569 = vcombine.low %v3545, %v3561
        %v3570 = vcombine.high %v3545, %v3561
        %v3571 = vcombine.low %v3552, %v3568
        %v3572 = vcombine.high %v3552, %v3568
        %3575 = vrot.lane.b32.xlu0 %v3502, 16
        %v3576 = vpop.permute.xlu0 %3575
        %3577 = vrot.lane.b32.xlu0 %v3570, 16
        %v3578 = vpop.permute.xlu0 %3577
        %3583 = vrot.lane.b32.xlu0 %v3503, 32
        %v3584 = vpop.permute.xlu0 %3583
        %3585 = vrot.lane.b32.xlu0 %v3571, 32
        %v3586 = vpop.permute.xlu0 %3585
        %3591 = vrot.lane.b32.xlu0 %v3504, 48
        %v3592 = vpop.permute.xlu0 %3591
        %3593 = vrot.lane.b32.xlu0 %v3572, 48
        %v3594 = vpop.permute.xlu0 %3593
        %v3597 = vsel %vm2019, %v3501, %v3576
        %v3598 = vsel %vm2019, %v3569, %v3578
        %vm3599 = vcmask 261120
        %v3600 = vsel %vm3599, %v3597, %v3584
        %v3601 = vsel %vm3599, %v3598, %v3586
        %vm3602 = vcmask 392192
        %v3603 = vsel %vm3602, %v3600, %v3592
        %v3604 = vsel %vm3602, %v3601, %v3594
        %v3605 = vld [vmem:[%s810] sm:$0xff]
        %v3606 = vld [vmem:[%s810 + $0x8] sm:$0xff]
        %v3607 = vld [vmem:[%s810 + $0x10] sm:$0xff]
        %v3608 = vld [vmem:[%s810 + $0x18] sm:$0xff]
        %v3609 = vld [vmem:[%s810 + $0x20] sm:$0xff]
        %v3610 = vld [vmem:[%s810 + $0x28] sm:$0xff]
        %v3611 = vld [vmem:[%s810 + $0x30] sm:$0xff]
        %v3612 = vld [vmem:[%s810 + $0x38] sm:$0xff]
        %v3614 = vsel %vm983, %v3603, 0
        %v3617 = vsel %vm983, %v3604, 0
        %3619 = vmatprep.subr.mxu0 0.0
        %3620 = vmatpush1.msra.mxu0 %v3605
        %3621 = vmatprep.subr.mxu0 0.0
        %3622 = vmatpush1.msra.mxu0 %v3606
        %3623 = vmatprep.subr.mxu0 0.0
        %3624 = vmatpush1.msra.mxu0 %v3607
        %3625 = vmatprep.subr.mxu0 0.0
        %3626 = vmatpush1.msra.mxu0 %v3608
        %3627 = vmatprep.subr.mxu0 0.0
        %3628 = vmatpush1.msra.mxu0 %v3609
        %3629 = vmatprep.subr.mxu0 0.0
        %3630 = vmatpush1.msra.mxu0 %v3610
        %3631 = vmatprep.subr.mxu0 0.0
        %3632 = vmatpush1.msra.mxu0 %v3611
        %3633 = vmatprep.subr.mxu0 0.0
        %3634 = vmatpush1.msra.mxu0 %v3612
        %3635 = vmatprep.subr.mxu0 0.0
        %3636 = vmatpush1.msra.mxu0 0.0
        %3637 = vmatprep.subr.mxu0 0.0
        %3638 = vmatpush1.msra.mxu0 0.0
        %3639 = vmatprep.subr.mxu0 0.0
        %3640 = vmatpush1.msra.mxu0 0.0
        %3641 = vmatprep.subr.mxu0 0.0
        %3642 = vmatpush1.msra.mxu0 0.0
        %3643 = vmatprep.subr.mxu0 0.0
        %3644 = vmatpush1.msra.mxu0 0.0
        %3645 = vmatprep.subr.mxu0 0.0
        %3646 = vmatpush1.msra.mxu0 0.0
        %3647 = vmatprep.subr.mxu0 0.0
        %3648 = vmatpush1.msra.mxu0 0.0
        %3649 = vmatprep.subr.mxu0 0.0
        %3650 = vmatpush1.msra.mxu0 0.0
        %3651 = vmatprep.subr.mxu0 0.0
        %3652 = vmatpush1.msra.mxu0 0.0
        %3653 = vmatprep.subr.mxu0 0.0
        %3654 = vmatpush1.msra.mxu0 0.0
        %3655 = vmatprep.subr.mxu0 0.0
        %3656 = vmatpush1.msra.mxu0 0.0
        %3657 = vmatprep.subr.mxu0 0.0
        %3658 = vmatpush1.msra.mxu0 0.0
        %3659 = vmatprep.subr.mxu0 0.0
        %3660 = vmatpush1.msra.mxu0 0.0
        %3661 = vmatprep.subr.mxu0 0.0
        %3662 = vmatpush1.msra.mxu0 0.0
        %3663 = vmatprep.subr.mxu0 0.0
        %3664 = vmatpush1.msra.mxu0 0.0
        %3665 = vmatprep.subr.mxu0 0.0
        %3666 = vmatpush1.msra.mxu0 0.0
        %3667 = vmatprep.subr.mxu0 0.0
        %3668 = vmatpush1.msra.mxu0 0.0
        %3669 = vmatprep.subr.mxu0 0.0
        %3670 = vmatpush1.msra.mxu0 0.0
        %3671 = vmatprep.subr.mxu0 0.0
        %3672 = vmatpush1.msra.mxu0 0.0
        %3673 = vmatprep.subr.mxu0 0.0
        %3674 = vmatpush1.msra.mxu0 0.0
        %3675 = vmatprep.subr.mxu0 0.0
        %3676 = vmatpush1.msra.mxu0 0.0
        %3677 = vmatprep.subr.mxu0 0.0
        %3678 = vmatpush1.msra.mxu0 0.0
        %3679 = vmatprep.subr.mxu0 0.0
        %3680 = vmatpush1.msra.mxu0 0.0
        %3681 = vmatprep.subr.mxu0 0.0
        %3682 = vmatpush1.msra.mxu0 0.0
        %3683 = vmatprep.mubr.f32.mxu0 0.0
        %3684 = vmatmul.mubr.f32.gmra.mrb[0].mxu0 %v3614
        %v3685 = vpop.f32.mrb[0].mxu0
        %v3686 = vadd.f32 0.0, %v3685
        %v3687 = vpop.f32.mrb[0].mxu0
        %3688 = vmatprep.mubr.f32.mxu0 0.0
        %3689 = vmatmul.mubr.f32.gmra.mrb[0].mxu0 %v3617
        %v3690 = vpop.f32.mrb[0].mxu0
        %v3691 = vadd.f32 0.0, %v3690
        %v3692 = vpop.f32.mrb[0].mxu0
        %3693 = vdwg.mxu0
        %v3694 = vadd.f32 %v979, %v3686
        %v3695 = vadd.f32 %v980, %v3691
        %v3696 = vld [vmem:[%s818] sm:$0x1]
        %v3698 = vlaneseq
        %v3699 = vshrl.u32 %v3698, 7
        %v3700 = vsub.s32 0, %v3699
        %v3701 = vrot.slane %v3696, %v3700
        %v3703 = vadd.f32 %v3694, %v3701
        %v3704 = vadd.f32 %v3695, %v3701
        %v3705 = vld [vmem:[%s826] sm:$0x1]
        %v3706 = vld [vmem:[%s834] sm:$0x1]
        %v3707 = vsel %vm983, %v3703, 0.0
        %3708 = vadd.xlane.f32.xlu0 %v3707
        %v3709 = vpop.xlane.xlu0 %3708
        %v3710 = vsel %vm983, %v3704, 0.0
        %3711 = vadd.xlane.f32.xlu0 %v3710
        %v3712 = vpop.xlane.xlu0 %3711
        %v3713 = vmul.f32 %v3709, %v990
        %v3714 = vmul.f32 %v3712, %v990
        %v3715 = vsub.f32 %v3703, %v3713
        %v3716 = vsub.f32 %v3704, %v3714
        %v3717 = vmul.f32 %v3715, %v3715
        %v3718 = vmul.f32 %v3716, %v3716
        %v3719 = vsel %vm983, %v3717, 0.0
        %3720 = vadd.xlane.f32.xlu0 %v3719
        %v3721 = vpop.xlane.xlu0 %3720
        %v3722 = vsel %vm983, %v3718, 0.0
        %3723 = vadd.xlane.f32.xlu0 %v3722
        %v3724 = vpop.xlane.xlu0 %3723
        %v3725 = vmul.f32 %v3721, %v990
        %v3726 = vmul.f32 %v3724, %v990
        %v3727 = vadd.f32 %v3725, 1e-05
        %v3728 = vadd.f32 %v3726, 1e-05
        %v3729 = vrsqrt.pop %v3727
        %v3730 = vrsqrt.pop %v3728
        %v3731 = vmul.f32 %v3715, %v3729
        %v3732 = vmul.f32 %v3716, %v3730
        %v3734 = vlaneseq
        %v3735 = vshrl.u32 %v3734, 7
        %v3736 = vsub.s32 0, %v3735
        %v3737 = vrot.slane %v3705, %v3736
        %v3739 = vmul.f32 %v3731, %v3737
        %v3740 = vmul.f32 %v3732, %v3737
        %v3742 = vlaneseq
        %v3743 = vshrl.u32 %v3742, 7
        %v3744 = vsub.s32 0, %v3743
        %v3745 = vrot.slane %v3706, %v3744
        %v3747 = vadd.f32 %v3739, %v3745
        %v3748 = vadd.f32 %v3740, %v3745
        %v3749 = vld [vmem:[%s843] sm:$0xff]
        %v3750 = vld [vmem:[%s843 + $0x8] sm:$0xff]
        %v3751 = vld [vmem:[%s843 + $0x10] sm:$0xff]
        %v3752 = vld [vmem:[%s843 + $0x18] sm:$0xff]
        %v3753 = vld [vmem:[%s843 + $0x20] sm:$0xff]
        %v3754 = vld [vmem:[%s843 + $0x28] sm:$0xff]
        %v3755 = vld [vmem:[%s843 + $0x30] sm:$0xff]
        %v3756 = vld [vmem:[%s843 + $0x38] sm:$0xff]
        %v3757 = vld [vmem:[%s843 + $0x40] sm:$0xff]
        %v3758 = vld [vmem:[%s843 + $0x48] sm:$0xff]
        %v3759 = vld [vmem:[%s843 + $0x50] sm:$0xff]
        %v3760 = vld [vmem:[%s843 + $0x58] sm:$0xff]
        %v3761 = vld [vmem:[%s843 + $0x60] sm:$0xff]
        %v3762 = vld [vmem:[%s843 + $0x68] sm:$0xff]
        %v3763 = vld [vmem:[%s843 + $0x70] sm:$0xff]
        %v3764 = vld [vmem:[%s843 + $0x78] sm:$0xff]
        %v3765 = vld [vmem:[%s852] sm:$0x3]
        %v3767 = vlaneseq
        %v3768 = vshrl.u32 %v3767, 7
        %v3769 = vsub.s32 0, %v3768
        %v3770 = vrot.slane %v3765, %v3769
        %v3771 = vlaneseq
        %v3772 = vshrl.u32 %v3771, 7
        %v3773 = vsub.s32 1, %v3772
        %v3774 = vrot.slane %v3765, %v3773
        %v3778 = vsel %vm983, %v3747, 0
        %v3781 = vsel %vm983, %v3748, 0
        %3783 = vmatprep.subr.mxu0 %v3750
        %3784 = vmatpush1.msra.mxu0 %v3749
        %3785 = vmatprep.subr.mxu0 %v3752
        %3786 = vmatpush1.msra.mxu0 %v3751
        %3787 = vmatprep.subr.mxu0 %v3754
        %3788 = vmatpush1.msra.mxu0 %v3753
        %3789 = vmatprep.subr.mxu0 %v3756
        %3790 = vmatpush1.msra.mxu0 %v3755
        %3791 = vmatprep.subr.mxu0 %v3758
        %3792 = vmatpush1.msra.mxu0 %v3757
        %3793 = vmatprep.subr.mxu0 %v3760
        %3794 = vmatpush1.msra.mxu0 %v3759
        %3795 = vmatprep.subr.mxu0 %v3762
        %3796 = vmatpush1.msra.mxu0 %v3761
        %3797 = vmatprep.subr.mxu0 %v3764
        %3798 = vmatpush1.msra.mxu0 %v3763
        %3799 = vmatprep.subr.mxu0 0.0
        %3800 = vmatpush1.msra.mxu0 0.0
        %3801 = vmatprep.subr.mxu0 0.0
        %3802 = vmatpush1.msra.mxu0 0.0
        %3803 = vmatprep.subr.mxu0 0.0
        %3804 = vmatpush1.msra.mxu0 0.0
        %3805 = vmatprep.subr.mxu0 0.0
        %3806 = vmatpush1.msra.mxu0 0.0
        %3807 = vmatprep.subr.mxu0 0.0
        %3808 = vmatpush1.msra.mxu0 0.0
        %3809 = vmatprep.subr.mxu0 0.0
        %3810 = vmatpush1.msra.mxu0 0.0
        %3811 = vmatprep.subr.mxu0 0.0
        %3812 = vmatpush1.msra.mxu0 0.0
        %3813 = vmatprep.subr.mxu0 0.0
        %3814 = vmatpush1.msra.mxu0 0.0
        %3815 = vmatprep.subr.mxu0 0.0
        %3816 = vmatpush1.msra.mxu0 0.0
        %3817 = vmatprep.subr.mxu0 0.0
        %3818 = vmatpush1.msra.mxu0 0.0
        %3819 = vmatprep.subr.mxu0 0.0
        %3820 = vmatpush1.msra.mxu0 0.0
        %3821 = vmatprep.subr.mxu0 0.0
        %3822 = vmatpush1.msra.mxu0 0.0
        %3823 = vmatprep.subr.mxu0 0.0
        %3824 = vmatpush1.msra.mxu0 0.0
        %3825 = vmatprep.subr.mxu0 0.0
        %3826 = vmatpush1.msra.mxu0 0.0
        %3827 = vmatprep.subr.mxu0 0.0
        %3828 = vmatpush1.msra.mxu0 0.0
        %3829 = vmatprep.subr.mxu0 0.0
        %3830 = vmatpush1.msra.mxu0 0.0
        %3831 = vmatprep.subr.mxu0 0.0
        %3832 = vmatpush1.msra.mxu0 0.0
        %3833 = vmatprep.subr.mxu0 0.0
        %3834 = vmatpush1.msra.mxu0 0.0
        %3835 = vmatprep.subr.mxu0 0.0
        %3836 = vmatpush1.msra.mxu0 0.0
        %3837 = vmatprep.subr.mxu0 0.0
        %3838 = vmatpush1.msra.mxu0 0.0
        %3839 = vmatprep.subr.mxu0 0.0
        %3840 = vmatpush1.msra.mxu0 0.0
        %3841 = vmatprep.subr.mxu0 0.0
        %3842 = vmatpush1.msra.mxu0 0.0
        %3843 = vmatprep.subr.mxu0 0.0
        %3844 = vmatpush1.msra.mxu0 0.0
        %3845 = vmatprep.subr.mxu0 0.0
        %3846 = vmatpush1.msra.mxu0 0.0
        %3847 = vmatprep.mubr.f32.mxu0 0.0
        %3848 = vmatmul.mubr.f32.gmra.mrb[0].mxu0 %v3778
        %v3849 = vpop.f32.mrb[0].mxu0
        %v3850 = vadd.f32 %v3770, %v3849
        %v3851 = vpop.f32.mrb[0].mxu0
        %v3852 = vadd.f32 %v3774, %v3851
        %3853 = vmatprep.mubr.f32.mxu0 0.0
        %3854 = vmatmul.mubr.f32.gmra.mrb[0].mxu0 %v3781
        %v3855 = vpop.f32.mrb[0].mxu0
        %v3856 = vadd.f32 %v3770, %v3855
        %v3857 = vpop.f32.mrb[0].mxu0
        %v3858 = vadd.f32 %v3774, %v3857
        %3859 = vdwg.mxu0
        %v3860 = vmul.f32 %v3850, 1.702
        %v3861 = vmul.f32 %v3852, 1.702
        %v3862 = vmul.f32 %v3856, 1.702
        %v3863 = vmul.f32 %v3858, 1.702
        %v3864 = vxor.u32 %v3860, 2147483648
        %v3865 = vxor.u32 %v3861, 2147483648
        %v3866 = vxor.u32 %v3862, 2147483648
        %v3867 = vxor.u32 %v3863, 2147483648
        %v3868 = vmul.f32 %v3864, 1.442695
        %v3869 = vpow.pop %v3868
        %v3870 = vmul.f32 %v3865, 1.442695
        %v3871 = vpow.pop %v3870
        %v3872 = vmul.f32 %v3866, 1.442695
        %v3873 = vpow.pop %v3872
        %v3874 = vmul.f32 %v3867, 1.442695
        %v3875 = vpow.pop %v3874
        %v3876 = vadd.f32 %v3869, 1.0
        %v3877 = vadd.f32 %v3871, 1.0
        %v3878 = vadd.f32 %v3873, 1.0
        %v3879 = vadd.f32 %v3875, 1.0
        %v3880 = vrcp.pop %v3876
        %v3881 = vmul.f32 1.0, %v3880
        %v3882 = vrcp.pop %v3877
        %v3883 = vmul.f32 1.0, %v3882
        %v3884 = vrcp.pop %v3878
        %v3885 = vmul.f32 1.0, %v3884
        %v3886 = vrcp.pop %v3879
        %v3887 = vmul.f32 1.0, %v3886
        %v3888 = vmul.f32 %v3850, %v3881
        %v3889 = vmul.f32 %v3852, %v3883
        %v3890 = vmul.f32 %v3856, %v3885
        %v3891 = vmul.f32 %v3858, %v3887
        %v3892 = vld [vmem:[%s861] sm:$0xff]
        %v3893 = vld [vmem:[%s861 + $0x8] sm:$0xff]
        %v3894 = vld [vmem:[%s861 + $0x10] sm:$0xff]
        %v3895 = vld [vmem:[%s861 + $0x18] sm:$0xff]
        %v3896 = vld [vmem:[%s861 + $0x20] sm:$0xff]
        %v3897 = vld [vmem:[%s861 + $0x28] sm:$0xff]
        %v3898 = vld [vmem:[%s861 + $0x30] sm:$0xff]
        %v3899 = vld [vmem:[%s861 + $0x38] sm:$0xff]
        %v3900 = vld [vmem:[%s861 + $0x40] sm:$0xff]
        %v3901 = vld [vmem:[%s861 + $0x48] sm:$0xff]
        %v3902 = vld [vmem:[%s861 + $0x50] sm:$0xff]
        %v3903 = vld [vmem:[%s861 + $0x58] sm:$0xff]
        %v3904 = vld [vmem:[%s861 + $0x60] sm:$0xff]
        %v3905 = vld [vmem:[%s861 + $0x68] sm:$0xff]
        %v3906 = vld [vmem:[%s861 + $0x70] sm:$0xff]
        %v3907 = vld [vmem:[%s861 + $0x78] sm:$0xff]
        %v3908 = vld [vmem:[%s861 + $0x80] sm:$0xff]
        %v3909 = vld [vmem:[%s861 + $0x88] sm:$0xff]
        %v3910 = vld [vmem:[%s861 + $0x90] sm:$0xff]
        %v3911 = vld [vmem:[%s861 + $0x98] sm:$0xff]
        %v3912 = vld [vmem:[%s861 + $0xa0] sm:$0xff]
        %v3913 = vld [vmem:[%s861 + $0xa8] sm:$0xff]
        %v3914 = vld [vmem:[%s861 + $0xb0] sm:$0xff]
        %v3915 = vld [vmem:[%s861 + $0xb8] sm:$0xff]
        %v3916 = vld [vmem:[%s861 + $0xc0] sm:$0xff]
        %v3917 = vld [vmem:[%s861 + $0xc8] sm:$0xff]
        %v3918 = vld [vmem:[%s861 + $0xd0] sm:$0xff]
        %v3919 = vld [vmem:[%s861 + $0xd8] sm:$0xff]
        %v3920 = vld [vmem:[%s861 + $0xe0] sm:$0xff]
        %v3921 = vld [vmem:[%s861 + $0xe8] sm:$0xff]
        %v3922 = vld [vmem:[%s861 + $0xf0] sm:$0xff]
        %v3923 = vld [vmem:[%s861 + $0xf8] sm:$0xff]
        %v3924 = vld [vmem:[%s869] sm:$0x1]
        %v3926 = vlaneseq
        %v3927 = vshrl.u32 %v3926, 7
        %v3928 = vsub.s32 0, %v3927
        %v3929 = vrot.slane %v3924, %v3928
        %3931 = vmatprep.subr.mxu0 0.0
        %3932 = vmatpush1.msra.mxu0 %v3892
        %3933 = vmatprep.subr.mxu0 0.0
        %3934 = vmatpush1.msra.mxu0 %v3893
        %3935 = vmatprep.subr.mxu0 0.0
        %3936 = vmatpush1.msra.mxu0 %v3894
        %3937 = vmatprep.subr.mxu0 0.0
        %3938 = vmatpush1.msra.mxu0 %v3895
        %3939 = vmatprep.subr.mxu0 0.0
        %3940 = vmatpush1.msra.mxu0 %v3896
        %3941 = vmatprep.subr.mxu0 0.0
        %3942 = vmatpush1.msra.mxu0 %v3897
        %3943 = vmatprep.subr.mxu0 0.0
        %3944 = vmatpush1.msra.mxu0 %v3898
        %3945 = vmatprep.subr.mxu0 0.0
        %3946 = vmatpush1.msra.mxu0 %v3899
        %3947 = vmatprep.subr.mxu0 0.0
        %3948 = vmatpush1.msra.mxu0 %v3900
        %3949 = vmatprep.subr.mxu0 0.0
        %3950 = vmatpush1.msra.mxu0 %v3901
        %3951 = vmatprep.subr.mxu0 0.0
        %3952 = vmatpush1.msra.mxu0 %v3902
        %3953 = vmatprep.subr.mxu0 0.0
        %3954 = vmatpush1.msra.mxu0 %v3903
        %3955 = vmatprep.subr.mxu0 0.0
        %3956 = vmatpush1.msra.mxu0 %v3904
        %3957 = vmatprep.subr.mxu0 0.0
        %3958 = vmatpush1.msra.mxu0 %v3905
        %3959 = vmatprep.subr.mxu0 0.0
        %3960 = vmatpush1.msra.mxu0 %v3906
        %3961 = vmatprep.subr.mxu0 0.0
        %3962 = vmatpush1.msra.mxu0 %v3907
        %3963 = vmatprep.subr.mxu0 0.0
        %3964 = vmatpush1.msra.mxu0 %v3908
        %3965 = vmatprep.subr.mxu0 0.0
        %3966 = vmatpush1.msra.mxu0 %v3909
        %3967 = vmatprep.subr.mxu0 0.0
        %3968 = vmatpush1.msra.mxu0 %v3910
        %3969 = vmatprep.subr.mxu0 0.0
        %3970 = vmatpush1.msra.mxu0 %v3911
        %3971 = vmatprep.subr.mxu0 0.0
        %3972 = vmatpush1.msra.mxu0 %v3912
        %3973 = vmatprep.subr.mxu0 0.0
        %3974 = vmatpush1.msra.mxu0 %v3913
        %3975 = vmatprep.subr.mxu0 0.0
        %3976 = vmatpush1.msra.mxu0 %v3914
        %3977 = vmatprep.subr.mxu0 0.0
        %3978 = vmatpush1.msra.mxu0 %v3915
        %3979 = vmatprep.subr.mxu0 0.0
        %3980 = vmatpush1.msra.mxu0 %v3916
        %3981 = vmatprep.subr.mxu0 0.0
        %3982 = vmatpush1.msra.mxu0 %v3917
        %3983 = vmatprep.subr.mxu0 0.0
        %3984 = vmatpush1.msra.mxu0 %v3918
        %3985 = vmatprep.subr.mxu0 0.0
        %3986 = vmatpush1.msra.mxu0 %v3919
        %3987 = vmatprep.subr.mxu0 0.0
        %3988 = vmatpush1.msra.mxu0 %v3920
        %3989 = vmatprep.subr.mxu0 0.0
        %3990 = vmatpush1.msra.mxu0 %v3921
        %3991 = vmatprep.subr.mxu0 0.0
        %3992 = vmatpush1.msra.mxu0 %v3922
        %3993 = vmatprep.subr.mxu0 0.0
        %3994 = vmatpush1.msra.mxu0 %v3923
        %3995 = vmatprep.mubr.f32.mxu0 %v3889
        %3996 = vmatmul.mubr.f32.gmra.mrb[0].mxu0 %v3888
        %v3997 = vpop.f32.mrb[0].mxu0
        %v3998 = vadd.f32 %v3929, %v3997
        %v3999 = vpop.f32.mrb[0].mxu0
        %4000 = vmatprep.mubr.f32.mxu0 %v3891
        %4001 = vmatmul.mubr.f32.gmra.mrb[0].mxu0 %v3890
        %v4002 = vpop.f32.mrb[0].mxu0
        %v4003 = vadd.f32 %v3929, %v4002
        %v4004 = vpop.f32.mrb[0].mxu0
        %4005 = vdwg.mxu0
        %v4006 = vadd.f32 %v3703, %v3998
        %v4007 = vadd.f32 %v3704, %v4003
        %4008 = vst.msk [vmem:[#allocation2] sm:$0xff] %vm983, %v4006
        %4009 = vst.msk [vmem:[#allocation2 + $0x8] sm:$0xff] %vm983, %v4007
        %p4010 = scmp.eq.s32.totalorder %s36, 1
        // Predicated region
        $region153: #{clip_forward.1} parent=83 // pred_check
          %p4011 = pneg %p4010
        $region154: #{clip_forward.1} parent=83 // pred_check_branch
          %4013 = sbr.rel (%p4011) target = $region156
        $region155: #{clip_forward.1} parent=83 // pred_region
          %v4014 = vld [vmem:[#allocation20] sm:$0x1]
          %v4015 = vld [vmem:[#allocation21] sm:$0x1]
          %v4016 = vsel %vm983, %v4006, 0.0
          %4017 = vadd.xlane.f32.xlu0 %v4016
          %v4018 = vpop.xlane.xlu0 %4017
          %v4019 = vsel %vm983, %v4007, 0.0
          %4020 = vadd.xlane.f32.xlu0 %v4019
          %v4021 = vpop.xlane.xlu0 %4020
          %v4022 = vmul.f32 %v4018, %v990
          %v4023 = vmul.f32 %v4021, %v990
          %v4024 = vsub.f32 %v4006, %v4022
          %v4025 = vsub.f32 %v4007, %v4023
          %v4026 = vmul.f32 %v4024, %v4024
          %v4027 = vmul.f32 %v4025, %v4025
          %v4028 = vsel %vm983, %v4026, 0.0
          %4029 = vadd.xlane.f32.xlu0 %v4028
          %v4030 = vpop.xlane.xlu0 %4029
          %v4031 = vsel %vm983, %v4027, 0.0
          %4032 = vadd.xlane.f32.xlu0 %v4031
          %v4033 = vpop.xlane.xlu0 %4032
          %v4034 = vmul.f32 %v4030, %v990
          %v4035 = vmul.f32 %v4033, %v990
          %v4036 = vadd.f32 %v4034, 1e-05
          %v4037 = vadd.f32 %v4035, 1e-05
          %v4038 = vrsqrt.pop %v4036
          %v4039 = vrsqrt.pop %v4037
          %v4040 = vmul.f32 %v4024, %v4038
          %v4041 = vmul.f32 %v4025, %v4039
          %v4043 = vlaneseq
          %v4044 = vshrl.u32 %v4043, 7
          %v4045 = vsub.s32 0, %v4044
          %v4046 = vrot.slane %v4014, %v4045
          %v4048 = vmul.f32 %v4040, %v4046
          %v4049 = vmul.f32 %v4041, %v4046
          %v4051 = vlaneseq
          %v4052 = vshrl.u32 %v4051, 7
          %v4053 = vsub.s32 0, %v4052
          %v4054 = vrot.slane %v4015, %v4053
          %v4056 = vadd.f32 %v4048, %v4054
          %v4057 = vadd.f32 %v4049, %v4054
          %4058 = vst.msk [vmem:[#allocation23] sm:$0xff] %vm983, %v4056
          %4059 = vst.msk [vmem:[#allocation23 + $0x8] sm:$0xff] %vm983, %v4057
        $region156: #{clip_forward.1} parent=83 // pred_fallthru
          _
        // Predicated region
        $region157: #{clip_forward.1} parent=83 // pred_check
          %p4060 = pneg %p462
        $region158: #{clip_forward.1} parent=83 // pred_check_branch
          %4062 = sbr.rel (%p4060) target = $region160
        $region159: #{clip_forward.1} parent=83 // pred_region
          %s4064 = ssub.s32 256, 256
          %4065 = vsyncadd [#allocation5], %s4064
          %s4066 = smul.addr %s35, 2
          %s4067 = smul.addr %s4066, 128
          %s4068 = scalar_lea.hbm %s16, %s4067
          %s4069 = sshll.u32 [#allocation23], 4
          %s4070 = int_to_ptr.vmem [resolvable:$true] %s4069
          %4075 = dma.vmem_to_hbm [thread:$0]  %s4070, 256, %s4068, [#allocation5], 128, 128, 8
        $region160: #{clip_forward.1} parent=83 // pred_fallthru
          _
        // Predicated region
        $region161: #{clip_forward.1} parent=83 // pred_check
          %p4076 = pneg %p462
        $region162: #{clip_forward.1} parent=83 // pred_check_branch
          %4078 = sbr.rel (%p4076) target = $region164
        $region163: #{clip_forward.1} parent=83 // pred_region
          %4079 = dma.done [#allocation5], 256
        $region164: #{clip_forward.1} parent=83 // pred_fallthru
          _
      $region84: #{clip_forward.1} parent=5 // pred_fallthru
        _
      %p4080 = scmp.le.s32.totalorder 2, %s26
      // Predicated region
      $region165: #{clip_forward.1} parent=5 // pred_check
        %p4081 = pneg %p4080
      $region166: #{clip_forward.1} parent=5 // pred_check_branch
        %4083 = sbr.rel (%p4081) target = $region168
      $region167: #{clip_forward.1} parent=5 // pred_region
        %s4084 = ssub.s32 %s26, 2
      $region168: #{clip_forward.1} parent=5 // pred_fallthru
        _
    $region6: #{clip_forward.1} parent=1 // loop_footer
      %s30 = sadd.s32 1, %s26
    $region7: #{clip_forward.1} parent=1 // loop_footer_branch
      %25 = sbr.rel target = $region3
    $region8: #{clip_forward.1} parent=1 // loop_exit
      _
    %4085 = vsyncpa [#allocation4], 1
    %s4086 = scalar_lea.sflag [#allocation4], 1
    %4087 = vsyncpa %s4086, 1
    %4088 = vsyncpa [#allocation7], 1
    %4089 = vsyncpa [#allocation22], 1
    %4090 = vsyncpa [#allocation5], 1
    %s4091 = scalar_lea.sflag [#allocation5], 1
    %4092 = vsyncpa %s4091, 1

</llo_original>
